<compile_context>
chip_gen: v5e
topology: v5e:2x2
jax: 0.10.0
libtpu: 0.0.40
codegen_flags: <defaults>
</compile_context>

<pallas_src>
import functools
from functools import partial

import jax
import jax.numpy as jnp
from jax import lax
from jax.experimental import pallas as pl
from jax.experimental.pallas import tpu as pltpu


def _attention_kernel(heads, dim_head, x_ref, wqkv_ref, wo_ref, bo_ref,
                      out_ref):
    """Grid = (B,).  One batch per step, all heads unrolled in-kernel.

    x_ref   : (1, C, N)            this batch, NCHW-native (channels on sublanes)
    wqkv_ref: (3*hidden, C)        fused qkv weight (q-scale folded in)
    wo_ref  : (heads, C, Dh)       output projection weight, pre-split per head
    bo_ref  : (C, 1)               output projection bias
    out_ref : (1, C, N)
    """
    hidden = heads * dim_head
    x = x_ref[0]                                                    # (C, N)

    # Single fused projection: (3*hidden, C) @ (C, N) -> (3*hidden, N).
    qkv = jnp.dot(wqkv_ref[...], x, preferred_element_type=jnp.float32)

    out_acc = None
    for h in range(heads):                       # heads is small & static
        r = h * dim_head                         # sublane-aligned offsets (x8)
        q = qkv[r:r + dim_head, :]                                  # (Dh, N)
        k = qkv[hidden + r:hidden + r + dim_head, :]                # (Dh, N)
        v = qkv[2 * hidden + r:2 * hidden + r + dim_head, :]        # (Dh, N)

        # sim^T[j, i] = sum_d k[d,j] q[d,i]   (lhs-transposed MXU matmul)
        sim_t = lax.dot_general(
            k, q, dimension_numbers=(((0,), (0,)), ((), ())),
            preferred_element_type=jnp.float32)                     # (N, N)
        # softmax over j (= axis 0 in the transposed layout)
        sim_t = sim_t - jnp.max(sim_t, axis=0, keepdims=True)
        e = jnp.exp(sim_t)
        l = jnp.sum(e, axis=0, keepdims=True)                       # (1, N)

        # o^T[d, i] = sum_j v[d,j] attn[i,j]  -> (Dh, N), then normalize the
        # small o (not the (N,N) matrix); approx recip rides the EUP slot.
        o_t = jnp.dot(v, e, preferred_element_type=jnp.float32)     # (Dh, N)
        o_t = o_t * pl.reciprocal(l, approx=True)

        # Per-head accumulation into the output projection (no concat).
        contrib = jnp.dot(wo_ref[h], o_t,
                          preferred_element_type=jnp.float32)       # (C, N)
        out_acc = contrib if out_acc is None else out_acc + contrib

    out_ref[0] = out_acc + bo_ref[...]           # bias broadcast over lanes


@partial(jax.jit, static_argnames=("heads", "dim_head"))
def attention_pallas(x, w_qkv, w_out, b_out, *, heads, dim_head):
    """x: (B, C, H, W) float32 (NCHW, like the PyTorch module)."""
    B, C, H, W = x.shape
    N = H * W
    hidden = heads * dim_head
    scale = dim_head ** -0.5

    # ---- glue (all inside jit: fused/cached, no standalone launches) ----
    # NCHW-native: flattening spatial dims is a free reshape (no transpose).
    x3 = x.reshape(B, C, N)

    # to_qkv 1x1-conv weight (3*hidden, C); fold the q scale into the q rows.
    wqkv = jnp.concatenate([w_qkv[:hidden] * scale, w_qkv[hidden:]], axis=0)

    # to_out 1x1-conv weight (C, hidden) -> per-head (heads, C, Dh) so the
    # kernel never does lane-unaligned column slices.
    wo_split = w_out.reshape(C, heads, dim_head).transpose(1, 0, 2)

    bo = b_out.reshape(C, 1)

    out3 = pl.pallas_call(
        functools.partial(_attention_kernel, heads, dim_head),
        out_shape=jax.ShapeDtypeStruct((B, C, N), jnp.float32),
        grid_spec=pltpu.PrefetchScalarGridSpec(
            num_scalar_prefetch=0,
            grid=(B,),
            in_specs=[
                pl.BlockSpec((1, C, N), lambda b: (b, 0, 0)),           # x
                pl.BlockSpec((3 * hidden, C), lambda b: (0, 0)),        # wqkv
                pl.BlockSpec((heads, C, dim_head), lambda b: (0, 0, 0)),# wo
                pl.BlockSpec((C, 1), lambda b: (0, 0)),                 # bias
            ],
            out_specs=pl.BlockSpec((1, C, N), lambda b: (b, 0, 0)),
        ),
        compiler_params=pltpu.CompilerParams(
            dimension_semantics=("parallel",)),   # batch across v7x TCs
    )(x3, wqkv, wo_split, bo)

    # Undo the free flatten -> NCHW output (no transpose needed).
    return out3.reshape(B, C, H, W)


def attention_reference(x, w_qkv, w_out, b_out, *, heads, dim_head):
    """Pure-JAX mirror of the PyTorch forward (NCHW)."""
    b, c, h, w = x.shape
    scale = dim_head ** -0.5
    qkv = jnp.einsum('oc,bchw->bohw', w_qkv, x)
    q, k, v = jnp.split(qkv, 3, axis=1)

    def rearr(t):
        return t.reshape(b, heads, dim_head, h * w)

    q, k, v = map(rearr, (q, k, v))
    q = q * scale
    sim = jnp.einsum('bhdi,bhdj->bhij', q, k)
    sim = sim - jnp.max(sim, axis=-1, keepdims=True)
    attn = jax.nn.softmax(sim, axis=-1)
    out = jnp.einsum('bhij,bhdj->bhid', attn, v)                  # (b, hh, n, d)
    out = jnp.transpose(out, (0, 1, 3, 2)).reshape(b, heads * dim_head, h, w)
    return jnp.einsum('oc,bchw->bohw', w_out, out) + b_out[None, :, None, None]


if __name__ == "__main__":
    # Small shapes consistent with the module: dim=32, heads=4, dim_head=32,
    # 16x16 spatial (N = 256 -> naturally lane-dense NCHW-native stores).
    B, DIM, H, W = 2, 32, 16, 16
    HEADS, DIM_HEAD = 4, 32
    HIDDEN = HEADS * DIM_HEAD

    key = jax.random.PRNGKey(0)
    k_x, k_qkv, k_out, k_b = jax.random.split(key, 4)

    x = jax.random.normal(k_x, (B, DIM, H, W), dtype=jnp.float32)
    # 1x1 conv weights collapsed over spatial dims:
    #   to_qkv: (3*hidden, dim), to_out: (dim, hidden) + bias (dim,)
    w_qkv = jax.random.normal(k_qkv, (3 * HIDDEN, DIM), dtype=jnp.float32) * 0.05
    w_out = jax.random.normal(k_out, (DIM, HIDDEN), dtype=jnp.float32) * 0.05
    b_out = jax.random.normal(k_b, (DIM,), dtype=jnp.float32) * 0.05

    out = attention_pallas(x, w_qkv, w_out, b_out, heads=HEADS,
                           dim_head=DIM_HEAD)
    out = jax.block_until_ready(out)

    ref = attention_reference(x, w_qkv, w_out, b_out, heads=HEADS,
                              dim_head=DIM_HEAD)
    assert out.shape == (B, DIM, H, W)
    # Tolerance slightly relaxed vs. pure-f32 because the softmax denominator
    # uses the EUP approximate reciprocal; everything else is f32.
    max_err = float(jnp.max(jnp.abs(out - ref)))
    assert max_err < 2e-3, max_err

    print("KERNEL_OK")
</pallas_src>

<mosaic_0001>
module attributes {stable_mosaic.version = 11 : i64} {
  func.func @_attention_kernel(%arg0: i32, %arg1: memref<1x32x256xf32, #tpu.memory_space<vmem>>, %arg2: memref<384x32xf32, #tpu.memory_space<vmem>>, %arg3: memref<4x32x32xf32, #tpu.memory_space<vmem>>, %arg4: memref<32x1xf32, #tpu.memory_space<vmem>>, %arg5: memref<1x32x256xf32, #tpu.memory_space<vmem>>) attributes {dimension_semantics = [#tpu.dimension_semantics<parallel>], iteration_bounds = array<i64: 2>, scalar_prefetch = 0 : i64, scratch_operands = 0 : i64, tpu.core_type = #tpu.core_type<tc>, window_params = [{transform_indices = @transform_0, window_bounds = array<i64: 1, 32, 256>}, {pipeline_mode = #tpu.pipeline_mode<synchronous>, transform_indices = @transform_1, window_bounds = array<i64: 384, 32>}, {pipeline_mode = #tpu.pipeline_mode<synchronous>, transform_indices = @transform_2, window_bounds = array<i64: 4, 32, 32>}, {pipeline_mode = #tpu.pipeline_mode<synchronous>, transform_indices = @transform_3, window_bounds = array<i64: 32, 1>}, {transform_indices = @transform_4, window_bounds = array<i64: 1, 32, 256>}]} {
    %c0 = arith.constant 0 : index
    %c0_0 = arith.constant 0 : index
    %c0_1 = arith.constant 0 : index
    %0 = vector.load %arg1[%c0, %c0_0, %c0_1] : memref<1x32x256xf32, #tpu.memory_space<vmem>>, vector<1x32x256xf32>
    %1 = vector.shape_cast %0 : vector<1x32x256xf32> to vector<32x256xf32>
    %c0_2 = arith.constant 0 : index
    %c0_3 = arith.constant 0 : index
    %2 = vector.load %arg2[%c0_2, %c0_3] : memref<384x32xf32, #tpu.memory_space<vmem>>, vector<384x32xf32>
    %cst = arith.constant dense<0.000000e+00> : vector<384x256xf32>
    %3 = tpu.matmul %2, %1, %cst {dimension_numbers = #tpu.dot_dimension_numbers<[1], [0], [0], [1], [0, 0, 1, 1], [], []>} : vector<384x32xf32>, vector<32x256xf32>, vector<384x256xf32> -> vector<384x256xf32>
    %4 = vector.extract_strided_slice %3 {offsets = [0, 0], sizes = [32, 256], strides = [1, 1]} : vector<384x256xf32> to vector<32x256xf32>
    %5 = vector.extract_strided_slice %3 {offsets = [128, 0], sizes = [32, 256], strides = [1, 1]} : vector<384x256xf32> to vector<32x256xf32>
    %6 = vector.extract_strided_slice %3 {offsets = [256, 0], sizes = [32, 256], strides = [1, 1]} : vector<384x256xf32> to vector<32x256xf32>
    %cst_4 = arith.constant dense<0.000000e+00> : vector<256x256xf32>
    %7 = tpu.matmul %5, %4, %cst_4 {dimension_numbers = #tpu.dot_dimension_numbers<[0], [0], [1], [1], [0, 1, 1, 1], [], []>} : vector<32x256xf32>, vector<32x256xf32>, vector<256x256xf32> -> vector<256x256xf32>
    %cst_5 = arith.constant dense<0xFF800000> : vector<256xf32>
    %8 = vector.multi_reduction <maximumf>, %7, %cst_5 [0] : vector<256x256xf32> to vector<256xf32>
    %9 = vector.shape_cast %8 : vector<256xf32> to vector<1x256xf32>
    %10 = vector.broadcast %9 : vector<1x256xf32> to vector<256x256xf32>
    %11 = arith.subf %7, %10 : vector<256x256xf32>
    %12 = math.exp %11 : vector<256x256xf32>
    %cst_6 = arith.constant dense<0.000000e+00> : vector<256xf32>
    %13 = vector.multi_reduction <add>, %12, %cst_6 [0] : vector<256x256xf32> to vector<256xf32>
    %14 = vector.shape_cast %13 : vector<256xf32> to vector<1x256xf32>
    %cst_7 = arith.constant dense<0.000000e+00> : vector<32x256xf32>
    %15 = tpu.matmul %6, %12, %cst_7 {dimension_numbers = #tpu.dot_dimension_numbers<[1], [0], [0], [1], [0, 0, 1, 1], [], []>} : vector<32x256xf32>, vector<256x256xf32>, vector<32x256xf32> -> vector<32x256xf32>
    %16 = tpu.reciprocal %14 {approx = true} : vector<1x256xf32> -> vector<1x256xf32>
    %17 = vector.broadcast %16 : vector<1x256xf32> to vector<32x256xf32>
    %18 = arith.mulf %15, %17 : vector<32x256xf32>
    %c0_8 = arith.constant 0 : index
    %c0_9 = arith.constant 0 : index
    %c0_10 = arith.constant 0 : index
    %19 = vector.load %arg3[%c0_8, %c0_9, %c0_10] : memref<4x32x32xf32, #tpu.memory_space<vmem>>, vector<1x32x32xf32>
    %20 = vector.shape_cast %19 : vector<1x32x32xf32> to vector<32x32xf32>
    %cst_11 = arith.constant dense<0.000000e+00> : vector<32x256xf32>
    %21 = tpu.matmul %20, %18, %cst_11 {dimension_numbers = #tpu.dot_dimension_numbers<[1], [0], [0], [1], [0, 0, 1, 1], [], []>} : vector<32x32xf32>, vector<32x256xf32>, vector<32x256xf32> -> vector<32x256xf32>
    %22 = vector.extract_strided_slice %3 {offsets = [32, 0], sizes = [32, 256], strides = [1, 1]} : vector<384x256xf32> to vector<32x256xf32>
    %23 = vector.extract_strided_slice %3 {offsets = [160, 0], sizes = [32, 256], strides = [1, 1]} : vector<384x256xf32> to vector<32x256xf32>
    %24 = vector.extract_strided_slice %3 {offsets = [288, 0], sizes = [32, 256], strides = [1, 1]} : vector<384x256xf32> to vector<32x256xf32>
    %cst_12 = arith.constant dense<0.000000e+00> : vector<256x256xf32>
    %25 = tpu.matmul %23, %22, %cst_12 {dimension_numbers = #tpu.dot_dimension_numbers<[0], [0], [1], [1], [0, 1, 1, 1], [], []>} : vector<32x256xf32>, vector<32x256xf32>, vector<256x256xf32> -> vector<256x256xf32>
    %cst_13 = arith.constant dense<0xFF800000> : vector<256xf32>
    %26 = vector.multi_reduction <maximumf>, %25, %cst_13 [0] : vector<256x256xf32> to vector<256xf32>
    %27 = vector.shape_cast %26 : vector<256xf32> to vector<1x256xf32>
    %28 = vector.broadcast %27 : vector<1x256xf32> to vector<256x256xf32>
    %29 = arith.subf %25, %28 : vector<256x256xf32>
    %30 = math.exp %29 : vector<256x256xf32>
    %cst_14 = arith.constant dense<0.000000e+00> : vector<256xf32>
    %31 = vector.multi_reduction <add>, %30, %cst_14 [0] : vector<256x256xf32> to vector<256xf32>
    %32 = vector.shape_cast %31 : vector<256xf32> to vector<1x256xf32>
    %cst_15 = arith.constant dense<0.000000e+00> : vector<32x256xf32>
    %33 = tpu.matmul %24, %30, %cst_15 {dimension_numbers = #tpu.dot_dimension_numbers<[1], [0], [0], [1], [0, 0, 1, 1], [], []>} : vector<32x256xf32>, vector<256x256xf32>, vector<32x256xf32> -> vector<32x256xf32>
    %34 = tpu.reciprocal %32 {approx = true} : vector<1x256xf32> -> vector<1x256xf32>
    %35 = vector.broadcast %34 : vector<1x256xf32> to vector<32x256xf32>
    %36 = arith.mulf %33, %35 : vector<32x256xf32>
    %c1 = arith.constant 1 : index
    %c0_16 = arith.constant 0 : index
    %c0_17 = arith.constant 0 : index
    %37 = vector.load %arg3[%c1, %c0_16, %c0_17] : memref<4x32x32xf32, #tpu.memory_space<vmem>>, vector<1x32x32xf32>
    %38 = vector.shape_cast %37 : vector<1x32x32xf32> to vector<32x32xf32>
    %cst_18 = arith.constant dense<0.000000e+00> : vector<32x256xf32>
    %39 = tpu.matmul %38, %36, %cst_18 {dimension_numbers = #tpu.dot_dimension_numbers<[1], [0], [0], [1], [0, 0, 1, 1], [], []>} : vector<32x32xf32>, vector<32x256xf32>, vector<32x256xf32> -> vector<32x256xf32>
    %40 = arith.addf %21, %39 : vector<32x256xf32>
    %41 = vector.extract_strided_slice %3 {offsets = [64, 0], sizes = [32, 256], strides = [1, 1]} : vector<384x256xf32> to vector<32x256xf32>
    %42 = vector.extract_strided_slice %3 {offsets = [192, 0], sizes = [32, 256], strides = [1, 1]} : vector<384x256xf32> to vector<32x256xf32>
    %43 = vector.extract_strided_slice %3 {offsets = [320, 0], sizes = [32, 256], strides = [1, 1]} : vector<384x256xf32> to vector<32x256xf32>
    %cst_19 = arith.constant dense<0.000000e+00> : vector<256x256xf32>
    %44 = tpu.matmul %42, %41, %cst_19 {dimension_numbers = #tpu.dot_dimension_numbers<[0], [0], [1], [1], [0, 1, 1, 1], [], []>} : vector<32x256xf32>, vector<32x256xf32>, vector<256x256xf32> -> vector<256x256xf32>
    %cst_20 = arith.constant dense<0xFF800000> : vector<256xf32>
    %45 = vector.multi_reduction <maximumf>, %44, %cst_20 [0] : vector<256x256xf32> to vector<256xf32>
    %46 = vector.shape_cast %45 : vector<256xf32> to vector<1x256xf32>
    %47 = vector.broadcast %46 : vector<1x256xf32> to vector<256x256xf32>
    %48 = arith.subf %44, %47 : vector<256x256xf32>
    %49 = math.exp %48 : vector<256x256xf32>
    %cst_21 = arith.constant dense<0.000000e+00> : vector<256xf32>
    %50 = vector.multi_reduction <add>, %49, %cst_21 [0] : vector<256x256xf32> to vector<256xf32>
    %51 = vector.shape_cast %50 : vector<256xf32> to vector<1x256xf32>
    %cst_22 = arith.constant dense<0.000000e+00> : vector<32x256xf32>
    %52 = tpu.matmul %43, %49, %cst_22 {dimension_numbers = #tpu.dot_dimension_numbers<[1], [0], [0], [1], [0, 0, 1, 1], [], []>} : vector<32x256xf32>, vector<256x256xf32>, vector<32x256xf32> -> vector<32x256xf32>
    %53 = tpu.reciprocal %51 {approx = true} : vector<1x256xf32> -> vector<1x256xf32>
    %54 = vector.broadcast %53 : vector<1x256xf32> to vector<32x256xf32>
    %55 = arith.mulf %52, %54 : vector<32x256xf32>
    %c2 = arith.constant 2 : index
    %c0_23 = arith.constant 0 : index
    %c0_24 = arith.constant 0 : index
    %56 = vector.load %arg3[%c2, %c0_23, %c0_24] : memref<4x32x32xf32, #tpu.memory_space<vmem>>, vector<1x32x32xf32>
    %57 = vector.shape_cast %56 : vector<1x32x32xf32> to vector<32x32xf32>
    %cst_25 = arith.constant dense<0.000000e+00> : vector<32x256xf32>
    %58 = tpu.matmul %57, %55, %cst_25 {dimension_numbers = #tpu.dot_dimension_numbers<[1], [0], [0], [1], [0, 0, 1, 1], [], []>} : vector<32x32xf32>, vector<32x256xf32>, vector<32x256xf32> -> vector<32x256xf32>
    %59 = arith.addf %40, %58 : vector<32x256xf32>
    %60 = vector.extract_strided_slice %3 {offsets = [96, 0], sizes = [32, 256], strides = [1, 1]} : vector<384x256xf32> to vector<32x256xf32>
    %61 = vector.extract_strided_slice %3 {offsets = [224, 0], sizes = [32, 256], strides = [1, 1]} : vector<384x256xf32> to vector<32x256xf32>
    %62 = vector.extract_strided_slice %3 {offsets = [352, 0], sizes = [32, 256], strides = [1, 1]} : vector<384x256xf32> to vector<32x256xf32>
    %cst_26 = arith.constant dense<0.000000e+00> : vector<256x256xf32>
    %63 = tpu.matmul %61, %60, %cst_26 {dimension_numbers = #tpu.dot_dimension_numbers<[0], [0], [1], [1], [0, 1, 1, 1], [], []>} : vector<32x256xf32>, vector<32x256xf32>, vector<256x256xf32> -> vector<256x256xf32>
    %cst_27 = arith.constant dense<0xFF800000> : vector<256xf32>
    %64 = vector.multi_reduction <maximumf>, %63, %cst_27 [0] : vector<256x256xf32> to vector<256xf32>
    %65 = vector.shape_cast %64 : vector<256xf32> to vector<1x256xf32>
    %66 = vector.broadcast %65 : vector<1x256xf32> to vector<256x256xf32>
    %67 = arith.subf %63, %66 : vector<256x256xf32>
    %68 = math.exp %67 : vector<256x256xf32>
    %cst_28 = arith.constant dense<0.000000e+00> : vector<256xf32>
    %69 = vector.multi_reduction <add>, %68, %cst_28 [0] : vector<256x256xf32> to vector<256xf32>
    %70 = vector.shape_cast %69 : vector<256xf32> to vector<1x256xf32>
    %cst_29 = arith.constant dense<0.000000e+00> : vector<32x256xf32>
    %71 = tpu.matmul %62, %68, %cst_29 {dimension_numbers = #tpu.dot_dimension_numbers<[1], [0], [0], [1], [0, 0, 1, 1], [], []>} : vector<32x256xf32>, vector<256x256xf32>, vector<32x256xf32> -> vector<32x256xf32>
    %72 = tpu.reciprocal %70 {approx = true} : vector<1x256xf32> -> vector<1x256xf32>
    %73 = vector.broadcast %72 : vector<1x256xf32> to vector<32x256xf32>
    %74 = arith.mulf %71, %73 : vector<32x256xf32>
    %c3 = arith.constant 3 : index
    %c0_30 = arith.constant 0 : index
    %c0_31 = arith.constant 0 : index
    %75 = vector.load %arg3[%c3, %c0_30, %c0_31] : memref<4x32x32xf32, #tpu.memory_space<vmem>>, vector<1x32x32xf32>
    %76 = vector.shape_cast %75 : vector<1x32x32xf32> to vector<32x32xf32>
    %cst_32 = arith.constant dense<0.000000e+00> : vector<32x256xf32>
    %77 = tpu.matmul %76, %74, %cst_32 {dimension_numbers = #tpu.dot_dimension_numbers<[1], [0], [0], [1], [0, 0, 1, 1], [], []>} : vector<32x32xf32>, vector<32x256xf32>, vector<32x256xf32> -> vector<32x256xf32>
    %78 = arith.addf %59, %77 : vector<32x256xf32>
    %c0_33 = arith.constant 0 : index
    %c0_34 = arith.constant 0 : index
    %79 = vector.load %arg4[%c0_33, %c0_34] : memref<32x1xf32, #tpu.memory_space<vmem>>, vector<32x1xf32>
    %80 = vector.broadcast %79 : vector<32x1xf32> to vector<32x256xf32>
    %81 = arith.addf %78, %80 : vector<32x256xf32>
    %c0_35 = arith.constant 0 : index
    %c0_36 = arith.constant 0 : index
    %c0_37 = arith.constant 0 : index
    %82 = vector.load %arg5[%c0_35, %c0_36, %c0_37] : memref<1x32x256xf32, #tpu.memory_space<vmem>>, vector<1x32x256xf32>
    %83 = vector.shape_cast %82 : vector<1x32x256xf32> to vector<32x256xf32>
    %84 = vector.shape_cast %81 : vector<32x256xf32> to vector<1x32x256xf32>
    tpu.vector_store %arg5[%c0_35, %c0_36, %c0_37], %84 {strides = array<i32>} : memref<1x32x256xf32, #tpu.memory_space<vmem>>, vector<1x32x256xf32>,
    return
  }
  func.func @transform_0(%arg0: i32) -> (i32, i32, i32) {
    %c0_i32 = arith.constant 0 : i32
    %c0_i32_0 = arith.constant 0 : i32
    %c0_i32_1 = arith.constant 0 : i32
    return %arg0, %c0_i32, %c0_i32_0 : i32, i32, i32
  }
  func.func @transform_1(%arg0: i32) -> (i32, i32) {
    %c0_i32 = arith.constant 0 : i32
    %c0_i32_0 = arith.constant 0 : i32
    %c0_i32_1 = arith.constant 0 : i32
    return %c0_i32, %c0_i32_0 : i32, i32
  }
  func.func @transform_2(%arg0: i32) -> (i32, i32, i32) {
    %c0_i32 = arith.constant 0 : i32
    %c0_i32_0 = arith.constant 0 : i32
    %c0_i32_1 = arith.constant 0 : i32
    %c0_i32_2 = arith.constant 0 : i32
    return %c0_i32, %c0_i32_0, %c0_i32_1 : i32, i32, i32
  }
  func.func @transform_3(%arg0: i32) -> (i32, i32) {
    %c0_i32 = arith.constant 0 : i32
    %c0_i32_0 = arith.constant 0 : i32
    %c0_i32_1 = arith.constant 0 : i32
    return %c0_i32, %c0_i32_0 : i32, i32
  }
  func.func @transform_4(%arg0: i32) -> (i32, i32, i32) {
    %c0_i32 = arith.constant 0 : i32
    %c0_i32_0 = arith.constant 0 : i32
    %c0_i32_1 = arith.constant 0 : i32
    return %arg0, %c0_i32, %c0_i32_0 : i32, i32, i32
  }
}

</mosaic_0001>

<llo_original>
// kernel: attention_pallas.1
$region0: #{attention_pallas.1}
  #allocation0 [shape = 'u32[]', space=smem, size = 0x4, offset = 0x4, fixed_abs, tag = 'smem constant byte address 0x4 - core index']
  #allocation1 [shape = 'u32[72,128]{1,0:T(1,128)}', space=vmem, size = 0x9000, scoped, tag = 'internal scratch']
  %s0 = inlined_call_operand.vmem [shape: f32[2,32,256], index: 0, kind: input, shape index: {}]
  %s1 = inlined_call_operand.vmem [shape: f32[384,32], index: 1, kind: input, shape index: {}]
  %s2 = inlined_call_operand.vmem [shape: f32[4,32,32], index: 2, kind: input, shape index: {}]
  %s3 = inlined_call_operand.vmem [shape: f32[32,1], index: 3, kind: input, shape index: {}]
  %s4 = inlined_call_operand.vmem [shape: f32[2,32,256], index: 4, kind: output, shape index: {}]
  %s5 = sld [smem:[#allocation0]]
  $region49: #{attention_pallas.1} parent=0
    _
  %s7 = ssub.s32 1, %s5
  %s8 = scalar_select 0, %s7, %s5
  loop: start=0, step=1, limit=4
  $region2: #{attention_pallas.1} parent=0 // loop_pre_header
    _
  $region3: #{attention_pallas.1} parent=0 // loop_header
    %s10 = sphi 0, %s14
    %p11 = scmp.ge.s32.totalorder %s10, 4
    %s20 = sphi 0, %s22
    %s23 = sphi 0, %s20
    %s24 = sphi 0, %s23
    %s40 = sphi 0, %s24
    %s44 = sphi 0, %s44
    %s46 = sphi 0, %s44
    %s47 = sphi 0, %s46
    %s61 = sphi 0, %s47
    %s65 = sphi 0, %s65
    %s67 = sphi 0, %s65
    %s68 = sphi 0, %s67
    %s82 = sphi 0, %s68
    %s86 = sphi 0, %s86
    %s88 = sphi 0, %s86
    %s89 = sphi 0, %s88
    %s103 = sphi 0, %s89
    %s109 = sphi 0, %s111
    %s112 = sphi 0, %s109
    %s113 = sphi 0, %s112
    %s129 = sphi 0, %s113
  $region4: #{attention_pallas.1} parent=0 // loop_header_branch
    %13 = sbr.rel (%p11) target = $region8
  $region5: #{attention_pallas.1} parent=0 // loop_body
    %s15 = ssub.s32 %s10, 1
    %s16 = ssub.s32 %s10, 2
    %s17 = sadd.s32 %s10, 1
    %s18 = ssub.s32 %s10, %s17
    %p19 = scmp.eq.s32.totalorder %s18, 0
    %s21 = sadd.s32 %s20, 1
    %s22 = scalar_select %p19, %s20, %s21
    %p25 = pneg %p19
    %p26 = scmp.eq.s32.totalorder %s10, 1
    %p27 = por %p25, %p26
    %p28 = scmp.ne.s32.totalorder %s20, %s23
    %p29 = scmp.eq.s32.totalorder %s10, 0
    %p30 = por %p28, %p29
    %p31 = scmp.ne.s32.totalorder %s20, %s23
    %p32 = scmp.eq.s32.totalorder %s15, 1
    %p33 = por %p31, %p32
    %p34 = scmp.ne.s32.totalorder %s23, %s24
    %p35 = scmp.eq.s32.totalorder %s15, 0
    %p36 = por %p34, %p35
    %p37 = scmp.ne.s32.totalorder %s23, %s24
    %p38 = scmp.eq.s32.totalorder %s16, 1
    %p39 = por %p37, %p38
    %p41 = scmp.ne.s32.totalorder %s24, %s40
    %p42 = scmp.eq.s32.totalorder %s16, 0
    %p43 = por %p41, %p42
    %s45 = sadd.s32 %s44, 1
    %p48 = scmp.eq.s32.totalorder %s10, 1
    %p49 = scmp.ne.s32.totalorder %s44, %s46
    %p50 = scmp.eq.s32.totalorder %s10, 0
    %p51 = por %p49, %p50
    %p52 = scmp.ne.s32.totalorder %s44, %s46
    %p53 = scmp.eq.s32.totalorder %s15, 1
    %p54 = por %p52, %p53
    %p55 = scmp.ne.s32.totalorder %s46, %s47
    %p56 = scmp.eq.s32.totalorder %s15, 0
    %p57 = por %p55, %p56
    %p58 = scmp.ne.s32.totalorder %s46, %s47
    %p59 = scmp.eq.s32.totalorder %s16, 1
    %p60 = por %p58, %p59
    %p62 = scmp.ne.s32.totalorder %s47, %s61
    %p63 = scmp.eq.s32.totalorder %s16, 0
    %p64 = por %p62, %p63
    %s66 = sadd.s32 %s65, 1
    %p69 = scmp.eq.s32.totalorder %s10, 1
    %p70 = scmp.ne.s32.totalorder %s65, %s67
    %p71 = scmp.eq.s32.totalorder %s10, 0
    %p72 = por %p70, %p71
    %p73 = scmp.ne.s32.totalorder %s65, %s67
    %p74 = scmp.eq.s32.totalorder %s15, 1
    %p75 = por %p73, %p74
    %p76 = scmp.ne.s32.totalorder %s67, %s68
    %p77 = scmp.eq.s32.totalorder %s15, 0
    %p78 = por %p76, %p77
    %p79 = scmp.ne.s32.totalorder %s67, %s68
    %p80 = scmp.eq.s32.totalorder %s16, 1
    %p81 = por %p79, %p80
    %p83 = scmp.ne.s32.totalorder %s68, %s82
    %p84 = scmp.eq.s32.totalorder %s16, 0
    %p85 = por %p83, %p84
    %s87 = sadd.s32 %s86, 1
    %p90 = scmp.eq.s32.totalorder %s10, 1
    %p91 = scmp.ne.s32.totalorder %s86, %s88
    %p92 = scmp.eq.s32.totalorder %s10, 0
    %p93 = por %p91, %p92
    %p94 = scmp.ne.s32.totalorder %s86, %s88
    %p95 = scmp.eq.s32.totalorder %s15, 1
    %p96 = por %p94, %p95
    %p97 = scmp.ne.s32.totalorder %s88, %s89
    %p98 = scmp.eq.s32.totalorder %s15, 0
    %p99 = por %p97, %p98
    %p100 = scmp.ne.s32.totalorder %s88, %s89
    %p101 = scmp.eq.s32.totalorder %s16, 1
    %p102 = por %p100, %p101
    %p104 = scmp.ne.s32.totalorder %s89, %s103
    %p105 = scmp.eq.s32.totalorder %s16, 0
    %p106 = por %p104, %p105
    %s107 = ssub.s32 %s10, %s17
    %p108 = scmp.eq.s32.totalorder %s107, 0
    %s110 = sadd.s32 %s109, 1
    %s111 = scalar_select %p108, %s109, %s110
    %p114 = pneg %p108
    %p115 = scmp.eq.s32.totalorder %s10, 1
    %p116 = por %p114, %p115
    %p117 = scmp.ne.s32.totalorder %s109, %s112
    %p118 = scmp.eq.s32.totalorder %s10, 0
    %p119 = por %p117, %p118
    %p120 = scmp.ne.s32.totalorder %s109, %s112
    %p121 = scmp.eq.s32.totalorder %s15, 1
    %p122 = por %p120, %p121
    %p123 = scmp.ne.s32.totalorder %s112, %s113
    %p124 = scmp.eq.s32.totalorder %s15, 0
    %p125 = por %p123, %p124
    %p126 = scmp.ne.s32.totalorder %s112, %s113
    %p127 = scmp.eq.s32.totalorder %s16, 1
    %p128 = por %p126, %p127
    %p130 = scmp.ne.s32.totalorder %s113, %s129
    %p131 = scmp.eq.s32.totalorder %s16, 0
    %p132 = por %p130, %p131
    %p133 = scmp.le.s32.totalorder 1, %s10
    %p134 = scmp.lt.s32.totalorder %s10, 3
    %p135 = pnand %p133, %p134
    %p136 = pneg %p135
    // Predicated region
    $region9: #{attention_pallas.1} parent=5 // pred_check
      _
    $region10: #{attention_pallas.1} parent=5 // pred_check_branch
      %138 = sbr.rel (%p135) target = $region12
    $region11: #{attention_pallas.1} parent=5 // pred_region
      %s139 = ssub.s32 %s10, 1
      // Predicated region
      $region13: #{attention_pallas.1} parent=11 // pred_check
        %p140 = pneg %p57
      $region14: #{attention_pallas.1} parent=11 // pred_check_branch
        %142 = sbr.rel (%p140) target = $region16
      $region15: #{attention_pallas.1} parent=11 // pred_region
        _
      $region16: #{attention_pallas.1} parent=11 // pred_fallthru
        _
      // Predicated region
      $region17: #{attention_pallas.1} parent=11 // pred_check
        %p143 = pneg %p78
      $region18: #{attention_pallas.1} parent=11 // pred_check_branch
        %145 = sbr.rel (%p143) target = $region20
      $region19: #{attention_pallas.1} parent=11 // pred_region
        _
      $region20: #{attention_pallas.1} parent=11 // pred_fallthru
        _
      // Predicated region
      $region21: #{attention_pallas.1} parent=11 // pred_check
        %p146 = pneg %p99
      $region22: #{attention_pallas.1} parent=11 // pred_check_branch
        %148 = sbr.rel (%p146) target = $region24
      $region23: #{attention_pallas.1} parent=11 // pred_region
        _
      $region24: #{attention_pallas.1} parent=11 // pred_fallthru
        _
    $region12: #{attention_pallas.1} parent=5 // pred_fallthru
      _
    %p149 = scmp.lt.s32.totalorder %s10, 2
    // Predicated region
    $region25: #{attention_pallas.1} parent=5 // pred_check
      %p150 = pneg %p149
    $region26: #{attention_pallas.1} parent=5 // pred_check_branch
      %152 = sbr.rel (%p150) target = $region28
    $region27: #{attention_pallas.1} parent=5 // pred_region
      // Predicated region
      $region29: #{attention_pallas.1} parent=27 // pred_check
        %p153 = pneg %p30
      $region30: #{attention_pallas.1} parent=27 // pred_check_branch
        %155 = sbr.rel (%p153) target = $region32
      $region31: #{attention_pallas.1} parent=27 // pred_region
        %p156 = scmp.lt.s32.totalorder %s10, 1
        %s157 = scalar_select %p156, %s10, 1
        %s158 = smul.addr %s157, 8
        %s159 = smul.addr %s158, 8
        %s160 = scalar_lea.vmem %s0, %s159
      $region32: #{attention_pallas.1} parent=27 // pred_fallthru
        _
    $region28: #{attention_pallas.1} parent=5 // pred_fallthru
      _
    %p161 = scmp.le.s32.totalorder 1, %s10
    %p162 = scmp.lt.s32.totalorder %s10, 3
    %p163 = pnand %p161, %p162
    %p164 = pneg %p163
    // Predicated region
    $region33: #{attention_pallas.1} parent=5 // pred_check
      _
    $region34: #{attention_pallas.1} parent=5 // pred_check_branch
      %166 = sbr.rel (%p163) target = $region36
    $region35: #{attention_pallas.1} parent=5 // pred_region
      %s167 = ssub.s32 %s10, 1
      %p168 = scmp.lt.s32.totalorder %s15, 1
      %s169 = scalar_select %p168, %s15, 1
      %s170 = smul.addr %s169, 8
      %s171 = smul.addr %s170, 8
      %s172 = scalar_lea.vmem %s0, %s171
      %p173 = pneg %p36
      %p174 = pneg %p33
      %p175 = pneg %p57
      %p176 = pneg %p54
      %p177 = pneg %p78
      %p178 = pneg %p75
      %p179 = pneg %p99
      %p180 = pneg %p96
      %p181 = pneg %p125
      %p182 = pneg %p122
      %p183 = scmp.lt.s32.totalorder %s15, 1
      %s184 = scalar_select %p183, %s15, 1
      %s185 = smul.addr %s184, 8
      %s186 = smul.addr %s185, 8
      %s187 = scalar_lea.vmem %s4, %s186
      %p188 = scmp.lt.s32.totalorder %s15, 1
      %s189 = scalar_select %p188, %s15, 1
      %s190 = smul.addr %s189, 8
      %s191 = smul.addr %s190, 8
      %s192 = scalar_lea.vmem %s0, %s191
      %p193 = scmp.lt.s32.totalorder %s15, 1
      %s194 = scalar_select %p193, %s15, 1
      %s195 = smul.addr %s194, 8
      %s196 = smul.addr %s195, 8
      %s197 = scalar_lea.vmem %s4, %s196
      %v198 = vld [vmem:[%s192] sm:$0xff]
      %v199 = vld [vmem:[%s192 + $0x8] sm:$0xff]
      %v200 = vld [vmem:[%s192 + $0x10] sm:$0xff]
      %v201 = vld [vmem:[%s192 + $0x18] sm:$0xff]
      %v202 = vld [vmem:[%s192 + $0x20] sm:$0xff]
      %v203 = vld [vmem:[%s192 + $0x28] sm:$0xff]
      %v204 = vld [vmem:[%s192 + $0x30] sm:$0xff]
      %v205 = vld [vmem:[%s192 + $0x38] sm:$0xff]
      %v206 = vld [vmem:[%s1] sm:$0xff]
      %v207 = vld [vmem:[%s1 + $0x8] sm:$0xff]
      %v208 = vld [vmem:[%s1 + $0x10] sm:$0xff]
      %v209 = vld [vmem:[%s1 + $0x18] sm:$0xff]
      %v210 = vld [vmem:[%s1 + $0x20] sm:$0xff]
      %v211 = vld [vmem:[%s1 + $0x28] sm:$0xff]
      %v212 = vld [vmem:[%s1 + $0x30] sm:$0xff]
      %v213 = vld [vmem:[%s1 + $0x38] sm:$0xff]
      %v214 = vld [vmem:[%s1 + $0x40] sm:$0xff]
      %v215 = vld [vmem:[%s1 + $0x48] sm:$0xff]
      %v216 = vld [vmem:[%s1 + $0x50] sm:$0xff]
      %v217 = vld [vmem:[%s1 + $0x58] sm:$0xff]
      %v218 = vld [vmem:[%s1 + $0x60] sm:$0xff]
      %v219 = vld [vmem:[%s1 + $0x68] sm:$0xff]
      %v220 = vld [vmem:[%s1 + $0x70] sm:$0xff]
      %v221 = vld [vmem:[%s1 + $0x78] sm:$0xff]
      %v222 = vld [vmem:[%s1 + $0x80] sm:$0xff]
      %v223 = vld [vmem:[%s1 + $0x88] sm:$0xff]
      %v224 = vld [vmem:[%s1 + $0x90] sm:$0xff]
      %v225 = vld [vmem:[%s1 + $0x98] sm:$0xff]
      %v226 = vld [vmem:[%s1 + $0xa0] sm:$0xff]
      %v227 = vld [vmem:[%s1 + $0xa8] sm:$0xff]
      %v228 = vld [vmem:[%s1 + $0xb0] sm:$0xff]
      %v229 = vld [vmem:[%s1 + $0xb8] sm:$0xff]
      %v230 = vld [vmem:[%s1 + $0xc0] sm:$0xff]
      %v231 = vld [vmem:[%s1 + $0xc8] sm:$0xff]
      %v232 = vld [vmem:[%s1 + $0xd0] sm:$0xff]
      %v233 = vld [vmem:[%s1 + $0xd8] sm:$0xff]
      %v234 = vld [vmem:[%s1 + $0xe0] sm:$0xff]
      %v235 = vld [vmem:[%s1 + $0xe8] sm:$0xff]
      %v236 = vld [vmem:[%s1 + $0xf0] sm:$0xff]
      %v237 = vld [vmem:[%s1 + $0xf8] sm:$0xff]
      %v238 = vld [vmem:[%s1 + $0x100] sm:$0xff]
      %v239 = vld [vmem:[%s1 + $0x108] sm:$0xff]
      %v240 = vld [vmem:[%s1 + $0x110] sm:$0xff]
      %v241 = vld [vmem:[%s1 + $0x118] sm:$0xff]
      %v242 = vld [vmem:[%s1 + $0x120] sm:$0xff]
      %v243 = vld [vmem:[%s1 + $0x128] sm:$0xff]
      %v244 = vld [vmem:[%s1 + $0x130] sm:$0xff]
      %v245 = vld [vmem:[%s1 + $0x138] sm:$0xff]
      %v246 = vld [vmem:[%s1 + $0x140] sm:$0xff]
      %v247 = vld [vmem:[%s1 + $0x148] sm:$0xff]
      %v248 = vld [vmem:[%s1 + $0x150] sm:$0xff]
      %v249 = vld [vmem:[%s1 + $0x158] sm:$0xff]
      %v250 = vld [vmem:[%s1 + $0x160] sm:$0xff]
      %v251 = vld [vmem:[%s1 + $0x168] sm:$0xff]
      %v252 = vld [vmem:[%s1 + $0x170] sm:$0xff]
      %v253 = vld [vmem:[%s1 + $0x178] sm:$0xff]
      %vm254 = vcmask 261120
      %v256 = vsel %vm254, %v206, 0
      %v259 = vsel %vm254, %v207, 0
      %v262 = vsel %vm254, %v208, 0
      %v265 = vsel %vm254, %v209, 0
      %v268 = vsel %vm254, %v210, 0
      %v271 = vsel %vm254, %v211, 0
      %v274 = vsel %vm254, %v212, 0
      %v277 = vsel %vm254, %v213, 0
      %v280 = vsel %vm254, %v214, 0
      %v283 = vsel %vm254, %v215, 0
      %v286 = vsel %vm254, %v216, 0
      %v289 = vsel %vm254, %v217, 0
      %v292 = vsel %vm254, %v218, 0
      %v295 = vsel %vm254, %v219, 0
      %v298 = vsel %vm254, %v220, 0
      %v301 = vsel %vm254, %v221, 0
      %v304 = vsel %vm254, %v222, 0
      %v307 = vsel %vm254, %v223, 0
      %v310 = vsel %vm254, %v224, 0
      %v313 = vsel %vm254, %v225, 0
      %v316 = vsel %vm254, %v226, 0
      %v319 = vsel %vm254, %v227, 0
      %v322 = vsel %vm254, %v228, 0
      %v325 = vsel %vm254, %v229, 0
      %v328 = vsel %vm254, %v230, 0
      %v331 = vsel %vm254, %v231, 0
      %v334 = vsel %vm254, %v232, 0
      %v337 = vsel %vm254, %v233, 0
      %v340 = vsel %vm254, %v234, 0
      %v343 = vsel %vm254, %v235, 0
      %v346 = vsel %vm254, %v236, 0
      %v349 = vsel %vm254, %v237, 0
      %v352 = vsel %vm254, %v238, 0
      %v355 = vsel %vm254, %v239, 0
      %v358 = vsel %vm254, %v240, 0
      %v361 = vsel %vm254, %v241, 0
      %v364 = vsel %vm254, %v242, 0
      %v367 = vsel %vm254, %v243, 0
      %v370 = vsel %vm254, %v244, 0
      %v373 = vsel %vm254, %v245, 0
      %v376 = vsel %vm254, %v246, 0
      %v379 = vsel %vm254, %v247, 0
      %v382 = vsel %vm254, %v248, 0
      %v385 = vsel %vm254, %v249, 0
      %v388 = vsel %vm254, %v250, 0
      %v391 = vsel %vm254, %v251, 0
      %v394 = vsel %vm254, %v252, 0
      %v397 = vsel %vm254, %v253, 0
      %399 = vmatpush.msra.mxu0 0.0
      %400 = vmatpush.msra.mxu0 0.0
      %401 = vmatpush.msra.mxu0 0.0
      %402 = vmatpush.msra.mxu0 0.0
      %403 = vmatpush.msra.mxu0 0.0
      %404 = vmatpush.msra.mxu0 0.0
      %405 = vmatpush.msra.mxu0 0.0
      %406 = vmatpush.msra.mxu0 0.0
      %407 = vmatpush.msra.mxu0 0.0
      %408 = vmatpush.msra.mxu0 0.0
      %409 = vmatpush.msra.mxu0 0.0
      %410 = vmatpush.msra.mxu0 0.0
      %411 = vmatpush.msra.mxu0 %v204
      %412 = vmatpush.msra.mxu0 %v202
      %413 = vmatpush.msra.mxu0 %v200
      %414 = vmatpush.msra.mxu0 %v198
      %415 = vmatmul.f32.gmra.mxu0 %v256
      %v416 = vpop.f32.mrf.mxu0
      %v417 = vadd.f32 0.0, %v416
      %418 = vmatmul.f32.gmra.mxu0 %v259
      %v419 = vpop.f32.mrf.mxu0
      %v420 = vadd.f32 0.0, %v419
      %421 = vmatmul.f32.gmra.mxu0 %v262
      %v422 = vpop.f32.mrf.mxu0
      %v423 = vadd.f32 0.0, %v422
      %424 = vmatmul.f32.gmra.mxu0 %v265
      %v425 = vpop.f32.mrf.mxu0
      %v426 = vadd.f32 0.0, %v425
      %427 = vmatmul.f32.gmra.mxu0 %v268
      %v428 = vpop.f32.mrf.mxu0
      %v429 = vadd.f32 0.0, %v428
      %430 = vmatmul.f32.gmra.mxu0 %v271
      %v431 = vpop.f32.mrf.mxu0
      %v432 = vadd.f32 0.0, %v431
      %433 = vmatmul.f32.gmra.mxu0 %v274
      %v434 = vpop.f32.mrf.mxu0
      %v435 = vadd.f32 0.0, %v434
      %436 = vmatmul.f32.gmra.mxu0 %v277
      %v437 = vpop.f32.mrf.mxu0
      %v438 = vadd.f32 0.0, %v437
      %439 = vmatmul.f32.gmra.mxu0 %v280
      %v440 = vpop.f32.mrf.mxu0
      %v441 = vadd.f32 0.0, %v440
      %442 = vmatmul.f32.gmra.mxu0 %v283
      %v443 = vpop.f32.mrf.mxu0
      %v444 = vadd.f32 0.0, %v443
      %445 = vmatmul.f32.gmra.mxu0 %v286
      %v446 = vpop.f32.mrf.mxu0
      %v447 = vadd.f32 0.0, %v446
      %448 = vmatmul.f32.gmra.mxu0 %v289
      %v449 = vpop.f32.mrf.mxu0
      %v450 = vadd.f32 0.0, %v449
      %451 = vmatmul.f32.gmra.mxu0 %v292
      %v452 = vpop.f32.mrf.mxu0
      %v453 = vadd.f32 0.0, %v452
      %454 = vmatmul.f32.gmra.mxu0 %v295
      %v455 = vpop.f32.mrf.mxu0
      %v456 = vadd.f32 0.0, %v455
      %457 = vmatmul.f32.gmra.mxu0 %v298
      %v458 = vpop.f32.mrf.mxu0
      %v459 = vadd.f32 0.0, %v458
      %460 = vmatmul.f32.gmra.mxu0 %v301
      %v461 = vpop.f32.mrf.mxu0
      %v462 = vadd.f32 0.0, %v461
      %463 = vmatmul.f32.gmra.mxu0 %v304
      %v464 = vpop.f32.mrf.mxu0
      %v465 = vadd.f32 0.0, %v464
      %466 = vmatmul.f32.gmra.mxu0 %v307
      %v467 = vpop.f32.mrf.mxu0
      %v468 = vadd.f32 0.0, %v467
      %469 = vmatmul.f32.gmra.mxu0 %v310
      %v470 = vpop.f32.mrf.mxu0
      %v471 = vadd.f32 0.0, %v470
      %472 = vmatmul.f32.gmra.mxu0 %v313
      %v473 = vpop.f32.mrf.mxu0
      %v474 = vadd.f32 0.0, %v473
      %475 = vmatmul.f32.gmra.mxu0 %v316
      %v476 = vpop.f32.mrf.mxu0
      %v477 = vadd.f32 0.0, %v476
      %478 = vmatmul.f32.gmra.mxu0 %v319
      %v479 = vpop.f32.mrf.mxu0
      %v480 = vadd.f32 0.0, %v479
      %481 = vmatmul.f32.gmra.mxu0 %v322
      %v482 = vpop.f32.mrf.mxu0
      %v483 = vadd.f32 0.0, %v482
      %484 = vmatmul.f32.gmra.mxu0 %v325
      %v485 = vpop.f32.mrf.mxu0
      %v486 = vadd.f32 0.0, %v485
      %487 = vmatmul.f32.gmra.mxu0 %v328
      %v488 = vpop.f32.mrf.mxu0
      %v489 = vadd.f32 0.0, %v488
      %490 = vmatmul.f32.gmra.mxu0 %v331
      %v491 = vpop.f32.mrf.mxu0
      %v492 = vadd.f32 0.0, %v491
      %493 = vmatmul.f32.gmra.mxu0 %v334
      %v494 = vpop.f32.mrf.mxu0
      %v495 = vadd.f32 0.0, %v494
      %496 = vmatmul.f32.gmra.mxu0 %v337
      %v497 = vpop.f32.mrf.mxu0
      %v498 = vadd.f32 0.0, %v497
      %499 = vmatmul.f32.gmra.mxu0 %v340
      %v500 = vpop.f32.mrf.mxu0
      %v501 = vadd.f32 0.0, %v500
      %502 = vmatmul.f32.gmra.mxu0 %v343
      %v503 = vpop.f32.mrf.mxu0
      %v504 = vadd.f32 0.0, %v503
      %505 = vmatmul.f32.gmra.mxu0 %v346
      %v506 = vpop.f32.mrf.mxu0
      %v507 = vadd.f32 0.0, %v506
      %508 = vmatmul.f32.gmra.mxu0 %v349
      %v509 = vpop.f32.mrf.mxu0
      %v510 = vadd.f32 0.0, %v509
      %511 = vmatmul.f32.gmra.mxu0 %v352
      %v512 = vpop.f32.mrf.mxu0
      %v513 = vadd.f32 0.0, %v512
      %514 = vmatmul.f32.gmra.mxu0 %v355
      %v515 = vpop.f32.mrf.mxu0
      %v516 = vadd.f32 0.0, %v515
      %517 = vmatmul.f32.gmra.mxu0 %v358
      %v518 = vpop.f32.mrf.mxu0
      %v519 = vadd.f32 0.0, %v518
      %520 = vmatmul.f32.gmra.mxu0 %v361
      %v521 = vpop.f32.mrf.mxu0
      %v522 = vadd.f32 0.0, %v521
      %523 = vmatmul.f32.gmra.mxu0 %v364
      %v524 = vpop.f32.mrf.mxu0
      %v525 = vadd.f32 0.0, %v524
      %526 = vmatmul.f32.gmra.mxu0 %v367
      %v527 = vpop.f32.mrf.mxu0
      %v528 = vadd.f32 0.0, %v527
      %529 = vmatmul.f32.gmra.mxu0 %v370
      %v530 = vpop.f32.mrf.mxu0
      %v531 = vadd.f32 0.0, %v530
      %532 = vmatmul.f32.gmra.mxu0 %v373
      %v533 = vpop.f32.mrf.mxu0
      %v534 = vadd.f32 0.0, %v533
      %535 = vmatmul.f32.gmra.mxu0 %v376
      %v536 = vpop.f32.mrf.mxu0
      %v537 = vadd.f32 0.0, %v536
      %538 = vmatmul.f32.gmra.mxu0 %v379
      %v539 = vpop.f32.mrf.mxu0
      %v540 = vadd.f32 0.0, %v539
      %541 = vmatmul.f32.gmra.mxu0 %v382
      %v542 = vpop.f32.mrf.mxu0
      %v543 = vadd.f32 0.0, %v542
      %544 = vmatmul.f32.gmra.mxu0 %v385
      %v545 = vpop.f32.mrf.mxu0
      %v546 = vadd.f32 0.0, %v545
      %547 = vmatmul.f32.gmra.mxu0 %v388
      %v548 = vpop.f32.mrf.mxu0
      %v549 = vadd.f32 0.0, %v548
      %550 = vmatmul.f32.gmra.mxu0 %v391
      %v551 = vpop.f32.mrf.mxu0
      %v552 = vadd.f32 0.0, %v551
      %553 = vmatmul.f32.gmra.mxu0 %v394
      %v554 = vpop.f32.mrf.mxu0
      %v555 = vadd.f32 0.0, %v554
      %556 = vmatmul.f32.gmra.mxu0 %v397
      %v557 = vpop.f32.mrf.mxu0
      %v558 = vadd.f32 0.0, %v557
      %559 = vdwg.mxu0
      %560 = vmatpush.msra.mxu0 0.0
      %561 = vmatpush.msra.mxu0 0.0
      %562 = vmatpush.msra.mxu0 0.0
      %563 = vmatpush.msra.mxu0 0.0
      %564 = vmatpush.msra.mxu0 0.0
      %565 = vmatpush.msra.mxu0 0.0
      %566 = vmatpush.msra.mxu0 0.0
      %567 = vmatpush.msra.mxu0 0.0
      %568 = vmatpush.msra.mxu0 0.0
      %569 = vmatpush.msra.mxu0 0.0
      %570 = vmatpush.msra.mxu0 0.0
      %571 = vmatpush.msra.mxu0 0.0
      %572 = vmatpush.msra.mxu0 %v205
      %573 = vmatpush.msra.mxu0 %v203
      %574 = vmatpush.msra.mxu0 %v201
      %575 = vmatpush.msra.mxu0 %v199
      %576 = vmatmul.f32.gmra.mxu0 %v256
      %v577 = vpop.f32.mrf.mxu0
      %v578 = vadd.f32 0.0, %v577
      %579 = vmatmul.f32.gmra.mxu0 %v259
      %v580 = vpop.f32.mrf.mxu0
      %v581 = vadd.f32 0.0, %v580
      %582 = vmatmul.f32.gmra.mxu0 %v262
      %v583 = vpop.f32.mrf.mxu0
      %v584 = vadd.f32 0.0, %v583
      %585 = vmatmul.f32.gmra.mxu0 %v265
      %v586 = vpop.f32.mrf.mxu0
      %v587 = vadd.f32 0.0, %v586
      %588 = vmatmul.f32.gmra.mxu0 %v268
      %v589 = vpop.f32.mrf.mxu0
      %v590 = vadd.f32 0.0, %v589
      %591 = vmatmul.f32.gmra.mxu0 %v271
      %v592 = vpop.f32.mrf.mxu0
      %v593 = vadd.f32 0.0, %v592
      %594 = vmatmul.f32.gmra.mxu0 %v274
      %v595 = vpop.f32.mrf.mxu0
      %v596 = vadd.f32 0.0, %v595
      %597 = vmatmul.f32.gmra.mxu0 %v277
      %v598 = vpop.f32.mrf.mxu0
      %v599 = vadd.f32 0.0, %v598
      %600 = vmatmul.f32.gmra.mxu0 %v280
      %v601 = vpop.f32.mrf.mxu0
      %v602 = vadd.f32 0.0, %v601
      %603 = vmatmul.f32.gmra.mxu0 %v283
      %v604 = vpop.f32.mrf.mxu0
      %v605 = vadd.f32 0.0, %v604
      %606 = vmatmul.f32.gmra.mxu0 %v286
      %v607 = vpop.f32.mrf.mxu0
      %v608 = vadd.f32 0.0, %v607
      %609 = vmatmul.f32.gmra.mxu0 %v289
      %v610 = vpop.f32.mrf.mxu0
      %v611 = vadd.f32 0.0, %v610
      %612 = vmatmul.f32.gmra.mxu0 %v292
      %v613 = vpop.f32.mrf.mxu0
      %v614 = vadd.f32 0.0, %v613
      %615 = vmatmul.f32.gmra.mxu0 %v295
      %v616 = vpop.f32.mrf.mxu0
      %v617 = vadd.f32 0.0, %v616
      %618 = vmatmul.f32.gmra.mxu0 %v298
      %v619 = vpop.f32.mrf.mxu0
      %v620 = vadd.f32 0.0, %v619
      %621 = vmatmul.f32.gmra.mxu0 %v301
      %v622 = vpop.f32.mrf.mxu0
      %v623 = vadd.f32 0.0, %v622
      %624 = vmatmul.f32.gmra.mxu0 %v304
      %v625 = vpop.f32.mrf.mxu0
      %v626 = vadd.f32 0.0, %v625
      %627 = vmatmul.f32.gmra.mxu0 %v307
      %v628 = vpop.f32.mrf.mxu0
      %v629 = vadd.f32 0.0, %v628
      %630 = vmatmul.f32.gmra.mxu0 %v310
      %v631 = vpop.f32.mrf.mxu0
      %v632 = vadd.f32 0.0, %v631
      %633 = vmatmul.f32.gmra.mxu0 %v313
      %v634 = vpop.f32.mrf.mxu0
      %v635 = vadd.f32 0.0, %v634
      %636 = vmatmul.f32.gmra.mxu0 %v316
      %v637 = vpop.f32.mrf.mxu0
      %v638 = vadd.f32 0.0, %v637
      %639 = vmatmul.f32.gmra.mxu0 %v319
      %v640 = vpop.f32.mrf.mxu0
      %v641 = vadd.f32 0.0, %v640
      %642 = vmatmul.f32.gmra.mxu0 %v322
      %v643 = vpop.f32.mrf.mxu0
      %v644 = vadd.f32 0.0, %v643
      %645 = vmatmul.f32.gmra.mxu0 %v325
      %v646 = vpop.f32.mrf.mxu0
      %v647 = vadd.f32 0.0, %v646
      %648 = vmatmul.f32.gmra.mxu0 %v328
      %v649 = vpop.f32.mrf.mxu0
      %v650 = vadd.f32 0.0, %v649
      %651 = vmatmul.f32.gmra.mxu0 %v331
      %v652 = vpop.f32.mrf.mxu0
      %v653 = vadd.f32 0.0, %v652
      %654 = vmatmul.f32.gmra.mxu0 %v334
      %v655 = vpop.f32.mrf.mxu0
      %v656 = vadd.f32 0.0, %v655
      %657 = vmatmul.f32.gmra.mxu0 %v337
      %v658 = vpop.f32.mrf.mxu0
      %v659 = vadd.f32 0.0, %v658
      %660 = vmatmul.f32.gmra.mxu0 %v340
      %v661 = vpop.f32.mrf.mxu0
      %v662 = vadd.f32 0.0, %v661
      %663 = vmatmul.f32.gmra.mxu0 %v343
      %v664 = vpop.f32.mrf.mxu0
      %v665 = vadd.f32 0.0, %v664
      %666 = vmatmul.f32.gmra.mxu0 %v346
      %v667 = vpop.f32.mrf.mxu0
      %v668 = vadd.f32 0.0, %v667
      %669 = vmatmul.f32.gmra.mxu0 %v349
      %v670 = vpop.f32.mrf.mxu0
      %v671 = vadd.f32 0.0, %v670
      %672 = vmatmul.f32.gmra.mxu0 %v352
      %v673 = vpop.f32.mrf.mxu0
      %v674 = vadd.f32 0.0, %v673
      %675 = vmatmul.f32.gmra.mxu0 %v355
      %v676 = vpop.f32.mrf.mxu0
      %v677 = vadd.f32 0.0, %v676
      %678 = vmatmul.f32.gmra.mxu0 %v358
      %v679 = vpop.f32.mrf.mxu0
      %v680 = vadd.f32 0.0, %v679
      %681 = vmatmul.f32.gmra.mxu0 %v361
      %v682 = vpop.f32.mrf.mxu0
      %v683 = vadd.f32 0.0, %v682
      %684 = vmatmul.f32.gmra.mxu0 %v364
      %v685 = vpop.f32.mrf.mxu0
      %v686 = vadd.f32 0.0, %v685
      %687 = vmatmul.f32.gmra.mxu0 %v367
      %v688 = vpop.f32.mrf.mxu0
      %v689 = vadd.f32 0.0, %v688
      %690 = vmatmul.f32.gmra.mxu0 %v370
      %v691 = vpop.f32.mrf.mxu0
      %v692 = vadd.f32 0.0, %v691
      %693 = vmatmul.f32.gmra.mxu0 %v373
      %v694 = vpop.f32.mrf.mxu0
      %v695 = vadd.f32 0.0, %v694
      %696 = vmatmul.f32.gmra.mxu0 %v376
      %v697 = vpop.f32.mrf.mxu0
      %v698 = vadd.f32 0.0, %v697
      %699 = vmatmul.f32.gmra.mxu0 %v379
      %v700 = vpop.f32.mrf.mxu0
      %v701 = vadd.f32 0.0, %v700
      %702 = vmatmul.f32.gmra.mxu0 %v382
      %v703 = vpop.f32.mrf.mxu0
      %v704 = vadd.f32 0.0, %v703
      %705 = vmatmul.f32.gmra.mxu0 %v385
      %v706 = vpop.f32.mrf.mxu0
      %v707 = vadd.f32 0.0, %v706
      %708 = vmatmul.f32.gmra.mxu0 %v388
      %v709 = vpop.f32.mrf.mxu0
      %v710 = vadd.f32 0.0, %v709
      %711 = vmatmul.f32.gmra.mxu0 %v391
      %v712 = vpop.f32.mrf.mxu0
      %v713 = vadd.f32 0.0, %v712
      %714 = vmatmul.f32.gmra.mxu0 %v394
      %v715 = vpop.f32.mrf.mxu0
      %v716 = vadd.f32 0.0, %v715
      %717 = vmatmul.f32.gmra.mxu0 %v397
      %v718 = vpop.f32.mrf.mxu0
      %v719 = vadd.f32 0.0, %v718
      %720 = vdwg.mxu0
      %721 = vxpose.xlu0.b32.start [1/16] %v465, 128
      %722 = vxpose.xlu0.b32.cont [2/16] %v468, 128
      %723 = vxpose.xlu0.b32.cont [3/16] %v471, 128
      %724 = vxpose.xlu0.b32.cont [4/16] %v474, 128
      %725 = vxpose.xlu0.b32.cont [5/16] 0.0, 128
      %726 = vxpose.xlu0.b32.cont [6/16] 0.0, 128
      %727 = vxpose.xlu0.b32.cont [7/16] 0.0, 128
      %728 = vxpose.xlu0.b32.cont [8/16] 0.0, 128
      %729 = vxpose.xlu0.b32.cont [9/16] 0.0, 128
      %730 = vxpose.xlu0.b32.cont [10/16] 0.0, 128
      %731 = vxpose.xlu0.b32.cont [11/16] 0.0, 128
      %732 = vxpose.xlu0.b32.cont [12/16] 0.0, 128
      %733 = vxpose.xlu0.b32.cont [13/16] 0.0, 128
      %734 = vxpose.xlu0.b32.cont [14/16] 0.0, 128
      %735 = vxpose.xlu0.b32.cont [15/16] 0.0, 128
      %736 = vxpose.xlu0.b32.end [16/16] 0.0, 128
      %v737 = vpop.trf.xlu0
      %v738 = vpop.trf.xlu0
      %v739 = vpop.trf.xlu0
      %v740 = vpop.trf.xlu0
      %v741 = vpop.trf.xlu0
      %v742 = vpop.trf.xlu0
      %v743 = vpop.trf.xlu0
      %v744 = vpop.trf.xlu0
      %v745 = vpop.trf.xlu0
      %v746 = vpop.trf.xlu0
      %v747 = vpop.trf.xlu0
      %v748 = vpop.trf.xlu0
      %v749 = vpop.trf.xlu0
      %v750 = vpop.trf.xlu0
      %v751 = vpop.trf.xlu0
      %v752 = vpop.trf.xlu0
      %753 = vxpose.xlu0.b32.start [1/16] %v626, 128
      %754 = vxpose.xlu0.b32.cont [2/16] %v629, 128
      %755 = vxpose.xlu0.b32.cont [3/16] %v632, 128
      %756 = vxpose.xlu0.b32.cont [4/16] %v635, 128
      %757 = vxpose.xlu0.b32.cont [5/16] 0.0, 128
      %758 = vxpose.xlu0.b32.cont [6/16] 0.0, 128
      %759 = vxpose.xlu0.b32.cont [7/16] 0.0, 128
      %760 = vxpose.xlu0.b32.cont [8/16] 0.0, 128
      %761 = vxpose.xlu0.b32.cont [9/16] 0.0, 128
      %762 = vxpose.xlu0.b32.cont [10/16] 0.0, 128
      %763 = vxpose.xlu0.b32.cont [11/16] 0.0, 128
      %764 = vxpose.xlu0.b32.cont [12/16] 0.0, 128
      %765 = vxpose.xlu0.b32.cont [13/16] 0.0, 128
      %766 = vxpose.xlu0.b32.cont [14/16] 0.0, 128
      %767 = vxpose.xlu0.b32.cont [15/16] 0.0, 128
      %768 = vxpose.xlu0.b32.end [16/16] 0.0, 128
      %v769 = vpop.trf.xlu0
      %v770 = vpop.trf.xlu0
      %v771 = vpop.trf.xlu0
      %v772 = vpop.trf.xlu0
      %v773 = vpop.trf.xlu0
      %v774 = vpop.trf.xlu0
      %v775 = vpop.trf.xlu0
      %v776 = vpop.trf.xlu0
      %v777 = vpop.trf.xlu0
      %v778 = vpop.trf.xlu0
      %v779 = vpop.trf.xlu0
      %v780 = vpop.trf.xlu0
      %v781 = vpop.trf.xlu0
      %v782 = vpop.trf.xlu0
      %v783 = vpop.trf.xlu0
      %v784 = vpop.trf.xlu0
      %v786 = vsel %vm254, %v737, 0
      %v789 = vsel %vm254, %v738, 0
      %v792 = vsel %vm254, %v739, 0
      %v795 = vsel %vm254, %v740, 0
      %v798 = vsel %vm254, %v741, 0
      %v801 = vsel %vm254, %v742, 0
      %v804 = vsel %vm254, %v743, 0
      %v807 = vsel %vm254, %v744, 0
      %v810 = vsel %vm254, %v745, 0
      %v813 = vsel %vm254, %v746, 0
      %v816 = vsel %vm254, %v747, 0
      %v819 = vsel %vm254, %v748, 0
      %v822 = vsel %vm254, %v749, 0
      %v825 = vsel %vm254, %v750, 0
      %v828 = vsel %vm254, %v751, 0
      %v831 = vsel %vm254, %v752, 0
      %v834 = vsel %vm254, %v769, 0
      %v837 = vsel %vm254, %v770, 0
      %v840 = vsel %vm254, %v771, 0
      %v843 = vsel %vm254, %v772, 0
      %v846 = vsel %vm254, %v773, 0
      %v849 = vsel %vm254, %v774, 0
      %v852 = vsel %vm254, %v775, 0
      %v855 = vsel %vm254, %v776, 0
      %v858 = vsel %vm254, %v777, 0
      %v861 = vsel %vm254, %v778, 0
      %v864 = vsel %vm254, %v779, 0
      %v867 = vsel %vm254, %v780, 0
      %v870 = vsel %vm254, %v781, 0
      %v873 = vsel %vm254, %v782, 0
      %v876 = vsel %vm254, %v783, 0
      %v879 = vsel %vm254, %v784, 0
      %881 = vmatpush.msra.mxu0 0.0
      %882 = vmatpush.msra.mxu0 0.0
      %883 = vmatpush.msra.mxu0 0.0
      %884 = vmatpush.msra.mxu0 0.0
      %885 = vmatpush.msra.mxu0 0.0
      %886 = vmatpush.msra.mxu0 0.0
      %887 = vmatpush.msra.mxu0 0.0
      %888 = vmatpush.msra.mxu0 0.0
      %889 = vmatpush.msra.mxu0 0.0
      %890 = vmatpush.msra.mxu0 0.0
      %891 = vmatpush.msra.mxu0 0.0
      %892 = vmatpush.msra.mxu0 0.0
      %893 = vmatpush.msra.mxu0 %v426
      %894 = vmatpush.msra.mxu0 %v423
      %895 = vmatpush.msra.mxu0 %v420
      %896 = vmatpush.msra.mxu0 %v417
      %897 = vmatmul.f32.gmra.mxu0 %v786
      %v898 = vpop.f32.mrf.mxu0
      %v899 = vadd.f32 0.0, %v898
      %900 = vmatmul.f32.gmra.mxu0 %v789
      %v901 = vpop.f32.mrf.mxu0
      %v902 = vadd.f32 0.0, %v901
      %903 = vmatmul.f32.gmra.mxu0 %v792
      %v904 = vpop.f32.mrf.mxu0
      %v905 = vadd.f32 0.0, %v904
      %906 = vmatmul.f32.gmra.mxu0 %v795
      %v907 = vpop.f32.mrf.mxu0
      %v908 = vadd.f32 0.0, %v907
      %909 = vmatmul.f32.gmra.mxu0 %v798
      %v910 = vpop.f32.mrf.mxu0
      %v911 = vadd.f32 0.0, %v910
      %912 = vmatmul.f32.gmra.mxu0 %v801
      %v913 = vpop.f32.mrf.mxu0
      %v914 = vadd.f32 0.0, %v913
      %915 = vmatmul.f32.gmra.mxu0 %v804
      %v916 = vpop.f32.mrf.mxu0
      %v917 = vadd.f32 0.0, %v916
      %918 = vmatmul.f32.gmra.mxu0 %v807
      %v919 = vpop.f32.mrf.mxu0
      %v920 = vadd.f32 0.0, %v919
      %921 = vmatmul.f32.gmra.mxu0 %v810
      %v922 = vpop.f32.mrf.mxu0
      %v923 = vadd.f32 0.0, %v922
      %924 = vmatmul.f32.gmra.mxu0 %v813
      %v925 = vpop.f32.mrf.mxu0
      %v926 = vadd.f32 0.0, %v925
      %927 = vmatmul.f32.gmra.mxu0 %v816
      %v928 = vpop.f32.mrf.mxu0
      %v929 = vadd.f32 0.0, %v928
      %930 = vmatmul.f32.gmra.mxu0 %v819
      %v931 = vpop.f32.mrf.mxu0
      %v932 = vadd.f32 0.0, %v931
      %933 = vmatmul.f32.gmra.mxu0 %v822
      %v934 = vpop.f32.mrf.mxu0
      %v935 = vadd.f32 0.0, %v934
      %936 = vmatmul.f32.gmra.mxu0 %v825
      %v937 = vpop.f32.mrf.mxu0
      %v938 = vadd.f32 0.0, %v937
      %939 = vmatmul.f32.gmra.mxu0 %v828
      %v940 = vpop.f32.mrf.mxu0
      %v941 = vadd.f32 0.0, %v940
      %942 = vmatmul.f32.gmra.mxu0 %v831
      %v943 = vpop.f32.mrf.mxu0
      %v944 = vadd.f32 0.0, %v943
      %945 = vmatmul.f32.gmra.mxu0 %v834
      %v946 = vpop.f32.mrf.mxu0
      %v947 = vadd.f32 0.0, %v946
      %948 = vmatmul.f32.gmra.mxu0 %v837
      %v949 = vpop.f32.mrf.mxu0
      %v950 = vadd.f32 0.0, %v949
      %951 = vmatmul.f32.gmra.mxu0 %v840
      %v952 = vpop.f32.mrf.mxu0
      %v953 = vadd.f32 0.0, %v952
      %954 = vmatmul.f32.gmra.mxu0 %v843
      %v955 = vpop.f32.mrf.mxu0
      %v956 = vadd.f32 0.0, %v955
      %957 = vmatmul.f32.gmra.mxu0 %v846
      %v958 = vpop.f32.mrf.mxu0
      %v959 = vadd.f32 0.0, %v958
      %960 = vmatmul.f32.gmra.mxu0 %v849
      %v961 = vpop.f32.mrf.mxu0
      %v962 = vadd.f32 0.0, %v961
      %963 = vmatmul.f32.gmra.mxu0 %v852
      %v964 = vpop.f32.mrf.mxu0
      %v965 = vadd.f32 0.0, %v964
      %966 = vmatmul.f32.gmra.mxu0 %v855
      %v967 = vpop.f32.mrf.mxu0
      %v968 = vadd.f32 0.0, %v967
      %969 = vmatmul.f32.gmra.mxu0 %v858
      %v970 = vpop.f32.mrf.mxu0
      %v971 = vadd.f32 0.0, %v970
      %972 = vmatmul.f32.gmra.mxu0 %v861
      %v973 = vpop.f32.mrf.mxu0
      %v974 = vadd.f32 0.0, %v973
      %975 = vmatmul.f32.gmra.mxu0 %v864
      %v976 = vpop.f32.mrf.mxu0
      %v977 = vadd.f32 0.0, %v976
      %978 = vmatmul.f32.gmra.mxu0 %v867
      %v979 = vpop.f32.mrf.mxu0
      %v980 = vadd.f32 0.0, %v979
      %981 = vmatmul.f32.gmra.mxu0 %v870
      %v982 = vpop.f32.mrf.mxu0
      %v983 = vadd.f32 0.0, %v982
      %984 = vmatmul.f32.gmra.mxu0 %v873
      %v985 = vpop.f32.mrf.mxu0
      %v986 = vadd.f32 0.0, %v985
      %987 = vmatmul.f32.gmra.mxu0 %v876
      %v988 = vpop.f32.mrf.mxu0
      %v989 = vadd.f32 0.0, %v988
      %990 = vmatmul.f32.gmra.mxu0 %v879
      %v991 = vpop.f32.mrf.mxu0
      %v992 = vadd.f32 0.0, %v991
      %993 = vdwg.mxu0
      %994 = vmatpush.msra.mxu0 0.0
      %995 = vmatpush.msra.mxu0 0.0
      %996 = vmatpush.msra.mxu0 0.0
      %997 = vmatpush.msra.mxu0 0.0
      %998 = vmatpush.msra.mxu0 0.0
      %999 = vmatpush.msra.mxu0 0.0
      %1000 = vmatpush.msra.mxu0 0.0
      %1001 = vmatpush.msra.mxu0 0.0
      %1002 = vmatpush.msra.mxu0 0.0
      %1003 = vmatpush.msra.mxu0 0.0
      %1004 = vmatpush.msra.mxu0 0.0
      %1005 = vmatpush.msra.mxu0 0.0
      %1006 = vmatpush.msra.mxu0 %v587
      %1007 = vmatpush.msra.mxu0 %v584
      %1008 = vmatpush.msra.mxu0 %v581
      %1009 = vmatpush.msra.mxu0 %v578
      %1010 = vmatmul.f32.gmra.mxu0 %v786
      %v1011 = vpop.f32.mrf.mxu0
      %v1012 = vadd.f32 0.0, %v1011
      %1013 = vmatmul.f32.gmra.mxu0 %v789
      %v1014 = vpop.f32.mrf.mxu0
      %v1015 = vadd.f32 0.0, %v1014
      %1016 = vmatmul.f32.gmra.mxu0 %v792
      %v1017 = vpop.f32.mrf.mxu0
      %v1018 = vadd.f32 0.0, %v1017
      %1019 = vmatmul.f32.gmra.mxu0 %v795
      %v1020 = vpop.f32.mrf.mxu0
      %v1021 = vadd.f32 0.0, %v1020
      %1022 = vmatmul.f32.gmra.mxu0 %v798
      %v1023 = vpop.f32.mrf.mxu0
      %v1024 = vadd.f32 0.0, %v1023
      %1025 = vmatmul.f32.gmra.mxu0 %v801
      %v1026 = vpop.f32.mrf.mxu0
      %v1027 = vadd.f32 0.0, %v1026
      %1028 = vmatmul.f32.gmra.mxu0 %v804
      %v1029 = vpop.f32.mrf.mxu0
      %v1030 = vadd.f32 0.0, %v1029
      %1031 = vmatmul.f32.gmra.mxu0 %v807
      %v1032 = vpop.f32.mrf.mxu0
      %v1033 = vadd.f32 0.0, %v1032
      %1034 = vmatmul.f32.gmra.mxu0 %v810
      %v1035 = vpop.f32.mrf.mxu0
      %v1036 = vadd.f32 0.0, %v1035
      %1037 = vmatmul.f32.gmra.mxu0 %v813
      %v1038 = vpop.f32.mrf.mxu0
      %v1039 = vadd.f32 0.0, %v1038
      %1040 = vmatmul.f32.gmra.mxu0 %v816
      %v1041 = vpop.f32.mrf.mxu0
      %v1042 = vadd.f32 0.0, %v1041
      %1043 = vmatmul.f32.gmra.mxu0 %v819
      %v1044 = vpop.f32.mrf.mxu0
      %v1045 = vadd.f32 0.0, %v1044
      %1046 = vmatmul.f32.gmra.mxu0 %v822
      %v1047 = vpop.f32.mrf.mxu0
      %v1048 = vadd.f32 0.0, %v1047
      %1049 = vmatmul.f32.gmra.mxu0 %v825
      %v1050 = vpop.f32.mrf.mxu0
      %v1051 = vadd.f32 0.0, %v1050
      %1052 = vmatmul.f32.gmra.mxu0 %v828
      %v1053 = vpop.f32.mrf.mxu0
      %v1054 = vadd.f32 0.0, %v1053
      %1055 = vmatmul.f32.gmra.mxu0 %v831
      %v1056 = vpop.f32.mrf.mxu0
      %v1057 = vadd.f32 0.0, %v1056
      %1058 = vmatmul.f32.gmra.mxu0 %v834
      %v1059 = vpop.f32.mrf.mxu0
      %v1060 = vadd.f32 0.0, %v1059
      %1061 = vmatmul.f32.gmra.mxu0 %v837
      %v1062 = vpop.f32.mrf.mxu0
      %v1063 = vadd.f32 0.0, %v1062
      %1064 = vmatmul.f32.gmra.mxu0 %v840
      %v1065 = vpop.f32.mrf.mxu0
      %v1066 = vadd.f32 0.0, %v1065
      %1067 = vmatmul.f32.gmra.mxu0 %v843
      %v1068 = vpop.f32.mrf.mxu0
      %v1069 = vadd.f32 0.0, %v1068
      %1070 = vmatmul.f32.gmra.mxu0 %v846
      %v1071 = vpop.f32.mrf.mxu0
      %v1072 = vadd.f32 0.0, %v1071
      %1073 = vmatmul.f32.gmra.mxu0 %v849
      %v1074 = vpop.f32.mrf.mxu0
      %v1075 = vadd.f32 0.0, %v1074
      %1076 = vmatmul.f32.gmra.mxu0 %v852
      %v1077 = vpop.f32.mrf.mxu0
      %v1078 = vadd.f32 0.0, %v1077
      %1079 = vmatmul.f32.gmra.mxu0 %v855
      %v1080 = vpop.f32.mrf.mxu0
      %v1081 = vadd.f32 0.0, %v1080
      %1082 = vmatmul.f32.gmra.mxu0 %v858
      %v1083 = vpop.f32.mrf.mxu0
      %v1084 = vadd.f32 0.0, %v1083
      %1085 = vmatmul.f32.gmra.mxu0 %v861
      %v1086 = vpop.f32.mrf.mxu0
      %v1087 = vadd.f32 0.0, %v1086
      %1088 = vmatmul.f32.gmra.mxu0 %v864
      %v1089 = vpop.f32.mrf.mxu0
      %v1090 = vadd.f32 0.0, %v1089
      %1091 = vmatmul.f32.gmra.mxu0 %v867
      %v1092 = vpop.f32.mrf.mxu0
      %v1093 = vadd.f32 0.0, %v1092
      %1094 = vmatmul.f32.gmra.mxu0 %v870
      %v1095 = vpop.f32.mrf.mxu0
      %v1096 = vadd.f32 0.0, %v1095
      %1097 = vmatmul.f32.gmra.mxu0 %v873
      %v1098 = vpop.f32.mrf.mxu0
      %v1099 = vadd.f32 0.0, %v1098
      %1100 = vmatmul.f32.gmra.mxu0 %v876
      %v1101 = vpop.f32.mrf.mxu0
      %v1102 = vadd.f32 0.0, %v1101
      %1103 = vmatmul.f32.gmra.mxu0 %v879
      %v1104 = vpop.f32.mrf.mxu0
      %v1105 = vadd.f32 0.0, %v1104
      %1106 = vdwg.mxu0
      %v1107 = vmax.f32 %v899, %v905
      %v1108 = vmax.f32 %v902, %v908
      %v1109 = vmax.f32 %v1107, %v911
      %v1110 = vmax.f32 %v1108, %v914
      %v1111 = vmax.f32 %v1109, %v917
      %v1112 = vmax.f32 %v1110, %v920
      %v1113 = vmax.f32 %v1111, %v923
      %v1114 = vmax.f32 %v1112, %v926
      %v1115 = vmax.f32 %v1113, %v929
      %v1116 = vmax.f32 %v1114, %v932
      %v1117 = vmax.f32 %v1115, %v935
      %v1118 = vmax.f32 %v1116, %v938
      %v1119 = vmax.f32 %v1117, %v941
      %v1120 = vmax.f32 %v1118, %v944
      %v1121 = vmax.f32 %v1119, %v947
      %v1122 = vmax.f32 %v1120, %v950
      %v1123 = vmax.f32 %v1121, %v953
      %v1124 = vmax.f32 %v1122, %v956
      %v1125 = vmax.f32 %v1123, %v959
      %v1126 = vmax.f32 %v1124, %v962
      %v1127 = vmax.f32 %v1125, %v965
      %v1128 = vmax.f32 %v1126, %v968
      %v1129 = vmax.f32 %v1127, %v971
      %v1130 = vmax.f32 %v1128, %v974
      %v1131 = vmax.f32 %v1129, %v977
      %v1132 = vmax.f32 %v1130, %v980
      %v1133 = vmax.f32 %v1131, %v983
      %v1134 = vmax.f32 %v1132, %v986
      %v1135 = vmax.f32 %v1133, %v989
      %v1136 = vmax.f32 %v1134, %v992
      %v1137 = vmax.f32 %v1135, %v1136
      %v1138 = vrot.slane %v1137, 4
      %v1139 = vmax.f32 %v1137, %v1138
      %v1140 = vrot.slane %v1139, 2
      %v1141 = vmax.f32 %v1139, %v1140
      %v1142 = vrot.slane %v1141, 1
      %v1143 = vmax.f32 %v1141, %v1142
      %v1144 = vmax.f32 %v1012, %v1018
      %v1145 = vmax.f32 %v1015, %v1021
      %v1146 = vmax.f32 %v1144, %v1024
      %v1147 = vmax.f32 %v1145, %v1027
      %v1148 = vmax.f32 %v1146, %v1030
      %v1149 = vmax.f32 %v1147, %v1033
      %v1150 = vmax.f32 %v1148, %v1036
      %v1151 = vmax.f32 %v1149, %v1039
      %v1152 = vmax.f32 %v1150, %v1042
      %v1153 = vmax.f32 %v1151, %v1045
      %v1154 = vmax.f32 %v1152, %v1048
      %v1155 = vmax.f32 %v1153, %v1051
      %v1156 = vmax.f32 %v1154, %v1054
      %v1157 = vmax.f32 %v1155, %v1057
      %v1158 = vmax.f32 %v1156, %v1060
      %v1159 = vmax.f32 %v1157, %v1063
      %v1160 = vmax.f32 %v1158, %v1066
      %v1161 = vmax.f32 %v1159, %v1069
      %v1162 = vmax.f32 %v1160, %v1072
      %v1163 = vmax.f32 %v1161, %v1075
      %v1164 = vmax.f32 %v1162, %v1078
      %v1165 = vmax.f32 %v1163, %v1081
      %v1166 = vmax.f32 %v1164, %v1084
      %v1167 = vmax.f32 %v1165, %v1087
      %v1168 = vmax.f32 %v1166, %v1090
      %v1169 = vmax.f32 %v1167, %v1093
      %v1170 = vmax.f32 %v1168, %v1096
      %v1171 = vmax.f32 %v1169, %v1099
      %v1172 = vmax.f32 %v1170, %v1102
      %v1173 = vmax.f32 %v1171, %v1105
      %v1174 = vmax.f32 %v1172, %v1173
      %v1175 = vrot.slane %v1174, 4
      %v1176 = vmax.f32 %v1174, %v1175
      %v1177 = vrot.slane %v1176, 2
      %v1178 = vmax.f32 %v1176, %v1177
      %v1179 = vrot.slane %v1178, 1
      %v1180 = vmax.f32 %v1178, %v1179
      %v1181 = vsub.f32 %v899, %v1143
      %v1182 = vsub.f32 %v1012, %v1180
      %v1183 = vsub.f32 %v902, %v1143
      %v1184 = vsub.f32 %v1015, %v1180
      %v1185 = vsub.f32 %v905, %v1143
      %v1186 = vsub.f32 %v1018, %v1180
      %v1187 = vsub.f32 %v908, %v1143
      %v1188 = vsub.f32 %v1021, %v1180
      %v1189 = vsub.f32 %v911, %v1143
      %v1190 = vsub.f32 %v1024, %v1180
      %v1191 = vsub.f32 %v914, %v1143
      %v1192 = vsub.f32 %v1027, %v1180
      %v1193 = vsub.f32 %v917, %v1143
      %v1194 = vsub.f32 %v1030, %v1180
      %v1195 = vsub.f32 %v920, %v1143
      %v1196 = vsub.f32 %v1033, %v1180
      %v1197 = vsub.f32 %v923, %v1143
      %v1198 = vsub.f32 %v1036, %v1180
      %v1199 = vsub.f32 %v926, %v1143
      %v1200 = vsub.f32 %v1039, %v1180
      %v1201 = vsub.f32 %v929, %v1143
      %v1202 = vsub.f32 %v1042, %v1180
      %v1203 = vsub.f32 %v932, %v1143
      %v1204 = vsub.f32 %v1045, %v1180
      %v1205 = vsub.f32 %v935, %v1143
      %v1206 = vsub.f32 %v1048, %v1180
      %v1207 = vsub.f32 %v938, %v1143
      %v1208 = vsub.f32 %v1051, %v1180
      %v1209 = vsub.f32 %v941, %v1143
      %v1210 = vsub.f32 %v1054, %v1180
      %v1211 = vsub.f32 %v944, %v1143
      %v1212 = vsub.f32 %v1057, %v1180
      %v1213 = vsub.f32 %v947, %v1143
      %v1214 = vsub.f32 %v1060, %v1180
      %v1215 = vsub.f32 %v950, %v1143
      %v1216 = vsub.f32 %v1063, %v1180
      %v1217 = vsub.f32 %v953, %v1143
      %v1218 = vsub.f32 %v1066, %v1180
      %v1219 = vsub.f32 %v956, %v1143
      %v1220 = vsub.f32 %v1069, %v1180
      %v1221 = vsub.f32 %v959, %v1143
      %v1222 = vsub.f32 %v1072, %v1180
      %v1223 = vsub.f32 %v962, %v1143
      %v1224 = vsub.f32 %v1075, %v1180
      %v1225 = vsub.f32 %v965, %v1143
      %v1226 = vsub.f32 %v1078, %v1180
      %v1227 = vsub.f32 %v968, %v1143
      %v1228 = vsub.f32 %v1081, %v1180
      %v1229 = vsub.f32 %v971, %v1143
      %v1230 = vsub.f32 %v1084, %v1180
      %v1231 = vsub.f32 %v974, %v1143
      %v1232 = vsub.f32 %v1087, %v1180
      %v1233 = vsub.f32 %v977, %v1143
      %v1234 = vsub.f32 %v1090, %v1180
      %v1235 = vsub.f32 %v980, %v1143
      %v1236 = vsub.f32 %v1093, %v1180
      %v1237 = vsub.f32 %v983, %v1143
      %v1238 = vsub.f32 %v1096, %v1180
      %v1239 = vsub.f32 %v986, %v1143
      %v1240 = vsub.f32 %v1099, %v1180
      %v1241 = vsub.f32 %v989, %v1143
      %v1242 = vsub.f32 %v1102, %v1180
      %v1243 = vsub.f32 %v992, %v1143
      %v1244 = vsub.f32 %v1105, %v1180
      %v1245 = vmul.f32 %v1181, 1.442695
      %v1246 = vpow.pop %v1245
      %v1247 = vmul.f32 %v1182, 1.442695
      %v1248 = vpow.pop %v1247
      %v1249 = vmul.f32 %v1183, 1.442695
      %v1250 = vpow.pop %v1249
      %v1251 = vmul.f32 %v1184, 1.442695
      %v1252 = vpow.pop %v1251
      %v1253 = vmul.f32 %v1185, 1.442695
      %v1254 = vpow.pop %v1253
      %v1255 = vmul.f32 %v1186, 1.442695
      %v1256 = vpow.pop %v1255
      %v1257 = vmul.f32 %v1187, 1.442695
      %v1258 = vpow.pop %v1257
      %v1259 = vmul.f32 %v1188, 1.442695
      %v1260 = vpow.pop %v1259
      %v1261 = vmul.f32 %v1189, 1.442695
      %v1262 = vpow.pop %v1261
      %v1263 = vmul.f32 %v1190, 1.442695
      %v1264 = vpow.pop %v1263
      %v1265 = vmul.f32 %v1191, 1.442695
      %v1266 = vpow.pop %v1265
      %v1267 = vmul.f32 %v1192, 1.442695
      %v1268 = vpow.pop %v1267
      %v1269 = vmul.f32 %v1193, 1.442695
      %v1270 = vpow.pop %v1269
      %v1271 = vmul.f32 %v1194, 1.442695
      %v1272 = vpow.pop %v1271
      %v1273 = vmul.f32 %v1195, 1.442695
      %v1274 = vpow.pop %v1273
      %v1275 = vmul.f32 %v1196, 1.442695
      %v1276 = vpow.pop %v1275
      %v1277 = vmul.f32 %v1197, 1.442695
      %v1278 = vpow.pop %v1277
      %v1279 = vmul.f32 %v1198, 1.442695
      %v1280 = vpow.pop %v1279
      %v1281 = vmul.f32 %v1199, 1.442695
      %v1282 = vpow.pop %v1281
      %v1283 = vmul.f32 %v1200, 1.442695
      %v1284 = vpow.pop %v1283
      %v1285 = vmul.f32 %v1201, 1.442695
      %v1286 = vpow.pop %v1285
      %v1287 = vmul.f32 %v1202, 1.442695
      %v1288 = vpow.pop %v1287
      %v1289 = vmul.f32 %v1203, 1.442695
      %v1290 = vpow.pop %v1289
      %v1291 = vmul.f32 %v1204, 1.442695
      %v1292 = vpow.pop %v1291
      %v1293 = vmul.f32 %v1205, 1.442695
      %v1294 = vpow.pop %v1293
      %v1295 = vmul.f32 %v1206, 1.442695
      %v1296 = vpow.pop %v1295
      %v1297 = vmul.f32 %v1207, 1.442695
      %v1298 = vpow.pop %v1297
      %v1299 = vmul.f32 %v1208, 1.442695
      %v1300 = vpow.pop %v1299
      %v1301 = vmul.f32 %v1209, 1.442695
      %v1302 = vpow.pop %v1301
      %v1303 = vmul.f32 %v1210, 1.442695
      %v1304 = vpow.pop %v1303
      %v1305 = vmul.f32 %v1211, 1.442695
      %v1306 = vpow.pop %v1305
      %v1307 = vmul.f32 %v1212, 1.442695
      %v1308 = vpow.pop %v1307
      %v1309 = vmul.f32 %v1213, 1.442695
      %v1310 = vpow.pop %v1309
      %v1311 = vmul.f32 %v1214, 1.442695
      %v1312 = vpow.pop %v1311
      %v1313 = vmul.f32 %v1215, 1.442695
      %v1314 = vpow.pop %v1313
      %v1315 = vmul.f32 %v1216, 1.442695
      %v1316 = vpow.pop %v1315
      %v1317 = vmul.f32 %v1217, 1.442695
      %v1318 = vpow.pop %v1317
      %v1319 = vmul.f32 %v1218, 1.442695
      %v1320 = vpow.pop %v1319
      %v1321 = vmul.f32 %v1219, 1.442695
      %v1322 = vpow.pop %v1321
      %v1323 = vmul.f32 %v1220, 1.442695
      %v1324 = vpow.pop %v1323
      %v1325 = vmul.f32 %v1221, 1.442695
      %v1326 = vpow.pop %v1325
      %v1327 = vmul.f32 %v1222, 1.442695
      %v1328 = vpow.pop %v1327
      %v1329 = vmul.f32 %v1223, 1.442695
      %v1330 = vpow.pop %v1329
      %v1331 = vmul.f32 %v1224, 1.442695
      %v1332 = vpow.pop %v1331
      %v1333 = vmul.f32 %v1225, 1.442695
      %v1334 = vpow.pop %v1333
      %v1335 = vmul.f32 %v1226, 1.442695
      %v1336 = vpow.pop %v1335
      %v1337 = vmul.f32 %v1227, 1.442695
      %v1338 = vpow.pop %v1337
      %v1339 = vmul.f32 %v1228, 1.442695
      %v1340 = vpow.pop %v1339
      %v1341 = vmul.f32 %v1229, 1.442695
      %v1342 = vpow.pop %v1341
      %v1343 = vmul.f32 %v1230, 1.442695
      %v1344 = vpow.pop %v1343
      %v1345 = vmul.f32 %v1231, 1.442695
      %v1346 = vpow.pop %v1345
      %v1347 = vmul.f32 %v1232, 1.442695
      %v1348 = vpow.pop %v1347
      %v1349 = vmul.f32 %v1233, 1.442695
      %v1350 = vpow.pop %v1349
      %v1351 = vmul.f32 %v1234, 1.442695
      %v1352 = vpow.pop %v1351
      %v1353 = vmul.f32 %v1235, 1.442695
      %v1354 = vpow.pop %v1353
      %v1355 = vmul.f32 %v1236, 1.442695
      %v1356 = vpow.pop %v1355
      %v1357 = vmul.f32 %v1237, 1.442695
      %v1358 = vpow.pop %v1357
      %v1359 = vmul.f32 %v1238, 1.442695
      %v1360 = vpow.pop %v1359
      %v1361 = vmul.f32 %v1239, 1.442695
      %v1362 = vpow.pop %v1361
      %v1363 = vmul.f32 %v1240, 1.442695
      %v1364 = vpow.pop %v1363
      %v1365 = vmul.f32 %v1241, 1.442695
      %v1366 = vpow.pop %v1365
      %v1367 = vmul.f32 %v1242, 1.442695
      %v1368 = vpow.pop %v1367
      %v1369 = vmul.f32 %v1243, 1.442695
      %v1370 = vpow.pop %v1369
      %v1371 = vmul.f32 %v1244, 1.442695
      %v1372 = vpow.pop %v1371
      %v1373 = vadd.f32 %v1246, %v1250
      %v1374 = vadd.f32 %v1373, %v1254
      %v1375 = vadd.f32 %v1374, %v1258
      %v1376 = vadd.f32 %v1375, %v1262
      %v1377 = vadd.f32 %v1376, %v1266
      %v1378 = vadd.f32 %v1377, %v1270
      %v1379 = vadd.f32 %v1378, %v1274
      %v1380 = vadd.f32 %v1379, %v1278
      %v1381 = vadd.f32 %v1380, %v1282
      %v1382 = vadd.f32 %v1381, %v1286
      %v1383 = vadd.f32 %v1382, %v1290
      %v1384 = vadd.f32 %v1383, %v1294
      %v1385 = vadd.f32 %v1384, %v1298
      %v1386 = vadd.f32 %v1385, %v1302
      %v1387 = vadd.f32 %v1386, %v1306
      %v1388 = vadd.f32 %v1387, %v1310
      %v1389 = vadd.f32 %v1388, %v1314
      %v1390 = vadd.f32 %v1389, %v1318
      %v1391 = vadd.f32 %v1390, %v1322
      %v1392 = vadd.f32 %v1391, %v1326
      %v1393 = vadd.f32 %v1392, %v1330
      %v1394 = vadd.f32 %v1393, %v1334
      %v1395 = vadd.f32 %v1394, %v1338
      %v1396 = vadd.f32 %v1395, %v1342
      %v1397 = vadd.f32 %v1396, %v1346
      %v1398 = vadd.f32 %v1397, %v1350
      %v1399 = vadd.f32 %v1398, %v1354
      %v1400 = vadd.f32 %v1399, %v1358
      %v1401 = vadd.f32 %v1400, %v1362
      %v1402 = vadd.f32 %v1401, %v1366
      %v1403 = vadd.f32 %v1402, %v1370
      %v1404 = vrot.slane %v1403, 4
      %v1405 = vadd.f32 %v1403, %v1404
      %v1406 = vrot.slane %v1405, 2
      %v1407 = vadd.f32 %v1405, %v1406
      %v1408 = vrot.slane %v1407, 1
      %v1409 = vadd.f32 %v1407, %v1408
      %v1410 = vadd.f32 %v1248, %v1252
      %v1411 = vadd.f32 %v1410, %v1256
      %v1412 = vadd.f32 %v1411, %v1260
      %v1413 = vadd.f32 %v1412, %v1264
      %v1414 = vadd.f32 %v1413, %v1268
      %v1415 = vadd.f32 %v1414, %v1272
      %v1416 = vadd.f32 %v1415, %v1276
      %v1417 = vadd.f32 %v1416, %v1280
      %v1418 = vadd.f32 %v1417, %v1284
      %v1419 = vadd.f32 %v1418, %v1288
      %v1420 = vadd.f32 %v1419, %v1292
      %v1421 = vadd.f32 %v1420, %v1296
      %v1422 = vadd.f32 %v1421, %v1300
      %v1423 = vadd.f32 %v1422, %v1304
      %v1424 = vadd.f32 %v1423, %v1308
      %v1425 = vadd.f32 %v1424, %v1312
      %v1426 = vadd.f32 %v1425, %v1316
      %v1427 = vadd.f32 %v1426, %v1320
      %v1428 = vadd.f32 %v1427, %v1324
      %v1429 = vadd.f32 %v1428, %v1328
      %v1430 = vadd.f32 %v1429, %v1332
      %v1431 = vadd.f32 %v1430, %v1336
      %v1432 = vadd.f32 %v1431, %v1340
      %v1433 = vadd.f32 %v1432, %v1344
      %v1434 = vadd.f32 %v1433, %v1348
      %v1435 = vadd.f32 %v1434, %v1352
      %v1436 = vadd.f32 %v1435, %v1356
      %v1437 = vadd.f32 %v1436, %v1360
      %v1438 = vadd.f32 %v1437, %v1364
      %v1439 = vadd.f32 %v1438, %v1368
      %v1440 = vadd.f32 %v1439, %v1372
      %v1441 = vrot.slane %v1440, 4
      %v1442 = vadd.f32 %v1440, %v1441
      %v1443 = vrot.slane %v1442, 2
      %v1444 = vadd.f32 %v1442, %v1443
      %v1445 = vrot.slane %v1444, 1
      %v1446 = vadd.f32 %v1444, %v1445
      %1447 = vmatpush.msra.mxu0 %v1306
      %1448 = vmatpush.msra.mxu0 %v1302
      %1449 = vmatpush.msra.mxu0 %v1298
      %1450 = vmatpush.msra.mxu0 %v1294
      %1451 = vmatpush.msra.mxu0 %v1290
      %1452 = vmatpush.msra.mxu0 %v1286
      %1453 = vmatpush.msra.mxu0 %v1282
      %1454 = vmatpush.msra.mxu0 %v1278
      %1455 = vmatpush.msra.mxu0 %v1274
      %1456 = vmatpush.msra.mxu0 %v1270
      %1457 = vmatpush.msra.mxu0 %v1266
      %1458 = vmatpush.msra.mxu0 %v1262
      %1459 = vmatpush.msra.mxu0 %v1258
      %1460 = vmatpush.msra.mxu0 %v1254
      %1461 = vmatpush.msra.mxu0 %v1250
      %1462 = vmatpush.msra.mxu0 %v1246
      %1463 = vmatmul.f32.gmra.mxu0 %v513
      %v1464 = vpop.f32.mrf.mxu0
      %v1465 = vadd.f32 0.0, %v1464
      %1466 = vmatmul.f32.gmra.mxu0 %v516
      %v1467 = vpop.f32.mrf.mxu0
      %v1468 = vadd.f32 0.0, %v1467
      %1469 = vmatmul.f32.gmra.mxu0 %v519
      %v1470 = vpop.f32.mrf.mxu0
      %v1471 = vadd.f32 0.0, %v1470
      %1472 = vmatmul.f32.gmra.mxu0 %v522
      %v1473 = vpop.f32.mrf.mxu0
      %v1474 = vadd.f32 0.0, %v1473
      %1475 = vdwg.mxu0
      %1476 = vmatpush.msra.mxu0 %v1370
      %1477 = vmatpush.msra.mxu0 %v1366
      %1478 = vmatpush.msra.mxu0 %v1362
      %1479 = vmatpush.msra.mxu0 %v1358
      %1480 = vmatpush.msra.mxu0 %v1354
      %1481 = vmatpush.msra.mxu0 %v1350
      %1482 = vmatpush.msra.mxu0 %v1346
      %1483 = vmatpush.msra.mxu0 %v1342
      %1484 = vmatpush.msra.mxu0 %v1338
      %1485 = vmatpush.msra.mxu0 %v1334
      %1486 = vmatpush.msra.mxu0 %v1330
      %1487 = vmatpush.msra.mxu0 %v1326
      %1488 = vmatpush.msra.mxu0 %v1322
      %1489 = vmatpush.msra.mxu0 %v1318
      %1490 = vmatpush.msra.mxu0 %v1314
      %1491 = vmatpush.msra.mxu0 %v1310
      %1492 = vmatmul.f32.gmra.mxu0 %v674
      %v1493 = vpop.f32.mrf.mxu0
      %v1494 = vadd.f32 %v1465, %v1493
      %1495 = vmatmul.f32.gmra.mxu0 %v677
      %v1496 = vpop.f32.mrf.mxu0
      %v1497 = vadd.f32 %v1468, %v1496
      %1498 = vmatmul.f32.gmra.mxu0 %v680
      %v1499 = vpop.f32.mrf.mxu0
      %v1500 = vadd.f32 %v1471, %v1499
      %1501 = vmatmul.f32.gmra.mxu0 %v683
      %v1502 = vpop.f32.mrf.mxu0
      %v1503 = vadd.f32 %v1474, %v1502
      %1504 = vdwg.mxu0
      %1505 = vmatpush.msra.mxu0 %v1308
      %1506 = vmatpush.msra.mxu0 %v1304
      %1507 = vmatpush.msra.mxu0 %v1300
      %1508 = vmatpush.msra.mxu0 %v1296
      %1509 = vmatpush.msra.mxu0 %v1292
      %1510 = vmatpush.msra.mxu0 %v1288
      %1511 = vmatpush.msra.mxu0 %v1284
      %1512 = vmatpush.msra.mxu0 %v1280
      %1513 = vmatpush.msra.mxu0 %v1276
      %1514 = vmatpush.msra.mxu0 %v1272
      %1515 = vmatpush.msra.mxu0 %v1268
      %1516 = vmatpush.msra.mxu0 %v1264
      %1517 = vmatpush.msra.mxu0 %v1260
      %1518 = vmatpush.msra.mxu0 %v1256
      %1519 = vmatpush.msra.mxu0 %v1252
      %1520 = vmatpush.msra.mxu0 %v1248
      %1521 = vmatmul.f32.gmra.mxu0 %v513
      %v1522 = vpop.f32.mrf.mxu0
      %v1523 = vadd.f32 0.0, %v1522
      %1524 = vmatmul.f32.gmra.mxu0 %v516
      %v1525 = vpop.f32.mrf.mxu0
      %v1526 = vadd.f32 0.0, %v1525
      %1527 = vmatmul.f32.gmra.mxu0 %v519
      %v1528 = vpop.f32.mrf.mxu0
      %v1529 = vadd.f32 0.0, %v1528
      %1530 = vmatmul.f32.gmra.mxu0 %v522
      %v1531 = vpop.f32.mrf.mxu0
      %v1532 = vadd.f32 0.0, %v1531
      %1533 = vdwg.mxu0
      %1534 = vmatpush.msra.mxu0 %v1372
      %1535 = vmatpush.msra.mxu0 %v1368
      %1536 = vmatpush.msra.mxu0 %v1364
      %1537 = vmatpush.msra.mxu0 %v1360
      %1538 = vmatpush.msra.mxu0 %v1356
      %1539 = vmatpush.msra.mxu0 %v1352
      %1540 = vmatpush.msra.mxu0 %v1348
      %1541 = vmatpush.msra.mxu0 %v1344
      %1542 = vmatpush.msra.mxu0 %v1340
      %1543 = vmatpush.msra.mxu0 %v1336
      %1544 = vmatpush.msra.mxu0 %v1332
      %1545 = vmatpush.msra.mxu0 %v1328
      %1546 = vmatpush.msra.mxu0 %v1324
      %1547 = vmatpush.msra.mxu0 %v1320
      %1548 = vmatpush.msra.mxu0 %v1316
      %1549 = vmatpush.msra.mxu0 %v1312
      %1550 = vmatmul.f32.gmra.mxu0 %v674
      %v1551 = vpop.f32.mrf.mxu0
      %v1552 = vadd.f32 %v1523, %v1551
      %1553 = vmatmul.f32.gmra.mxu0 %v677
      %v1554 = vpop.f32.mrf.mxu0
      %v1555 = vadd.f32 %v1526, %v1554
      %1556 = vmatmul.f32.gmra.mxu0 %v680
      %v1557 = vpop.f32.mrf.mxu0
      %v1558 = vadd.f32 %v1529, %v1557
      %1559 = vmatmul.f32.gmra.mxu0 %v683
      %v1560 = vpop.f32.mrf.mxu0
      %v1561 = vadd.f32 %v1532, %v1560
      %1562 = vdwg.mxu0
      %v1563 = vrcp.pop %v1409
      %v1564 = vrcp.pop %v1446
      %v1565 = vmul.f32 %v1494, %v1563
      %v1566 = vmul.f32 %v1552, %v1564
      %v1567 = vmul.f32 %v1497, %v1563
      %v1568 = vmul.f32 %v1555, %v1564
      %v1569 = vmul.f32 %v1500, %v1563
      %v1570 = vmul.f32 %v1558, %v1564
      %v1571 = vmul.f32 %v1503, %v1563
      %v1572 = vmul.f32 %v1561, %v1564
      %v1573 = vld [vmem:[%s2] sm:$0xff]
      %v1574 = vld [vmem:[%s2 + $0x8] sm:$0xff]
      %v1575 = vld [vmem:[%s2 + $0x10] sm:$0xff]
      %v1576 = vld [vmem:[%s2 + $0x18] sm:$0xff]
      %1577 = vxpose.xlu0.b32.start [1/16] %v477, 128
      %1578 = vxpose.xlu0.b32.cont [2/16] %v480, 128
      %1579 = vxpose.xlu0.b32.cont [3/16] %v483, 128
      %1580 = vxpose.xlu0.b32.cont [4/16] %v486, 128
      %1581 = vxpose.xlu0.b32.cont [5/16] 0.0, 128
      %1582 = vxpose.xlu0.b32.cont [6/16] 0.0, 128
      %1583 = vxpose.xlu0.b32.cont [7/16] 0.0, 128
      %1584 = vxpose.xlu0.b32.cont [8/16] 0.0, 128
      %1585 = vxpose.xlu0.b32.cont [9/16] 0.0, 128
      %1586 = vxpose.xlu0.b32.cont [10/16] 0.0, 128
      %1587 = vxpose.xlu0.b32.cont [11/16] 0.0, 128
      %1588 = vxpose.xlu0.b32.cont [12/16] 0.0, 128
      %1589 = vxpose.xlu0.b32.cont [13/16] 0.0, 128
      %1590 = vxpose.xlu0.b32.cont [14/16] 0.0, 128
      %1591 = vxpose.xlu0.b32.cont [15/16] 0.0, 128
      %1592 = vxpose.xlu0.b32.end [16/16] 0.0, 128
      %v1593 = vpop.trf.xlu0
      %v1594 = vpop.trf.xlu0
      %v1595 = vpop.trf.xlu0
      %v1596 = vpop.trf.xlu0
      %v1597 = vpop.trf.xlu0
      %v1598 = vpop.trf.xlu0
      %v1599 = vpop.trf.xlu0
      %v1600 = vpop.trf.xlu0
      %v1601 = vpop.trf.xlu0
      %v1602 = vpop.trf.xlu0
      %v1603 = vpop.trf.xlu0
      %v1604 = vpop.trf.xlu0
      %v1605 = vpop.trf.xlu0
      %v1606 = vpop.trf.xlu0
      %v1607 = vpop.trf.xlu0
      %v1608 = vpop.trf.xlu0
      %1609 = vxpose.xlu0.b32.start [1/16] %v638, 128
      %1610 = vxpose.xlu0.b32.cont [2/16] %v641, 128
      %1611 = vxpose.xlu0.b32.cont [3/16] %v644, 128
      %1612 = vxpose.xlu0.b32.cont [4/16] %v647, 128
      %1613 = vxpose.xlu0.b32.cont [5/16] 0.0, 128
      %1614 = vxpose.xlu0.b32.cont [6/16] 0.0, 128
      %1615 = vxpose.xlu0.b32.cont [7/16] 0.0, 128
      %1616 = vxpose.xlu0.b32.cont [8/16] 0.0, 128
      %1617 = vxpose.xlu0.b32.cont [9/16] 0.0, 128
      %1618 = vxpose.xlu0.b32.cont [10/16] 0.0, 128
      %1619 = vxpose.xlu0.b32.cont [11/16] 0.0, 128
      %1620 = vxpose.xlu0.b32.cont [12/16] 0.0, 128
      %1621 = vxpose.xlu0.b32.cont [13/16] 0.0, 128
      %1622 = vxpose.xlu0.b32.cont [14/16] 0.0, 128
      %1623 = vxpose.xlu0.b32.cont [15/16] 0.0, 128
      %1624 = vxpose.xlu0.b32.end [16/16] 0.0, 128
      %v1625 = vpop.trf.xlu0
      %v1626 = vpop.trf.xlu0
      %v1627 = vpop.trf.xlu0
      %v1628 = vpop.trf.xlu0
      %v1629 = vpop.trf.xlu0
      %v1630 = vpop.trf.xlu0
      %v1631 = vpop.trf.xlu0
      %v1632 = vpop.trf.xlu0
      %v1633 = vpop.trf.xlu0
      %v1634 = vpop.trf.xlu0
      %v1635 = vpop.trf.xlu0
      %v1636 = vpop.trf.xlu0
      %v1637 = vpop.trf.xlu0
      %v1638 = vpop.trf.xlu0
      %v1639 = vpop.trf.xlu0
      %v1640 = vpop.trf.xlu0
      %v1642 = vsel %vm254, %v1593, 0
      %v1645 = vsel %vm254, %v1594, 0
      %v1648 = vsel %vm254, %v1595, 0
      %v1651 = vsel %vm254, %v1596, 0
      %v1654 = vsel %vm254, %v1597, 0
      %v1657 = vsel %vm254, %v1598, 0
      %v1660 = vsel %vm254, %v1599, 0
      %v1663 = vsel %vm254, %v1600, 0
      %v1666 = vsel %vm254, %v1601, 0
      %v1669 = vsel %vm254, %v1602, 0
      %v1672 = vsel %vm254, %v1603, 0
      %v1675 = vsel %vm254, %v1604, 0
      %v1678 = vsel %vm254, %v1605, 0
      %v1681 = vsel %vm254, %v1606, 0
      %v1684 = vsel %vm254, %v1607, 0
      %v1687 = vsel %vm254, %v1608, 0
      %v1690 = vsel %vm254, %v1625, 0
      %v1693 = vsel %vm254, %v1626, 0
      %v1696 = vsel %vm254, %v1627, 0
      %v1699 = vsel %vm254, %v1628, 0
      %v1702 = vsel %vm254, %v1629, 0
      %v1705 = vsel %vm254, %v1630, 0
      %v1708 = vsel %vm254, %v1631, 0
      %v1711 = vsel %vm254, %v1632, 0
      %v1714 = vsel %vm254, %v1633, 0
      %v1717 = vsel %vm254, %v1634, 0
      %v1720 = vsel %vm254, %v1635, 0
      %v1723 = vsel %vm254, %v1636, 0
      %v1726 = vsel %vm254, %v1637, 0
      %v1729 = vsel %vm254, %v1638, 0
      %v1732 = vsel %vm254, %v1639, 0
      %v1735 = vsel %vm254, %v1640, 0
      %1737 = vmatpush.msra.mxu0 0.0
      %1738 = vmatpush.msra.mxu0 0.0
      %1739 = vmatpush.msra.mxu0 0.0
      %1740 = vmatpush.msra.mxu0 0.0
      %1741 = vmatpush.msra.mxu0 0.0
      %1742 = vmatpush.msra.mxu0 0.0
      %1743 = vmatpush.msra.mxu0 0.0
      %1744 = vmatpush.msra.mxu0 0.0
      %1745 = vmatpush.msra.mxu0 0.0
      %1746 = vmatpush.msra.mxu0 0.0
      %1747 = vmatpush.msra.mxu0 0.0
      %1748 = vmatpush.msra.mxu0 0.0
      %1749 = vmatpush.msra.mxu0 %v438
      %1750 = vmatpush.msra.mxu0 %v435
      %1751 = vmatpush.msra.mxu0 %v432
      %1752 = vmatpush.msra.mxu0 %v429
      %1753 = vmatmul.f32.gmra.mxu0 %v1642
      %v1754 = vpop.f32.mrf.mxu0
      %v1755 = vadd.f32 0.0, %v1754
      %1756 = vmatmul.f32.gmra.mxu0 %v1645
      %v1757 = vpop.f32.mrf.mxu0
      %v1758 = vadd.f32 0.0, %v1757
      %1759 = vmatmul.f32.gmra.mxu0 %v1648
      %v1760 = vpop.f32.mrf.mxu0
      %v1761 = vadd.f32 0.0, %v1760
      %1762 = vmatmul.f32.gmra.mxu0 %v1651
      %v1763 = vpop.f32.mrf.mxu0
      %v1764 = vadd.f32 0.0, %v1763
      %1765 = vmatmul.f32.gmra.mxu0 %v1654
      %v1766 = vpop.f32.mrf.mxu0
      %v1767 = vadd.f32 0.0, %v1766
      %1768 = vmatmul.f32.gmra.mxu0 %v1657
      %v1769 = vpop.f32.mrf.mxu0
      %v1770 = vadd.f32 0.0, %v1769
      %1771 = vmatmul.f32.gmra.mxu0 %v1660
      %v1772 = vpop.f32.mrf.mxu0
      %v1773 = vadd.f32 0.0, %v1772
      %1774 = vmatmul.f32.gmra.mxu0 %v1663
      %v1775 = vpop.f32.mrf.mxu0
      %v1776 = vadd.f32 0.0, %v1775
      %1777 = vmatmul.f32.gmra.mxu0 %v1666
      %v1778 = vpop.f32.mrf.mxu0
      %v1779 = vadd.f32 0.0, %v1778
      %1780 = vmatmul.f32.gmra.mxu0 %v1669
      %v1781 = vpop.f32.mrf.mxu0
      %v1782 = vadd.f32 0.0, %v1781
      %1783 = vmatmul.f32.gmra.mxu0 %v1672
      %v1784 = vpop.f32.mrf.mxu0
      %v1785 = vadd.f32 0.0, %v1784
      %1786 = vmatmul.f32.gmra.mxu0 %v1675
      %v1787 = vpop.f32.mrf.mxu0
      %v1788 = vadd.f32 0.0, %v1787
      %1789 = vmatmul.f32.gmra.mxu0 %v1678
      %v1790 = vpop.f32.mrf.mxu0
      %v1791 = vadd.f32 0.0, %v1790
      %1792 = vmatmul.f32.gmra.mxu0 %v1681
      %v1793 = vpop.f32.mrf.mxu0
      %v1794 = vadd.f32 0.0, %v1793
      %1795 = vmatmul.f32.gmra.mxu0 %v1684
      %v1796 = vpop.f32.mrf.mxu0
      %v1797 = vadd.f32 0.0, %v1796
      %1798 = vmatmul.f32.gmra.mxu0 %v1687
      %v1799 = vpop.f32.mrf.mxu0
      %v1800 = vadd.f32 0.0, %v1799
      %1801 = vmatmul.f32.gmra.mxu0 %v1690
      %v1802 = vpop.f32.mrf.mxu0
      %v1803 = vadd.f32 0.0, %v1802
      %1804 = vmatmul.f32.gmra.mxu0 %v1693
      %v1805 = vpop.f32.mrf.mxu0
      %v1806 = vadd.f32 0.0, %v1805
      %1807 = vmatmul.f32.gmra.mxu0 %v1696
      %v1808 = vpop.f32.mrf.mxu0
      %v1809 = vadd.f32 0.0, %v1808
      %1810 = vmatmul.f32.gmra.mxu0 %v1699
      %v1811 = vpop.f32.mrf.mxu0
      %v1812 = vadd.f32 0.0, %v1811
      %1813 = vmatmul.f32.gmra.mxu0 %v1702
      %v1814 = vpop.f32.mrf.mxu0
      %v1815 = vadd.f32 0.0, %v1814
      %1816 = vmatmul.f32.gmra.mxu0 %v1705
      %v1817 = vpop.f32.mrf.mxu0
      %v1818 = vadd.f32 0.0, %v1817
      %1819 = vmatmul.f32.gmra.mxu0 %v1708
      %v1820 = vpop.f32.mrf.mxu0
      %v1821 = vadd.f32 0.0, %v1820
      %1822 = vmatmul.f32.gmra.mxu0 %v1711
      %v1823 = vpop.f32.mrf.mxu0
      %v1824 = vadd.f32 0.0, %v1823
      %1825 = vmatmul.f32.gmra.mxu0 %v1714
      %v1826 = vpop.f32.mrf.mxu0
      %v1827 = vadd.f32 0.0, %v1826
      %1828 = vmatmul.f32.gmra.mxu0 %v1717
      %v1829 = vpop.f32.mrf.mxu0
      %v1830 = vadd.f32 0.0, %v1829
      %1831 = vmatmul.f32.gmra.mxu0 %v1720
      %v1832 = vpop.f32.mrf.mxu0
      %v1833 = vadd.f32 0.0, %v1832
      %1834 = vmatmul.f32.gmra.mxu0 %v1723
      %v1835 = vpop.f32.mrf.mxu0
      %v1836 = vadd.f32 0.0, %v1835
      %1837 = vmatmul.f32.gmra.mxu0 %v1726
      %v1838 = vpop.f32.mrf.mxu0
      %v1839 = vadd.f32 0.0, %v1838
      %1840 = vmatmul.f32.gmra.mxu0 %v1729
      %v1841 = vpop.f32.mrf.mxu0
      %v1842 = vadd.f32 0.0, %v1841
      %1843 = vmatmul.f32.gmra.mxu0 %v1732
      %v1844 = vpop.f32.mrf.mxu0
      %v1845 = vadd.f32 0.0, %v1844
      %1846 = vmatmul.f32.gmra.mxu0 %v1735
      %v1847 = vpop.f32.mrf.mxu0
      %v1848 = vadd.f32 0.0, %v1847
      %1849 = vdwg.mxu0
      %1850 = vmatpush.msra.mxu0 0.0
      %1851 = vmatpush.msra.mxu0 0.0
      %1852 = vmatpush.msra.mxu0 0.0
      %1853 = vmatpush.msra.mxu0 0.0
      %1854 = vmatpush.msra.mxu0 0.0
      %1855 = vmatpush.msra.mxu0 0.0
      %1856 = vmatpush.msra.mxu0 0.0
      %1857 = vmatpush.msra.mxu0 0.0
      %1858 = vmatpush.msra.mxu0 0.0
      %1859 = vmatpush.msra.mxu0 0.0
      %1860 = vmatpush.msra.mxu0 0.0
      %1861 = vmatpush.msra.mxu0 0.0
      %1862 = vmatpush.msra.mxu0 %v599
      %1863 = vmatpush.msra.mxu0 %v596
      %1864 = vmatpush.msra.mxu0 %v593
      %1865 = vmatpush.msra.mxu0 %v590
      %1866 = vmatmul.f32.gmra.mxu0 %v1642
      %v1867 = vpop.f32.mrf.mxu0
      %v1868 = vadd.f32 0.0, %v1867
      %1869 = vmatmul.f32.gmra.mxu0 %v1645
      %v1870 = vpop.f32.mrf.mxu0
      %v1871 = vadd.f32 0.0, %v1870
      %1872 = vmatmul.f32.gmra.mxu0 %v1648
      %v1873 = vpop.f32.mrf.mxu0
      %v1874 = vadd.f32 0.0, %v1873
      %1875 = vmatmul.f32.gmra.mxu0 %v1651
      %v1876 = vpop.f32.mrf.mxu0
      %v1877 = vadd.f32 0.0, %v1876
      %1878 = vmatmul.f32.gmra.mxu0 %v1654
      %v1879 = vpop.f32.mrf.mxu0
      %v1880 = vadd.f32 0.0, %v1879
      %1881 = vmatmul.f32.gmra.mxu0 %v1657
      %v1882 = vpop.f32.mrf.mxu0
      %v1883 = vadd.f32 0.0, %v1882
      %1884 = vmatmul.f32.gmra.mxu0 %v1660
      %v1885 = vpop.f32.mrf.mxu0
      %v1886 = vadd.f32 0.0, %v1885
      %1887 = vmatmul.f32.gmra.mxu0 %v1663
      %v1888 = vpop.f32.mrf.mxu0
      %v1889 = vadd.f32 0.0, %v1888
      %1890 = vmatmul.f32.gmra.mxu0 %v1666
      %v1891 = vpop.f32.mrf.mxu0
      %v1892 = vadd.f32 0.0, %v1891
      %1893 = vmatmul.f32.gmra.mxu0 %v1669
      %v1894 = vpop.f32.mrf.mxu0
      %v1895 = vadd.f32 0.0, %v1894
      %1896 = vmatmul.f32.gmra.mxu0 %v1672
      %v1897 = vpop.f32.mrf.mxu0
      %v1898 = vadd.f32 0.0, %v1897
      %1899 = vmatmul.f32.gmra.mxu0 %v1675
      %v1900 = vpop.f32.mrf.mxu0
      %v1901 = vadd.f32 0.0, %v1900
      %1902 = vmatmul.f32.gmra.mxu0 %v1678
      %v1903 = vpop.f32.mrf.mxu0
      %v1904 = vadd.f32 0.0, %v1903
      %1905 = vmatmul.f32.gmra.mxu0 %v1681
      %v1906 = vpop.f32.mrf.mxu0
      %v1907 = vadd.f32 0.0, %v1906
      %1908 = vmatmul.f32.gmra.mxu0 %v1684
      %v1909 = vpop.f32.mrf.mxu0
      %v1910 = vadd.f32 0.0, %v1909
      %1911 = vmatmul.f32.gmra.mxu0 %v1687
      %v1912 = vpop.f32.mrf.mxu0
      %v1913 = vadd.f32 0.0, %v1912
      %1914 = vmatmul.f32.gmra.mxu0 %v1690
      %v1915 = vpop.f32.mrf.mxu0
      %v1916 = vadd.f32 0.0, %v1915
      %1917 = vmatmul.f32.gmra.mxu0 %v1693
      %v1918 = vpop.f32.mrf.mxu0
      %v1919 = vadd.f32 0.0, %v1918
      %1920 = vmatmul.f32.gmra.mxu0 %v1696
      %v1921 = vpop.f32.mrf.mxu0
      %v1922 = vadd.f32 0.0, %v1921
      %1923 = vmatmul.f32.gmra.mxu0 %v1699
      %v1924 = vpop.f32.mrf.mxu0
      %v1925 = vadd.f32 0.0, %v1924
      %1926 = vmatmul.f32.gmra.mxu0 %v1702
      %v1927 = vpop.f32.mrf.mxu0
      %v1928 = vadd.f32 0.0, %v1927
      %1929 = vmatmul.f32.gmra.mxu0 %v1705
      %v1930 = vpop.f32.mrf.mxu0
      %v1931 = vadd.f32 0.0, %v1930
      %1932 = vmatmul.f32.gmra.mxu0 %v1708
      %v1933 = vpop.f32.mrf.mxu0
      %v1934 = vadd.f32 0.0, %v1933
      %1935 = vmatmul.f32.gmra.mxu0 %v1711
      %v1936 = vpop.f32.mrf.mxu0
      %v1937 = vadd.f32 0.0, %v1936
      %1938 = vmatmul.f32.gmra.mxu0 %v1714
      %v1939 = vpop.f32.mrf.mxu0
      %v1940 = vadd.f32 0.0, %v1939
      %1941 = vmatmul.f32.gmra.mxu0 %v1717
      %v1942 = vpop.f32.mrf.mxu0
      %v1943 = vadd.f32 0.0, %v1942
      %1944 = vmatmul.f32.gmra.mxu0 %v1720
      %v1945 = vpop.f32.mrf.mxu0
      %v1946 = vadd.f32 0.0, %v1945
      %1947 = vmatmul.f32.gmra.mxu0 %v1723
      %v1948 = vpop.f32.mrf.mxu0
      %v1949 = vadd.f32 0.0, %v1948
      %1950 = vmatmul.f32.gmra.mxu0 %v1726
      %v1951 = vpop.f32.mrf.mxu0
      %v1952 = vadd.f32 0.0, %v1951
      %1953 = vmatmul.f32.gmra.mxu0 %v1729
      %v1954 = vpop.f32.mrf.mxu0
      %v1955 = vadd.f32 0.0, %v1954
      %1956 = vmatmul.f32.gmra.mxu0 %v1732
      %v1957 = vpop.f32.mrf.mxu0
      %v1958 = vadd.f32 0.0, %v1957
      %1959 = vmatmul.f32.gmra.mxu0 %v1735
      %v1960 = vpop.f32.mrf.mxu0
      %v1961 = vadd.f32 0.0, %v1960
      %1962 = vdwg.mxu0
      %v1963 = vmax.f32 %v1755, %v1761
      %v1964 = vmax.f32 %v1758, %v1764
      %v1965 = vmax.f32 %v1963, %v1767
      %v1966 = vmax.f32 %v1964, %v1770
      %v1967 = vmax.f32 %v1965, %v1773
      %v1968 = vmax.f32 %v1966, %v1776
      %v1969 = vmax.f32 %v1967, %v1779
      %v1970 = vmax.f32 %v1968, %v1782
      %v1971 = vmax.f32 %v1969, %v1785
      %v1972 = vmax.f32 %v1970, %v1788
      %v1973 = vmax.f32 %v1971, %v1791
      %v1974 = vmax.f32 %v1972, %v1794
      %v1975 = vmax.f32 %v1973, %v1797
      %v1976 = vmax.f32 %v1974, %v1800
      %v1977 = vmax.f32 %v1975, %v1803
      %v1978 = vmax.f32 %v1976, %v1806
      %v1979 = vmax.f32 %v1977, %v1809
      %v1980 = vmax.f32 %v1978, %v1812
      %v1981 = vmax.f32 %v1979, %v1815
      %v1982 = vmax.f32 %v1980, %v1818
      %v1983 = vmax.f32 %v1981, %v1821
      %v1984 = vmax.f32 %v1982, %v1824
      %v1985 = vmax.f32 %v1983, %v1827
      %v1986 = vmax.f32 %v1984, %v1830
      %v1987 = vmax.f32 %v1985, %v1833
      %v1988 = vmax.f32 %v1986, %v1836
      %v1989 = vmax.f32 %v1987, %v1839
      %v1990 = vmax.f32 %v1988, %v1842
      %v1991 = vmax.f32 %v1989, %v1845
      %v1992 = vmax.f32 %v1990, %v1848
      %v1993 = vmax.f32 %v1991, %v1992
      %v1994 = vrot.slane %v1993, 4
      %v1995 = vmax.f32 %v1993, %v1994
      %v1996 = vrot.slane %v1995, 2
      %v1997 = vmax.f32 %v1995, %v1996
      %v1998 = vrot.slane %v1997, 1
      %v1999 = vmax.f32 %v1997, %v1998
      %v2000 = vmax.f32 %v1868, %v1874
      %v2001 = vmax.f32 %v1871, %v1877
      %v2002 = vmax.f32 %v2000, %v1880
      %v2003 = vmax.f32 %v2001, %v1883
      %v2004 = vmax.f32 %v2002, %v1886
      %v2005 = vmax.f32 %v2003, %v1889
      %v2006 = vmax.f32 %v2004, %v1892
      %v2007 = vmax.f32 %v2005, %v1895
      %v2008 = vmax.f32 %v2006, %v1898
      %v2009 = vmax.f32 %v2007, %v1901
      %v2010 = vmax.f32 %v2008, %v1904
      %v2011 = vmax.f32 %v2009, %v1907
      %v2012 = vmax.f32 %v2010, %v1910
      %v2013 = vmax.f32 %v2011, %v1913
      %v2014 = vmax.f32 %v2012, %v1916
      %v2015 = vmax.f32 %v2013, %v1919
      %v2016 = vmax.f32 %v2014, %v1922
      %v2017 = vmax.f32 %v2015, %v1925
      %v2018 = vmax.f32 %v2016, %v1928
      %v2019 = vmax.f32 %v2017, %v1931
      %v2020 = vmax.f32 %v2018, %v1934
      %v2021 = vmax.f32 %v2019, %v1937
      %v2022 = vmax.f32 %v2020, %v1940
      %v2023 = vmax.f32 %v2021, %v1943
      %v2024 = vmax.f32 %v2022, %v1946
      %v2025 = vmax.f32 %v2023, %v1949
      %v2026 = vmax.f32 %v2024, %v1952
      %v2027 = vmax.f32 %v2025, %v1955
      %v2028 = vmax.f32 %v2026, %v1958
      %v2029 = vmax.f32 %v2027, %v1961
      %v2030 = vmax.f32 %v2028, %v2029
      %v2031 = vrot.slane %v2030, 4
      %v2032 = vmax.f32 %v2030, %v2031
      %v2033 = vrot.slane %v2032, 2
      %v2034 = vmax.f32 %v2032, %v2033
      %v2035 = vrot.slane %v2034, 1
      %v2036 = vmax.f32 %v2034, %v2035
      %v2037 = vsub.f32 %v1755, %v1999
      %v2038 = vsub.f32 %v1868, %v2036
      %v2039 = vsub.f32 %v1758, %v1999
      %v2040 = vsub.f32 %v1871, %v2036
      %v2041 = vsub.f32 %v1761, %v1999
      %v2042 = vsub.f32 %v1874, %v2036
      %v2043 = vsub.f32 %v1764, %v1999
      %v2044 = vsub.f32 %v1877, %v2036
      %v2045 = vsub.f32 %v1767, %v1999
      %v2046 = vsub.f32 %v1880, %v2036
      %v2047 = vsub.f32 %v1770, %v1999
      %v2048 = vsub.f32 %v1883, %v2036
      %v2049 = vsub.f32 %v1773, %v1999
      %v2050 = vsub.f32 %v1886, %v2036
      %v2051 = vsub.f32 %v1776, %v1999
      %v2052 = vsub.f32 %v1889, %v2036
      %v2053 = vsub.f32 %v1779, %v1999
      %v2054 = vsub.f32 %v1892, %v2036
      %v2055 = vsub.f32 %v1782, %v1999
      %v2056 = vsub.f32 %v1895, %v2036
      %v2057 = vsub.f32 %v1785, %v1999
      %v2058 = vsub.f32 %v1898, %v2036
      %v2059 = vsub.f32 %v1788, %v1999
      %v2060 = vsub.f32 %v1901, %v2036
      %v2061 = vsub.f32 %v1791, %v1999
      %v2062 = vsub.f32 %v1904, %v2036
      %v2063 = vsub.f32 %v1794, %v1999
      %v2064 = vsub.f32 %v1907, %v2036
      %v2065 = vsub.f32 %v1797, %v1999
      %v2066 = vsub.f32 %v1910, %v2036
      %v2067 = vsub.f32 %v1800, %v1999
      %v2068 = vsub.f32 %v1913, %v2036
      %v2069 = vsub.f32 %v1803, %v1999
      %v2070 = vsub.f32 %v1916, %v2036
      %v2071 = vsub.f32 %v1806, %v1999
      %v2072 = vsub.f32 %v1919, %v2036
      %v2073 = vsub.f32 %v1809, %v1999
      %v2074 = vsub.f32 %v1922, %v2036
      %v2075 = vsub.f32 %v1812, %v1999
      %v2076 = vsub.f32 %v1925, %v2036
      %v2077 = vsub.f32 %v1815, %v1999
      %v2078 = vsub.f32 %v1928, %v2036
      %v2079 = vsub.f32 %v1818, %v1999
      %v2080 = vsub.f32 %v1931, %v2036
      %v2081 = vsub.f32 %v1821, %v1999
      %v2082 = vsub.f32 %v1934, %v2036
      %v2083 = vsub.f32 %v1824, %v1999
      %v2084 = vsub.f32 %v1937, %v2036
      %v2085 = vsub.f32 %v1827, %v1999
      %v2086 = vsub.f32 %v1940, %v2036
      %v2087 = vsub.f32 %v1830, %v1999
      %v2088 = vsub.f32 %v1943, %v2036
      %v2089 = vsub.f32 %v1833, %v1999
      %v2090 = vsub.f32 %v1946, %v2036
      %v2091 = vsub.f32 %v1836, %v1999
      %v2092 = vsub.f32 %v1949, %v2036
      %v2093 = vsub.f32 %v1839, %v1999
      %v2094 = vsub.f32 %v1952, %v2036
      %v2095 = vsub.f32 %v1842, %v1999
      %v2096 = vsub.f32 %v1955, %v2036
      %v2097 = vsub.f32 %v1845, %v1999
      %v2098 = vsub.f32 %v1958, %v2036
      %v2099 = vsub.f32 %v1848, %v1999
      %v2100 = vsub.f32 %v1961, %v2036
      %v2101 = vmul.f32 %v2037, 1.442695
      %v2102 = vpow.pop %v2101
      %v2103 = vmul.f32 %v2038, 1.442695
      %v2104 = vpow.pop %v2103
      %v2105 = vmul.f32 %v2039, 1.442695
      %v2106 = vpow.pop %v2105
      %v2107 = vmul.f32 %v2040, 1.442695
      %v2108 = vpow.pop %v2107
      %v2109 = vmul.f32 %v2041, 1.442695
      %v2110 = vpow.pop %v2109
      %v2111 = vmul.f32 %v2042, 1.442695
      %v2112 = vpow.pop %v2111
      %v2113 = vmul.f32 %v2043, 1.442695
      %v2114 = vpow.pop %v2113
      %v2115 = vmul.f32 %v2044, 1.442695
      %v2116 = vpow.pop %v2115
      %v2117 = vmul.f32 %v2045, 1.442695
      %v2118 = vpow.pop %v2117
      %v2119 = vmul.f32 %v2046, 1.442695
      %v2120 = vpow.pop %v2119
      %v2121 = vmul.f32 %v2047, 1.442695
      %v2122 = vpow.pop %v2121
      %v2123 = vmul.f32 %v2048, 1.442695
      %v2124 = vpow.pop %v2123
      %v2125 = vmul.f32 %v2049, 1.442695
      %v2126 = vpow.pop %v2125
      %v2127 = vmul.f32 %v2050, 1.442695
      %v2128 = vpow.pop %v2127
      %v2129 = vmul.f32 %v2051, 1.442695
      %v2130 = vpow.pop %v2129
      %v2131 = vmul.f32 %v2052, 1.442695
      %v2132 = vpow.pop %v2131
      %v2133 = vmul.f32 %v2053, 1.442695
      %v2134 = vpow.pop %v2133
      %v2135 = vmul.f32 %v2054, 1.442695
      %v2136 = vpow.pop %v2135
      %v2137 = vmul.f32 %v2055, 1.442695
      %v2138 = vpow.pop %v2137
      %v2139 = vmul.f32 %v2056, 1.442695
      %v2140 = vpow.pop %v2139
      %v2141 = vmul.f32 %v2057, 1.442695
      %v2142 = vpow.pop %v2141
      %v2143 = vmul.f32 %v2058, 1.442695
      %v2144 = vpow.pop %v2143
      %v2145 = vmul.f32 %v2059, 1.442695
      %v2146 = vpow.pop %v2145
      %v2147 = vmul.f32 %v2060, 1.442695
      %v2148 = vpow.pop %v2147
      %v2149 = vmul.f32 %v2061, 1.442695
      %v2150 = vpow.pop %v2149
      %v2151 = vmul.f32 %v2062, 1.442695
      %v2152 = vpow.pop %v2151
      %v2153 = vmul.f32 %v2063, 1.442695
      %v2154 = vpow.pop %v2153
      %v2155 = vmul.f32 %v2064, 1.442695
      %v2156 = vpow.pop %v2155
      %v2157 = vmul.f32 %v2065, 1.442695
      %v2158 = vpow.pop %v2157
      %v2159 = vmul.f32 %v2066, 1.442695
      %v2160 = vpow.pop %v2159
      %v2161 = vmul.f32 %v2067, 1.442695
      %v2162 = vpow.pop %v2161
      %v2163 = vmul.f32 %v2068, 1.442695
      %v2164 = vpow.pop %v2163
      %v2165 = vmul.f32 %v2069, 1.442695
      %v2166 = vpow.pop %v2165
      %v2167 = vmul.f32 %v2070, 1.442695
      %v2168 = vpow.pop %v2167
      %v2169 = vmul.f32 %v2071, 1.442695
      %v2170 = vpow.pop %v2169
      %v2171 = vmul.f32 %v2072, 1.442695
      %v2172 = vpow.pop %v2171
      %v2173 = vmul.f32 %v2073, 1.442695
      %v2174 = vpow.pop %v2173
      %v2175 = vmul.f32 %v2074, 1.442695
      %v2176 = vpow.pop %v2175
      %v2177 = vmul.f32 %v2075, 1.442695
      %v2178 = vpow.pop %v2177
      %v2179 = vmul.f32 %v2076, 1.442695
      %v2180 = vpow.pop %v2179
      %v2181 = vmul.f32 %v2077, 1.442695
      %v2182 = vpow.pop %v2181
      %v2183 = vmul.f32 %v2078, 1.442695
      %v2184 = vpow.pop %v2183
      %v2185 = vmul.f32 %v2079, 1.442695
      %v2186 = vpow.pop %v2185
      %v2187 = vmul.f32 %v2080, 1.442695
      %v2188 = vpow.pop %v2187
      %v2189 = vmul.f32 %v2081, 1.442695
      %v2190 = vpow.pop %v2189
      %v2191 = vmul.f32 %v2082, 1.442695
      %v2192 = vpow.pop %v2191
      %v2193 = vmul.f32 %v2083, 1.442695
      %v2194 = vpow.pop %v2193
      %v2195 = vmul.f32 %v2084, 1.442695
      %v2196 = vpow.pop %v2195
      %v2197 = vmul.f32 %v2085, 1.442695
      %v2198 = vpow.pop %v2197
      %v2199 = vmul.f32 %v2086, 1.442695
      %v2200 = vpow.pop %v2199
      %v2201 = vmul.f32 %v2087, 1.442695
      %v2202 = vpow.pop %v2201
      %v2203 = vmul.f32 %v2088, 1.442695
      %v2204 = vpow.pop %v2203
      %v2205 = vmul.f32 %v2089, 1.442695
      %v2206 = vpow.pop %v2205
      %v2207 = vmul.f32 %v2090, 1.442695
      %v2208 = vpow.pop %v2207
      %v2209 = vmul.f32 %v2091, 1.442695
      %v2210 = vpow.pop %v2209
      %v2211 = vmul.f32 %v2092, 1.442695
      %v2212 = vpow.pop %v2211
      %v2213 = vmul.f32 %v2093, 1.442695
      %v2214 = vpow.pop %v2213
      %v2215 = vmul.f32 %v2094, 1.442695
      %v2216 = vpow.pop %v2215
      %v2217 = vmul.f32 %v2095, 1.442695
      %v2218 = vpow.pop %v2217
      %v2219 = vmul.f32 %v2096, 1.442695
      %v2220 = vpow.pop %v2219
      %v2221 = vmul.f32 %v2097, 1.442695
      %v2222 = vpow.pop %v2221
      %v2223 = vmul.f32 %v2098, 1.442695
      %v2224 = vpow.pop %v2223
      %v2225 = vmul.f32 %v2099, 1.442695
      %v2226 = vpow.pop %v2225
      %v2227 = vmul.f32 %v2100, 1.442695
      %v2228 = vpow.pop %v2227
      %v2229 = vadd.f32 %v2102, %v2106
      %v2230 = vadd.f32 %v2229, %v2110
      %v2231 = vadd.f32 %v2230, %v2114
      %v2232 = vadd.f32 %v2231, %v2118
      %v2233 = vadd.f32 %v2232, %v2122
      %v2234 = vadd.f32 %v2233, %v2126
      %v2235 = vadd.f32 %v2234, %v2130
      %v2236 = vadd.f32 %v2235, %v2134
      %v2237 = vadd.f32 %v2236, %v2138
      %v2238 = vadd.f32 %v2237, %v2142
      %v2239 = vadd.f32 %v2238, %v2146
      %v2240 = vadd.f32 %v2239, %v2150
      %v2241 = vadd.f32 %v2240, %v2154
      %v2242 = vadd.f32 %v2241, %v2158
      %v2243 = vadd.f32 %v2242, %v2162
      %v2244 = vadd.f32 %v2243, %v2166
      %v2245 = vadd.f32 %v2244, %v2170
      %v2246 = vadd.f32 %v2245, %v2174
      %v2247 = vadd.f32 %v2246, %v2178
      %v2248 = vadd.f32 %v2247, %v2182
      %v2249 = vadd.f32 %v2248, %v2186
      %v2250 = vadd.f32 %v2249, %v2190
      %v2251 = vadd.f32 %v2250, %v2194
      %v2252 = vadd.f32 %v2251, %v2198
      %v2253 = vadd.f32 %v2252, %v2202
      %v2254 = vadd.f32 %v2253, %v2206
      %v2255 = vadd.f32 %v2254, %v2210
      %v2256 = vadd.f32 %v2255, %v2214
      %v2257 = vadd.f32 %v2256, %v2218
      %v2258 = vadd.f32 %v2257, %v2222
      %v2259 = vadd.f32 %v2258, %v2226
      %v2260 = vrot.slane %v2259, 4
      %v2261 = vadd.f32 %v2259, %v2260
      %v2262 = vrot.slane %v2261, 2
      %v2263 = vadd.f32 %v2261, %v2262
      %v2264 = vrot.slane %v2263, 1
      %v2265 = vadd.f32 %v2263, %v2264
      %v2266 = vadd.f32 %v2104, %v2108
      %v2267 = vadd.f32 %v2266, %v2112
      %v2268 = vadd.f32 %v2267, %v2116
      %v2269 = vadd.f32 %v2268, %v2120
      %v2270 = vadd.f32 %v2269, %v2124
      %v2271 = vadd.f32 %v2270, %v2128
      %v2272 = vadd.f32 %v2271, %v2132
      %v2273 = vadd.f32 %v2272, %v2136
      %v2274 = vadd.f32 %v2273, %v2140
      %v2275 = vadd.f32 %v2274, %v2144
      %v2276 = vadd.f32 %v2275, %v2148
      %v2277 = vadd.f32 %v2276, %v2152
      %v2278 = vadd.f32 %v2277, %v2156
      %v2279 = vadd.f32 %v2278, %v2160
      %v2280 = vadd.f32 %v2279, %v2164
      %v2281 = vadd.f32 %v2280, %v2168
      %v2282 = vadd.f32 %v2281, %v2172
      %v2283 = vadd.f32 %v2282, %v2176
      %v2284 = vadd.f32 %v2283, %v2180
      %v2285 = vadd.f32 %v2284, %v2184
      %v2286 = vadd.f32 %v2285, %v2188
      %v2287 = vadd.f32 %v2286, %v2192
      %v2288 = vadd.f32 %v2287, %v2196
      %v2289 = vadd.f32 %v2288, %v2200
      %v2290 = vadd.f32 %v2289, %v2204
      %v2291 = vadd.f32 %v2290, %v2208
      %v2292 = vadd.f32 %v2291, %v2212
      %v2293 = vadd.f32 %v2292, %v2216
      %v2294 = vadd.f32 %v2293, %v2220
      %v2295 = vadd.f32 %v2294, %v2224
      %v2296 = vadd.f32 %v2295, %v2228
      %v2297 = vrot.slane %v2296, 4
      %v2298 = vadd.f32 %v2296, %v2297
      %v2299 = vrot.slane %v2298, 2
      %v2300 = vadd.f32 %v2298, %v2299
      %v2301 = vrot.slane %v2300, 1
      %v2302 = vadd.f32 %v2300, %v2301
      %2303 = vmatpush.msra.mxu0 %v2162
      %2304 = vmatpush.msra.mxu0 %v2158
      %2305 = vmatpush.msra.mxu0 %v2154
      %2306 = vmatpush.msra.mxu0 %v2150
      %2307 = vmatpush.msra.mxu0 %v2146
      %2308 = vmatpush.msra.mxu0 %v2142
      %2309 = vmatpush.msra.mxu0 %v2138
      %2310 = vmatpush.msra.mxu0 %v2134
      %2311 = vmatpush.msra.mxu0 %v2130
      %2312 = vmatpush.msra.mxu0 %v2126
      %2313 = vmatpush.msra.mxu0 %v2122
      %2314 = vmatpush.msra.mxu0 %v2118
      %2315 = vmatpush.msra.mxu0 %v2114
      %2316 = vmatpush.msra.mxu0 %v2110
      %2317 = vmatpush.msra.mxu0 %v2106
      %2318 = vmatpush.msra.mxu0 %v2102
      %2319 = vmatmul.f32.gmra.mxu0 %v525
      %v2320 = vpop.f32.mrf.mxu0
      %v2321 = vadd.f32 0.0, %v2320
      %2322 = vmatmul.f32.gmra.mxu0 %v528
      %v2323 = vpop.f32.mrf.mxu0
      %v2324 = vadd.f32 0.0, %v2323
      %2325 = vmatmul.f32.gmra.mxu0 %v531
      %v2326 = vpop.f32.mrf.mxu0
      %v2327 = vadd.f32 0.0, %v2326
      %2328 = vmatmul.f32.gmra.mxu0 %v534
      %v2329 = vpop.f32.mrf.mxu0
      %v2330 = vadd.f32 0.0, %v2329
      %2331 = vdwg.mxu0
      %2332 = vmatpush.msra.mxu0 %v2226
      %2333 = vmatpush.msra.mxu0 %v2222
      %2334 = vmatpush.msra.mxu0 %v2218
      %2335 = vmatpush.msra.mxu0 %v2214
      %2336 = vmatpush.msra.mxu0 %v2210
      %2337 = vmatpush.msra.mxu0 %v2206
      %2338 = vmatpush.msra.mxu0 %v2202
      %2339 = vmatpush.msra.mxu0 %v2198
      %2340 = vmatpush.msra.mxu0 %v2194
      %2341 = vmatpush.msra.mxu0 %v2190
      %2342 = vmatpush.msra.mxu0 %v2186
      %2343 = vmatpush.msra.mxu0 %v2182
      %2344 = vmatpush.msra.mxu0 %v2178
      %2345 = vmatpush.msra.mxu0 %v2174
      %2346 = vmatpush.msra.mxu0 %v2170
      %2347 = vmatpush.msra.mxu0 %v2166
      %2348 = vmatmul.f32.gmra.mxu0 %v686
      %v2349 = vpop.f32.mrf.mxu0
      %v2350 = vadd.f32 %v2321, %v2349
      %2351 = vmatmul.f32.gmra.mxu0 %v689
      %v2352 = vpop.f32.mrf.mxu0
      %v2353 = vadd.f32 %v2324, %v2352
      %2354 = vmatmul.f32.gmra.mxu0 %v692
      %v2355 = vpop.f32.mrf.mxu0
      %v2356 = vadd.f32 %v2327, %v2355
      %2357 = vmatmul.f32.gmra.mxu0 %v695
      %v2358 = vpop.f32.mrf.mxu0
      %v2359 = vadd.f32 %v2330, %v2358
      %2360 = vdwg.mxu0
      %2361 = vmatpush.msra.mxu0 %v2164
      %2362 = vmatpush.msra.mxu0 %v2160
      %2363 = vmatpush.msra.mxu0 %v2156
      %2364 = vmatpush.msra.mxu0 %v2152
      %2365 = vmatpush.msra.mxu0 %v2148
      %2366 = vmatpush.msra.mxu0 %v2144
      %2367 = vmatpush.msra.mxu0 %v2140
      %2368 = vmatpush.msra.mxu0 %v2136
      %2369 = vmatpush.msra.mxu0 %v2132
      %2370 = vmatpush.msra.mxu0 %v2128
      %2371 = vmatpush.msra.mxu0 %v2124
      %2372 = vmatpush.msra.mxu0 %v2120
      %2373 = vmatpush.msra.mxu0 %v2116
      %2374 = vmatpush.msra.mxu0 %v2112
      %2375 = vmatpush.msra.mxu0 %v2108
      %2376 = vmatpush.msra.mxu0 %v2104
      %2377 = vmatmul.f32.gmra.mxu0 %v525
      %v2378 = vpop.f32.mrf.mxu0
      %v2379 = vadd.f32 0.0, %v2378
      %2380 = vmatmul.f32.gmra.mxu0 %v528
      %v2381 = vpop.f32.mrf.mxu0
      %v2382 = vadd.f32 0.0, %v2381
      %2383 = vmatmul.f32.gmra.mxu0 %v531
      %v2384 = vpop.f32.mrf.mxu0
      %v2385 = vadd.f32 0.0, %v2384
      %2386 = vmatmul.f32.gmra.mxu0 %v534
      %v2387 = vpop.f32.mrf.mxu0
      %v2388 = vadd.f32 0.0, %v2387
      %2389 = vdwg.mxu0
      %2390 = vmatpush.msra.mxu0 %v2228
      %2391 = vmatpush.msra.mxu0 %v2224
      %2392 = vmatpush.msra.mxu0 %v2220
      %2393 = vmatpush.msra.mxu0 %v2216
      %2394 = vmatpush.msra.mxu0 %v2212
      %2395 = vmatpush.msra.mxu0 %v2208
      %2396 = vmatpush.msra.mxu0 %v2204
      %2397 = vmatpush.msra.mxu0 %v2200
      %2398 = vmatpush.msra.mxu0 %v2196
      %2399 = vmatpush.msra.mxu0 %v2192
      %2400 = vmatpush.msra.mxu0 %v2188
      %2401 = vmatpush.msra.mxu0 %v2184
      %2402 = vmatpush.msra.mxu0 %v2180
      %2403 = vmatpush.msra.mxu0 %v2176
      %2404 = vmatpush.msra.mxu0 %v2172
      %2405 = vmatpush.msra.mxu0 %v2168
      %2406 = vmatmul.f32.gmra.mxu0 %v686
      %v2407 = vpop.f32.mrf.mxu0
      %v2408 = vadd.f32 %v2379, %v2407
      %2409 = vmatmul.f32.gmra.mxu0 %v689
      %v2410 = vpop.f32.mrf.mxu0
      %v2411 = vadd.f32 %v2382, %v2410
      %2412 = vmatmul.f32.gmra.mxu0 %v692
      %v2413 = vpop.f32.mrf.mxu0
      %v2414 = vadd.f32 %v2385, %v2413
      %2415 = vmatmul.f32.gmra.mxu0 %v695
      %v2416 = vpop.f32.mrf.mxu0
      %v2417 = vadd.f32 %v2388, %v2416
      %2418 = vdwg.mxu0
      %v2419 = vrcp.pop %v2265
      %v2420 = vrcp.pop %v2302
      %v2421 = vmul.f32 %v2350, %v2419
      %v2422 = vmul.f32 %v2408, %v2420
      %v2423 = vmul.f32 %v2353, %v2419
      %v2424 = vmul.f32 %v2411, %v2420
      %v2425 = vmul.f32 %v2356, %v2419
      %v2426 = vmul.f32 %v2414, %v2420
      %v2427 = vmul.f32 %v2359, %v2419
      %v2428 = vmul.f32 %v2417, %v2420
      %s2429 = scalar_lea.vmem %s2, 32
      %v2430 = vld [vmem:[%s2429] sm:$0xff]
      %v2431 = vld [vmem:[%s2429 + $0x8] sm:$0xff]
      %v2432 = vld [vmem:[%s2429 + $0x10] sm:$0xff]
      %v2433 = vld [vmem:[%s2429 + $0x18] sm:$0xff]
      %v2435 = vsel %vm254, %v2430, 0
      %v2438 = vsel %vm254, %v2431, 0
      %v2441 = vsel %vm254, %v2432, 0
      %v2444 = vsel %vm254, %v2433, 0
      %2446 = vmatpush.msra.mxu0 0.0
      %2447 = vmatpush.msra.mxu0 0.0
      %2448 = vmatpush.msra.mxu0 0.0
      %2449 = vmatpush.msra.mxu0 0.0
      %2450 = vmatpush.msra.mxu0 0.0
      %2451 = vmatpush.msra.mxu0 0.0
      %2452 = vmatpush.msra.mxu0 0.0
      %2453 = vmatpush.msra.mxu0 0.0
      %2454 = vmatpush.msra.mxu0 0.0
      %2455 = vmatpush.msra.mxu0 0.0
      %2456 = vmatpush.msra.mxu0 0.0
      %2457 = vmatpush.msra.mxu0 0.0
      %2458 = vmatpush.msra.mxu0 %v2427
      %2459 = vmatpush.msra.mxu0 %v2425
      %2460 = vmatpush.msra.mxu0 %v2423
      %2461 = vmatpush.msra.mxu0 %v2421
      %2462 = vmatmul.f32.gmra.mxu0 %v2435
      %v2463 = vpop.f32.mrf.mxu0
      %v2464 = vadd.f32 0.0, %v2463
      %2465 = vmatmul.f32.gmra.mxu0 %v2438
      %v2466 = vpop.f32.mrf.mxu0
      %v2467 = vadd.f32 0.0, %v2466
      %2468 = vmatmul.f32.gmra.mxu0 %v2441
      %v2469 = vpop.f32.mrf.mxu0
      %v2470 = vadd.f32 0.0, %v2469
      %2471 = vmatmul.f32.gmra.mxu0 %v2444
      %v2472 = vpop.f32.mrf.mxu0
      %v2473 = vadd.f32 0.0, %v2472
      %2474 = vdwg.mxu0
      %2475 = vmatpush.msra.mxu0 0.0
      %2476 = vmatpush.msra.mxu0 0.0
      %2477 = vmatpush.msra.mxu0 0.0
      %2478 = vmatpush.msra.mxu0 0.0
      %2479 = vmatpush.msra.mxu0 0.0
      %2480 = vmatpush.msra.mxu0 0.0
      %2481 = vmatpush.msra.mxu0 0.0
      %2482 = vmatpush.msra.mxu0 0.0
      %2483 = vmatpush.msra.mxu0 0.0
      %2484 = vmatpush.msra.mxu0 0.0
      %2485 = vmatpush.msra.mxu0 0.0
      %2486 = vmatpush.msra.mxu0 0.0
      %2487 = vmatpush.msra.mxu0 %v2428
      %2488 = vmatpush.msra.mxu0 %v2426
      %2489 = vmatpush.msra.mxu0 %v2424
      %2490 = vmatpush.msra.mxu0 %v2422
      %2491 = vmatmul.f32.gmra.mxu0 %v2435
      %v2492 = vpop.f32.mrf.mxu0
      %v2493 = vadd.f32 0.0, %v2492
      %2494 = vmatmul.f32.gmra.mxu0 %v2438
      %v2495 = vpop.f32.mrf.mxu0
      %v2496 = vadd.f32 0.0, %v2495
      %2497 = vmatmul.f32.gmra.mxu0 %v2441
      %v2498 = vpop.f32.mrf.mxu0
      %v2499 = vadd.f32 0.0, %v2498
      %2500 = vmatmul.f32.gmra.mxu0 %v2444
      %v2501 = vpop.f32.mrf.mxu0
      %v2502 = vadd.f32 0.0, %v2501
      %2503 = vdwg.mxu0
      %v2505 = vsel %vm254, %v1573, 0
      %v2508 = vsel %vm254, %v1574, 0
      %v2511 = vsel %vm254, %v1575, 0
      %v2514 = vsel %vm254, %v1576, 0
      %2516 = vmatpush.msra.mxu0 0.0
      %2517 = vmatpush.msra.mxu0 0.0
      %2518 = vmatpush.msra.mxu0 0.0
      %2519 = vmatpush.msra.mxu0 0.0
      %2520 = vmatpush.msra.mxu0 0.0
      %2521 = vmatpush.msra.mxu0 0.0
      %2522 = vmatpush.msra.mxu0 0.0
      %2523 = vmatpush.msra.mxu0 0.0
      %2524 = vmatpush.msra.mxu0 0.0
      %2525 = vmatpush.msra.mxu0 0.0
      %2526 = vmatpush.msra.mxu0 0.0
      %2527 = vmatpush.msra.mxu0 0.0
      %2528 = vmatpush.msra.mxu0 %v1571
      %2529 = vmatpush.msra.mxu0 %v1569
      %2530 = vmatpush.msra.mxu0 %v1567
      %2531 = vmatpush.msra.mxu0 %v1565
      %2532 = vmatmul.f32.gmra.mxu0 %v2505
      %v2533 = vpop.f32.mrf.mxu0
      %v2534 = vadd.f32 %v2464, %v2533
      %2535 = vmatmul.f32.gmra.mxu0 %v2508
      %v2536 = vpop.f32.mrf.mxu0
      %v2537 = vadd.f32 %v2467, %v2536
      %2538 = vmatmul.f32.gmra.mxu0 %v2511
      %v2539 = vpop.f32.mrf.mxu0
      %v2540 = vadd.f32 %v2470, %v2539
      %2541 = vmatmul.f32.gmra.mxu0 %v2514
      %v2542 = vpop.f32.mrf.mxu0
      %v2543 = vadd.f32 %v2473, %v2542
      %2544 = vdwg.mxu0
      %2545 = vmatpush.msra.mxu0 0.0
      %2546 = vmatpush.msra.mxu0 0.0
      %2547 = vmatpush.msra.mxu0 0.0
      %2548 = vmatpush.msra.mxu0 0.0
      %2549 = vmatpush.msra.mxu0 0.0
      %2550 = vmatpush.msra.mxu0 0.0
      %2551 = vmatpush.msra.mxu0 0.0
      %2552 = vmatpush.msra.mxu0 0.0
      %2553 = vmatpush.msra.mxu0 0.0
      %2554 = vmatpush.msra.mxu0 0.0
      %2555 = vmatpush.msra.mxu0 0.0
      %2556 = vmatpush.msra.mxu0 0.0
      %2557 = vmatpush.msra.mxu0 %v1572
      %2558 = vmatpush.msra.mxu0 %v1570
      %2559 = vmatpush.msra.mxu0 %v1568
      %2560 = vmatpush.msra.mxu0 %v1566
      %2561 = vmatmul.f32.gmra.mxu0 %v2505
      %v2562 = vpop.f32.mrf.mxu0
      %v2563 = vadd.f32 %v2493, %v2562
      %2564 = vmatmul.f32.gmra.mxu0 %v2508
      %v2565 = vpop.f32.mrf.mxu0
      %v2566 = vadd.f32 %v2496, %v2565
      %2567 = vmatmul.f32.gmra.mxu0 %v2511
      %v2568 = vpop.f32.mrf.mxu0
      %v2569 = vadd.f32 %v2499, %v2568
      %2570 = vmatmul.f32.gmra.mxu0 %v2514
      %v2571 = vpop.f32.mrf.mxu0
      %v2572 = vadd.f32 %v2502, %v2571
      %2573 = vdwg.mxu0
      %2574 = vxpose.xlu0.b32.start [1/16] %v489, 128
      %2575 = vxpose.xlu0.b32.cont [2/16] %v492, 128
      %2576 = vxpose.xlu0.b32.cont [3/16] %v495, 128
      %2577 = vxpose.xlu0.b32.cont [4/16] %v498, 128
      %2578 = vxpose.xlu0.b32.cont [5/16] 0.0, 128
      %2579 = vxpose.xlu0.b32.cont [6/16] 0.0, 128
      %2580 = vxpose.xlu0.b32.cont [7/16] 0.0, 128
      %2581 = vxpose.xlu0.b32.cont [8/16] 0.0, 128
      %2582 = vxpose.xlu0.b32.cont [9/16] 0.0, 128
      %2583 = vxpose.xlu0.b32.cont [10/16] 0.0, 128
      %2584 = vxpose.xlu0.b32.cont [11/16] 0.0, 128
      %2585 = vxpose.xlu0.b32.cont [12/16] 0.0, 128
      %2586 = vxpose.xlu0.b32.cont [13/16] 0.0, 128
      %2587 = vxpose.xlu0.b32.cont [14/16] 0.0, 128
      %2588 = vxpose.xlu0.b32.cont [15/16] 0.0, 128
      %2589 = vxpose.xlu0.b32.end [16/16] 0.0, 128
      %v2590 = vpop.trf.xlu0
      %v2591 = vpop.trf.xlu0
      %v2592 = vpop.trf.xlu0
      %v2593 = vpop.trf.xlu0
      %v2594 = vpop.trf.xlu0
      %v2595 = vpop.trf.xlu0
      %v2596 = vpop.trf.xlu0
      %v2597 = vpop.trf.xlu0
      %v2598 = vpop.trf.xlu0
      %v2599 = vpop.trf.xlu0
      %v2600 = vpop.trf.xlu0
      %v2601 = vpop.trf.xlu0
      %v2602 = vpop.trf.xlu0
      %v2603 = vpop.trf.xlu0
      %v2604 = vpop.trf.xlu0
      %v2605 = vpop.trf.xlu0
      %2606 = vxpose.xlu0.b32.start [1/16] %v650, 128
      %2607 = vxpose.xlu0.b32.cont [2/16] %v653, 128
      %2608 = vxpose.xlu0.b32.cont [3/16] %v656, 128
      %2609 = vxpose.xlu0.b32.cont [4/16] %v659, 128
      %2610 = vxpose.xlu0.b32.cont [5/16] 0.0, 128
      %2611 = vxpose.xlu0.b32.cont [6/16] 0.0, 128
      %2612 = vxpose.xlu0.b32.cont [7/16] 0.0, 128
      %2613 = vxpose.xlu0.b32.cont [8/16] 0.0, 128
      %2614 = vxpose.xlu0.b32.cont [9/16] 0.0, 128
      %2615 = vxpose.xlu0.b32.cont [10/16] 0.0, 128
      %2616 = vxpose.xlu0.b32.cont [11/16] 0.0, 128
      %2617 = vxpose.xlu0.b32.cont [12/16] 0.0, 128
      %2618 = vxpose.xlu0.b32.cont [13/16] 0.0, 128
      %2619 = vxpose.xlu0.b32.cont [14/16] 0.0, 128
      %2620 = vxpose.xlu0.b32.cont [15/16] 0.0, 128
      %2621 = vxpose.xlu0.b32.end [16/16] 0.0, 128
      %v2622 = vpop.trf.xlu0
      %v2623 = vpop.trf.xlu0
      %v2624 = vpop.trf.xlu0
      %v2625 = vpop.trf.xlu0
      %v2626 = vpop.trf.xlu0
      %v2627 = vpop.trf.xlu0
      %v2628 = vpop.trf.xlu0
      %v2629 = vpop.trf.xlu0
      %v2630 = vpop.trf.xlu0
      %v2631 = vpop.trf.xlu0
      %v2632 = vpop.trf.xlu0
      %v2633 = vpop.trf.xlu0
      %v2634 = vpop.trf.xlu0
      %v2635 = vpop.trf.xlu0
      %v2636 = vpop.trf.xlu0
      %v2637 = vpop.trf.xlu0
      %v2639 = vsel %vm254, %v2590, 0
      %v2642 = vsel %vm254, %v2591, 0
      %v2645 = vsel %vm254, %v2592, 0
      %v2648 = vsel %vm254, %v2593, 0
      %v2651 = vsel %vm254, %v2594, 0
      %v2654 = vsel %vm254, %v2595, 0
      %v2657 = vsel %vm254, %v2596, 0
      %v2660 = vsel %vm254, %v2597, 0
      %v2663 = vsel %vm254, %v2598, 0
      %v2666 = vsel %vm254, %v2599, 0
      %v2669 = vsel %vm254, %v2600, 0
      %v2672 = vsel %vm254, %v2601, 0
      %v2675 = vsel %vm254, %v2602, 0
      %v2678 = vsel %vm254, %v2603, 0
      %v2681 = vsel %vm254, %v2604, 0
      %v2684 = vsel %vm254, %v2605, 0
      %v2687 = vsel %vm254, %v2622, 0
      %v2690 = vsel %vm254, %v2623, 0
      %v2693 = vsel %vm254, %v2624, 0
      %v2696 = vsel %vm254, %v2625, 0
      %v2699 = vsel %vm254, %v2626, 0
      %v2702 = vsel %vm254, %v2627, 0
      %v2705 = vsel %vm254, %v2628, 0
      %v2708 = vsel %vm254, %v2629, 0
      %v2711 = vsel %vm254, %v2630, 0
      %v2714 = vsel %vm254, %v2631, 0
      %v2717 = vsel %vm254, %v2632, 0
      %v2720 = vsel %vm254, %v2633, 0
      %v2723 = vsel %vm254, %v2634, 0
      %v2726 = vsel %vm254, %v2635, 0
      %v2729 = vsel %vm254, %v2636, 0
      %v2732 = vsel %vm254, %v2637, 0
      %2734 = vmatpush.msra.mxu0 0.0
      %2735 = vmatpush.msra.mxu0 0.0
      %2736 = vmatpush.msra.mxu0 0.0
      %2737 = vmatpush.msra.mxu0 0.0
      %2738 = vmatpush.msra.mxu0 0.0
      %2739 = vmatpush.msra.mxu0 0.0
      %2740 = vmatpush.msra.mxu0 0.0
      %2741 = vmatpush.msra.mxu0 0.0
      %2742 = vmatpush.msra.mxu0 0.0
      %2743 = vmatpush.msra.mxu0 0.0
      %2744 = vmatpush.msra.mxu0 0.0
      %2745 = vmatpush.msra.mxu0 0.0
      %2746 = vmatpush.msra.mxu0 %v450
      %2747 = vmatpush.msra.mxu0 %v447
      %2748 = vmatpush.msra.mxu0 %v444
      %2749 = vmatpush.msra.mxu0 %v441
      %2750 = vmatmul.f32.gmra.mxu0 %v2639
      %v2751 = vpop.f32.mrf.mxu0
      %v2752 = vadd.f32 0.0, %v2751
      %2753 = vmatmul.f32.gmra.mxu0 %v2642
      %v2754 = vpop.f32.mrf.mxu0
      %v2755 = vadd.f32 0.0, %v2754
      %2756 = vmatmul.f32.gmra.mxu0 %v2645
      %v2757 = vpop.f32.mrf.mxu0
      %v2758 = vadd.f32 0.0, %v2757
      %2759 = vmatmul.f32.gmra.mxu0 %v2648
      %v2760 = vpop.f32.mrf.mxu0
      %v2761 = vadd.f32 0.0, %v2760
      %2762 = vmatmul.f32.gmra.mxu0 %v2651
      %v2763 = vpop.f32.mrf.mxu0
      %v2764 = vadd.f32 0.0, %v2763
      %2765 = vmatmul.f32.gmra.mxu0 %v2654
      %v2766 = vpop.f32.mrf.mxu0
      %v2767 = vadd.f32 0.0, %v2766
      %2768 = vmatmul.f32.gmra.mxu0 %v2657
      %v2769 = vpop.f32.mrf.mxu0
      %v2770 = vadd.f32 0.0, %v2769
      %2771 = vmatmul.f32.gmra.mxu0 %v2660
      %v2772 = vpop.f32.mrf.mxu0
      %v2773 = vadd.f32 0.0, %v2772
      %2774 = vmatmul.f32.gmra.mxu0 %v2663
      %v2775 = vpop.f32.mrf.mxu0
      %v2776 = vadd.f32 0.0, %v2775
      %2777 = vmatmul.f32.gmra.mxu0 %v2666
      %v2778 = vpop.f32.mrf.mxu0
      %v2779 = vadd.f32 0.0, %v2778
      %2780 = vmatmul.f32.gmra.mxu0 %v2669
      %v2781 = vpop.f32.mrf.mxu0
      %v2782 = vadd.f32 0.0, %v2781
      %2783 = vmatmul.f32.gmra.mxu0 %v2672
      %v2784 = vpop.f32.mrf.mxu0
      %v2785 = vadd.f32 0.0, %v2784
      %2786 = vmatmul.f32.gmra.mxu0 %v2675
      %v2787 = vpop.f32.mrf.mxu0
      %v2788 = vadd.f32 0.0, %v2787
      %2789 = vmatmul.f32.gmra.mxu0 %v2678
      %v2790 = vpop.f32.mrf.mxu0
      %v2791 = vadd.f32 0.0, %v2790
      %2792 = vmatmul.f32.gmra.mxu0 %v2681
      %v2793 = vpop.f32.mrf.mxu0
      %v2794 = vadd.f32 0.0, %v2793
      %2795 = vmatmul.f32.gmra.mxu0 %v2684
      %v2796 = vpop.f32.mrf.mxu0
      %v2797 = vadd.f32 0.0, %v2796
      %2798 = vmatmul.f32.gmra.mxu0 %v2687
      %v2799 = vpop.f32.mrf.mxu0
      %v2800 = vadd.f32 0.0, %v2799
      %2801 = vmatmul.f32.gmra.mxu0 %v2690
      %v2802 = vpop.f32.mrf.mxu0
      %v2803 = vadd.f32 0.0, %v2802
      %2804 = vmatmul.f32.gmra.mxu0 %v2693
      %v2805 = vpop.f32.mrf.mxu0
      %v2806 = vadd.f32 0.0, %v2805
      %2807 = vmatmul.f32.gmra.mxu0 %v2696
      %v2808 = vpop.f32.mrf.mxu0
      %v2809 = vadd.f32 0.0, %v2808
      %2810 = vmatmul.f32.gmra.mxu0 %v2699
      %v2811 = vpop.f32.mrf.mxu0
      %v2812 = vadd.f32 0.0, %v2811
      %2813 = vmatmul.f32.gmra.mxu0 %v2702
      %v2814 = vpop.f32.mrf.mxu0
      %v2815 = vadd.f32 0.0, %v2814
      %2816 = vmatmul.f32.gmra.mxu0 %v2705
      %v2817 = vpop.f32.mrf.mxu0
      %v2818 = vadd.f32 0.0, %v2817
      %2819 = vmatmul.f32.gmra.mxu0 %v2708
      %v2820 = vpop.f32.mrf.mxu0
      %v2821 = vadd.f32 0.0, %v2820
      %2822 = vmatmul.f32.gmra.mxu0 %v2711
      %v2823 = vpop.f32.mrf.mxu0
      %v2824 = vadd.f32 0.0, %v2823
      %2825 = vmatmul.f32.gmra.mxu0 %v2714
      %v2826 = vpop.f32.mrf.mxu0
      %v2827 = vadd.f32 0.0, %v2826
      %2828 = vmatmul.f32.gmra.mxu0 %v2717
      %v2829 = vpop.f32.mrf.mxu0
      %v2830 = vadd.f32 0.0, %v2829
      %2831 = vmatmul.f32.gmra.mxu0 %v2720
      %v2832 = vpop.f32.mrf.mxu0
      %v2833 = vadd.f32 0.0, %v2832
      %2834 = vmatmul.f32.gmra.mxu0 %v2723
      %v2835 = vpop.f32.mrf.mxu0
      %v2836 = vadd.f32 0.0, %v2835
      %2837 = vmatmul.f32.gmra.mxu0 %v2726
      %v2838 = vpop.f32.mrf.mxu0
      %v2839 = vadd.f32 0.0, %v2838
      %2840 = vmatmul.f32.gmra.mxu0 %v2729
      %v2841 = vpop.f32.mrf.mxu0
      %v2842 = vadd.f32 0.0, %v2841
      %2843 = vmatmul.f32.gmra.mxu0 %v2732
      %v2844 = vpop.f32.mrf.mxu0
      %v2845 = vadd.f32 0.0, %v2844
      %2846 = vdwg.mxu0
      %2847 = vmatpush.msra.mxu0 0.0
      %2848 = vmatpush.msra.mxu0 0.0
      %2849 = vmatpush.msra.mxu0 0.0
      %2850 = vmatpush.msra.mxu0 0.0
      %2851 = vmatpush.msra.mxu0 0.0
      %2852 = vmatpush.msra.mxu0 0.0
      %2853 = vmatpush.msra.mxu0 0.0
      %2854 = vmatpush.msra.mxu0 0.0
      %2855 = vmatpush.msra.mxu0 0.0
      %2856 = vmatpush.msra.mxu0 0.0
      %2857 = vmatpush.msra.mxu0 0.0
      %2858 = vmatpush.msra.mxu0 0.0
      %2859 = vmatpush.msra.mxu0 %v611
      %2860 = vmatpush.msra.mxu0 %v608
      %2861 = vmatpush.msra.mxu0 %v605
      %2862 = vmatpush.msra.mxu0 %v602
      %2863 = vmatmul.f32.gmra.mxu0 %v2639
      %v2864 = vpop.f32.mrf.mxu0
      %v2865 = vadd.f32 0.0, %v2864
      %2866 = vmatmul.f32.gmra.mxu0 %v2642
      %v2867 = vpop.f32.mrf.mxu0
      %v2868 = vadd.f32 0.0, %v2867
      %2869 = vmatmul.f32.gmra.mxu0 %v2645
      %v2870 = vpop.f32.mrf.mxu0
      %v2871 = vadd.f32 0.0, %v2870
      %2872 = vmatmul.f32.gmra.mxu0 %v2648
      %v2873 = vpop.f32.mrf.mxu0
      %v2874 = vadd.f32 0.0, %v2873
      %2875 = vmatmul.f32.gmra.mxu0 %v2651
      %v2876 = vpop.f32.mrf.mxu0
      %v2877 = vadd.f32 0.0, %v2876
      %2878 = vmatmul.f32.gmra.mxu0 %v2654
      %v2879 = vpop.f32.mrf.mxu0
      %v2880 = vadd.f32 0.0, %v2879
      %2881 = vmatmul.f32.gmra.mxu0 %v2657
      %v2882 = vpop.f32.mrf.mxu0
      %v2883 = vadd.f32 0.0, %v2882
      %2884 = vmatmul.f32.gmra.mxu0 %v2660
      %v2885 = vpop.f32.mrf.mxu0
      %v2886 = vadd.f32 0.0, %v2885
      %2887 = vmatmul.f32.gmra.mxu0 %v2663
      %v2888 = vpop.f32.mrf.mxu0
      %v2889 = vadd.f32 0.0, %v2888
      %2890 = vmatmul.f32.gmra.mxu0 %v2666
      %v2891 = vpop.f32.mrf.mxu0
      %v2892 = vadd.f32 0.0, %v2891
      %2893 = vmatmul.f32.gmra.mxu0 %v2669
      %v2894 = vpop.f32.mrf.mxu0
      %v2895 = vadd.f32 0.0, %v2894
      %2896 = vmatmul.f32.gmra.mxu0 %v2672
      %v2897 = vpop.f32.mrf.mxu0
      %v2898 = vadd.f32 0.0, %v2897
      %2899 = vmatmul.f32.gmra.mxu0 %v2675
      %v2900 = vpop.f32.mrf.mxu0
      %v2901 = vadd.f32 0.0, %v2900
      %2902 = vmatmul.f32.gmra.mxu0 %v2678
      %v2903 = vpop.f32.mrf.mxu0
      %v2904 = vadd.f32 0.0, %v2903
      %2905 = vmatmul.f32.gmra.mxu0 %v2681
      %v2906 = vpop.f32.mrf.mxu0
      %v2907 = vadd.f32 0.0, %v2906
      %2908 = vmatmul.f32.gmra.mxu0 %v2684
      %v2909 = vpop.f32.mrf.mxu0
      %v2910 = vadd.f32 0.0, %v2909
      %2911 = vmatmul.f32.gmra.mxu0 %v2687
      %v2912 = vpop.f32.mrf.mxu0
      %v2913 = vadd.f32 0.0, %v2912
      %2914 = vmatmul.f32.gmra.mxu0 %v2690
      %v2915 = vpop.f32.mrf.mxu0
      %v2916 = vadd.f32 0.0, %v2915
      %2917 = vmatmul.f32.gmra.mxu0 %v2693
      %v2918 = vpop.f32.mrf.mxu0
      %v2919 = vadd.f32 0.0, %v2918
      %2920 = vmatmul.f32.gmra.mxu0 %v2696
      %v2921 = vpop.f32.mrf.mxu0
      %v2922 = vadd.f32 0.0, %v2921
      %2923 = vmatmul.f32.gmra.mxu0 %v2699
      %v2924 = vpop.f32.mrf.mxu0
      %v2925 = vadd.f32 0.0, %v2924
      %2926 = vmatmul.f32.gmra.mxu0 %v2702
      %v2927 = vpop.f32.mrf.mxu0
      %v2928 = vadd.f32 0.0, %v2927
      %2929 = vmatmul.f32.gmra.mxu0 %v2705
      %v2930 = vpop.f32.mrf.mxu0
      %v2931 = vadd.f32 0.0, %v2930
      %2932 = vmatmul.f32.gmra.mxu0 %v2708
      %v2933 = vpop.f32.mrf.mxu0
      %v2934 = vadd.f32 0.0, %v2933
      %2935 = vmatmul.f32.gmra.mxu0 %v2711
      %v2936 = vpop.f32.mrf.mxu0
      %v2937 = vadd.f32 0.0, %v2936
      %2938 = vmatmul.f32.gmra.mxu0 %v2714
      %v2939 = vpop.f32.mrf.mxu0
      %v2940 = vadd.f32 0.0, %v2939
      %2941 = vmatmul.f32.gmra.mxu0 %v2717
      %v2942 = vpop.f32.mrf.mxu0
      %v2943 = vadd.f32 0.0, %v2942
      %2944 = vmatmul.f32.gmra.mxu0 %v2720
      %v2945 = vpop.f32.mrf.mxu0
      %v2946 = vadd.f32 0.0, %v2945
      %2947 = vmatmul.f32.gmra.mxu0 %v2723
      %v2948 = vpop.f32.mrf.mxu0
      %v2949 = vadd.f32 0.0, %v2948
      %2950 = vmatmul.f32.gmra.mxu0 %v2726
      %v2951 = vpop.f32.mrf.mxu0
      %v2952 = vadd.f32 0.0, %v2951
      %2953 = vmatmul.f32.gmra.mxu0 %v2729
      %v2954 = vpop.f32.mrf.mxu0
      %v2955 = vadd.f32 0.0, %v2954
      %2956 = vmatmul.f32.gmra.mxu0 %v2732
      %v2957 = vpop.f32.mrf.mxu0
      %v2958 = vadd.f32 0.0, %v2957
      %2959 = vdwg.mxu0
      %v2960 = vmax.f32 %v2752, %v2758
      %v2961 = vmax.f32 %v2755, %v2761
      %v2962 = vmax.f32 %v2960, %v2764
      %v2963 = vmax.f32 %v2961, %v2767
      %v2964 = vmax.f32 %v2962, %v2770
      %v2965 = vmax.f32 %v2963, %v2773
      %v2966 = vmax.f32 %v2964, %v2776
      %v2967 = vmax.f32 %v2965, %v2779
      %v2968 = vmax.f32 %v2966, %v2782
      %v2969 = vmax.f32 %v2967, %v2785
      %v2970 = vmax.f32 %v2968, %v2788
      %v2971 = vmax.f32 %v2969, %v2791
      %v2972 = vmax.f32 %v2970, %v2794
      %v2973 = vmax.f32 %v2971, %v2797
      %v2974 = vmax.f32 %v2972, %v2800
      %v2975 = vmax.f32 %v2973, %v2803
      %v2976 = vmax.f32 %v2974, %v2806
      %v2977 = vmax.f32 %v2975, %v2809
      %v2978 = vmax.f32 %v2976, %v2812
      %v2979 = vmax.f32 %v2977, %v2815
      %v2980 = vmax.f32 %v2978, %v2818
      %v2981 = vmax.f32 %v2979, %v2821
      %v2982 = vmax.f32 %v2980, %v2824
      %v2983 = vmax.f32 %v2981, %v2827
      %v2984 = vmax.f32 %v2982, %v2830
      %v2985 = vmax.f32 %v2983, %v2833
      %v2986 = vmax.f32 %v2984, %v2836
      %v2987 = vmax.f32 %v2985, %v2839
      %v2988 = vmax.f32 %v2986, %v2842
      %v2989 = vmax.f32 %v2987, %v2845
      %v2990 = vmax.f32 %v2988, %v2989
      %v2991 = vrot.slane %v2990, 4
      %v2992 = vmax.f32 %v2990, %v2991
      %v2993 = vrot.slane %v2992, 2
      %v2994 = vmax.f32 %v2992, %v2993
      %v2995 = vrot.slane %v2994, 1
      %v2996 = vmax.f32 %v2994, %v2995
      %v2997 = vmax.f32 %v2865, %v2871
      %v2998 = vmax.f32 %v2868, %v2874
      %v2999 = vmax.f32 %v2997, %v2877
      %v3000 = vmax.f32 %v2998, %v2880
      %v3001 = vmax.f32 %v2999, %v2883
      %v3002 = vmax.f32 %v3000, %v2886
      %v3003 = vmax.f32 %v3001, %v2889
      %v3004 = vmax.f32 %v3002, %v2892
      %v3005 = vmax.f32 %v3003, %v2895
      %v3006 = vmax.f32 %v3004, %v2898
      %v3007 = vmax.f32 %v3005, %v2901
      %v3008 = vmax.f32 %v3006, %v2904
      %v3009 = vmax.f32 %v3007, %v2907
      %v3010 = vmax.f32 %v3008, %v2910
      %v3011 = vmax.f32 %v3009, %v2913
      %v3012 = vmax.f32 %v3010, %v2916
      %v3013 = vmax.f32 %v3011, %v2919
      %v3014 = vmax.f32 %v3012, %v2922
      %v3015 = vmax.f32 %v3013, %v2925
      %v3016 = vmax.f32 %v3014, %v2928
      %v3017 = vmax.f32 %v3015, %v2931
      %v3018 = vmax.f32 %v3016, %v2934
      %v3019 = vmax.f32 %v3017, %v2937
      %v3020 = vmax.f32 %v3018, %v2940
      %v3021 = vmax.f32 %v3019, %v2943
      %v3022 = vmax.f32 %v3020, %v2946
      %v3023 = vmax.f32 %v3021, %v2949
      %v3024 = vmax.f32 %v3022, %v2952
      %v3025 = vmax.f32 %v3023, %v2955
      %v3026 = vmax.f32 %v3024, %v2958
      %v3027 = vmax.f32 %v3025, %v3026
      %v3028 = vrot.slane %v3027, 4
      %v3029 = vmax.f32 %v3027, %v3028
      %v3030 = vrot.slane %v3029, 2
      %v3031 = vmax.f32 %v3029, %v3030
      %v3032 = vrot.slane %v3031, 1
      %v3033 = vmax.f32 %v3031, %v3032
      %v3034 = vsub.f32 %v2752, %v2996
      %v3035 = vsub.f32 %v2865, %v3033
      %v3036 = vsub.f32 %v2755, %v2996
      %v3037 = vsub.f32 %v2868, %v3033
      %v3038 = vsub.f32 %v2758, %v2996
      %v3039 = vsub.f32 %v2871, %v3033
      %v3040 = vsub.f32 %v2761, %v2996
      %v3041 = vsub.f32 %v2874, %v3033
      %v3042 = vsub.f32 %v2764, %v2996
      %v3043 = vsub.f32 %v2877, %v3033
      %v3044 = vsub.f32 %v2767, %v2996
      %v3045 = vsub.f32 %v2880, %v3033
      %v3046 = vsub.f32 %v2770, %v2996
      %v3047 = vsub.f32 %v2883, %v3033
      %v3048 = vsub.f32 %v2773, %v2996
      %v3049 = vsub.f32 %v2886, %v3033
      %v3050 = vsub.f32 %v2776, %v2996
      %v3051 = vsub.f32 %v2889, %v3033
      %v3052 = vsub.f32 %v2779, %v2996
      %v3053 = vsub.f32 %v2892, %v3033
      %v3054 = vsub.f32 %v2782, %v2996
      %v3055 = vsub.f32 %v2895, %v3033
      %v3056 = vsub.f32 %v2785, %v2996
      %v3057 = vsub.f32 %v2898, %v3033
      %v3058 = vsub.f32 %v2788, %v2996
      %v3059 = vsub.f32 %v2901, %v3033
      %v3060 = vsub.f32 %v2791, %v2996
      %v3061 = vsub.f32 %v2904, %v3033
      %v3062 = vsub.f32 %v2794, %v2996
      %v3063 = vsub.f32 %v2907, %v3033
      %v3064 = vsub.f32 %v2797, %v2996
      %v3065 = vsub.f32 %v2910, %v3033
      %v3066 = vsub.f32 %v2800, %v2996
      %v3067 = vsub.f32 %v2913, %v3033
      %v3068 = vsub.f32 %v2803, %v2996
      %v3069 = vsub.f32 %v2916, %v3033
      %v3070 = vsub.f32 %v2806, %v2996
      %v3071 = vsub.f32 %v2919, %v3033
      %v3072 = vsub.f32 %v2809, %v2996
      %v3073 = vsub.f32 %v2922, %v3033
      %v3074 = vsub.f32 %v2812, %v2996
      %v3075 = vsub.f32 %v2925, %v3033
      %v3076 = vsub.f32 %v2815, %v2996
      %v3077 = vsub.f32 %v2928, %v3033
      %v3078 = vsub.f32 %v2818, %v2996
      %v3079 = vsub.f32 %v2931, %v3033
      %v3080 = vsub.f32 %v2821, %v2996
      %v3081 = vsub.f32 %v2934, %v3033
      %v3082 = vsub.f32 %v2824, %v2996
      %v3083 = vsub.f32 %v2937, %v3033
      %v3084 = vsub.f32 %v2827, %v2996
      %v3085 = vsub.f32 %v2940, %v3033
      %v3086 = vsub.f32 %v2830, %v2996
      %v3087 = vsub.f32 %v2943, %v3033
      %v3088 = vsub.f32 %v2833, %v2996
      %v3089 = vsub.f32 %v2946, %v3033
      %v3090 = vsub.f32 %v2836, %v2996
      %v3091 = vsub.f32 %v2949, %v3033
      %v3092 = vsub.f32 %v2839, %v2996
      %v3093 = vsub.f32 %v2952, %v3033
      %v3094 = vsub.f32 %v2842, %v2996
      %v3095 = vsub.f32 %v2955, %v3033
      %v3096 = vsub.f32 %v2845, %v2996
      %v3097 = vsub.f32 %v2958, %v3033
      %v3098 = vmul.f32 %v3034, 1.442695
      %v3099 = vpow.pop %v3098
      %v3100 = vmul.f32 %v3035, 1.442695
      %v3101 = vpow.pop %v3100
      %v3102 = vmul.f32 %v3036, 1.442695
      %v3103 = vpow.pop %v3102
      %v3104 = vmul.f32 %v3037, 1.442695
      %v3105 = vpow.pop %v3104
      %v3106 = vmul.f32 %v3038, 1.442695
      %v3107 = vpow.pop %v3106
      %v3108 = vmul.f32 %v3039, 1.442695
      %v3109 = vpow.pop %v3108
      %v3110 = vmul.f32 %v3040, 1.442695
      %v3111 = vpow.pop %v3110
      %v3112 = vmul.f32 %v3041, 1.442695
      %v3113 = vpow.pop %v3112
      %v3114 = vmul.f32 %v3042, 1.442695
      %v3115 = vpow.pop %v3114
      %v3116 = vmul.f32 %v3043, 1.442695
      %v3117 = vpow.pop %v3116
      %v3118 = vmul.f32 %v3044, 1.442695
      %v3119 = vpow.pop %v3118
      %v3120 = vmul.f32 %v3045, 1.442695
      %v3121 = vpow.pop %v3120
      %v3122 = vmul.f32 %v3046, 1.442695
      %v3123 = vpow.pop %v3122
      %v3124 = vmul.f32 %v3047, 1.442695
      %v3125 = vpow.pop %v3124
      %v3126 = vmul.f32 %v3048, 1.442695
      %v3127 = vpow.pop %v3126
      %v3128 = vmul.f32 %v3049, 1.442695
      %v3129 = vpow.pop %v3128
      %v3130 = vmul.f32 %v3050, 1.442695
      %v3131 = vpow.pop %v3130
      %v3132 = vmul.f32 %v3051, 1.442695
      %v3133 = vpow.pop %v3132
      %v3134 = vmul.f32 %v3052, 1.442695
      %v3135 = vpow.pop %v3134
      %v3136 = vmul.f32 %v3053, 1.442695
      %v3137 = vpow.pop %v3136
      %v3138 = vmul.f32 %v3054, 1.442695
      %v3139 = vpow.pop %v3138
      %v3140 = vmul.f32 %v3055, 1.442695
      %v3141 = vpow.pop %v3140
      %v3142 = vmul.f32 %v3056, 1.442695
      %v3143 = vpow.pop %v3142
      %v3144 = vmul.f32 %v3057, 1.442695
      %v3145 = vpow.pop %v3144
      %v3146 = vmul.f32 %v3058, 1.442695
      %v3147 = vpow.pop %v3146
      %v3148 = vmul.f32 %v3059, 1.442695
      %v3149 = vpow.pop %v3148
      %v3150 = vmul.f32 %v3060, 1.442695
      %v3151 = vpow.pop %v3150
      %v3152 = vmul.f32 %v3061, 1.442695
      %v3153 = vpow.pop %v3152
      %v3154 = vmul.f32 %v3062, 1.442695
      %v3155 = vpow.pop %v3154
      %v3156 = vmul.f32 %v3063, 1.442695
      %v3157 = vpow.pop %v3156
      %v3158 = vmul.f32 %v3064, 1.442695
      %v3159 = vpow.pop %v3158
      %v3160 = vmul.f32 %v3065, 1.442695
      %v3161 = vpow.pop %v3160
      %v3162 = vmul.f32 %v3066, 1.442695
      %v3163 = vpow.pop %v3162
      %v3164 = vmul.f32 %v3067, 1.442695
      %v3165 = vpow.pop %v3164
      %v3166 = vmul.f32 %v3068, 1.442695
      %v3167 = vpow.pop %v3166
      %v3168 = vmul.f32 %v3069, 1.442695
      %v3169 = vpow.pop %v3168
      %v3170 = vmul.f32 %v3070, 1.442695
      %v3171 = vpow.pop %v3170
      %v3172 = vmul.f32 %v3071, 1.442695
      %v3173 = vpow.pop %v3172
      %v3174 = vmul.f32 %v3072, 1.442695
      %v3175 = vpow.pop %v3174
      %v3176 = vmul.f32 %v3073, 1.442695
      %v3177 = vpow.pop %v3176
      %v3178 = vmul.f32 %v3074, 1.442695
      %v3179 = vpow.pop %v3178
      %v3180 = vmul.f32 %v3075, 1.442695
      %v3181 = vpow.pop %v3180
      %v3182 = vmul.f32 %v3076, 1.442695
      %v3183 = vpow.pop %v3182
      %v3184 = vmul.f32 %v3077, 1.442695
      %v3185 = vpow.pop %v3184
      %v3186 = vmul.f32 %v3078, 1.442695
      %v3187 = vpow.pop %v3186
      %v3188 = vmul.f32 %v3079, 1.442695
      %v3189 = vpow.pop %v3188
      %v3190 = vmul.f32 %v3080, 1.442695
      %v3191 = vpow.pop %v3190
      %v3192 = vmul.f32 %v3081, 1.442695
      %v3193 = vpow.pop %v3192
      %v3194 = vmul.f32 %v3082, 1.442695
      %v3195 = vpow.pop %v3194
      %v3196 = vmul.f32 %v3083, 1.442695
      %v3197 = vpow.pop %v3196
      %v3198 = vmul.f32 %v3084, 1.442695
      %v3199 = vpow.pop %v3198
      %v3200 = vmul.f32 %v3085, 1.442695
      %v3201 = vpow.pop %v3200
      %v3202 = vmul.f32 %v3086, 1.442695
      %v3203 = vpow.pop %v3202
      %v3204 = vmul.f32 %v3087, 1.442695
      %v3205 = vpow.pop %v3204
      %v3206 = vmul.f32 %v3088, 1.442695
      %v3207 = vpow.pop %v3206
      %v3208 = vmul.f32 %v3089, 1.442695
      %v3209 = vpow.pop %v3208
      %v3210 = vmul.f32 %v3090, 1.442695
      %v3211 = vpow.pop %v3210
      %v3212 = vmul.f32 %v3091, 1.442695
      %v3213 = vpow.pop %v3212
      %v3214 = vmul.f32 %v3092, 1.442695
      %v3215 = vpow.pop %v3214
      %v3216 = vmul.f32 %v3093, 1.442695
      %v3217 = vpow.pop %v3216
      %v3218 = vmul.f32 %v3094, 1.442695
      %v3219 = vpow.pop %v3218
      %v3220 = vmul.f32 %v3095, 1.442695
      %v3221 = vpow.pop %v3220
      %v3222 = vmul.f32 %v3096, 1.442695
      %v3223 = vpow.pop %v3222
      %v3224 = vmul.f32 %v3097, 1.442695
      %v3225 = vpow.pop %v3224
      %v3226 = vadd.f32 %v3099, %v3103
      %v3227 = vadd.f32 %v3226, %v3107
      %v3228 = vadd.f32 %v3227, %v3111
      %v3229 = vadd.f32 %v3228, %v3115
      %v3230 = vadd.f32 %v3229, %v3119
      %v3231 = vadd.f32 %v3230, %v3123
      %v3232 = vadd.f32 %v3231, %v3127
      %v3233 = vadd.f32 %v3232, %v3131
      %v3234 = vadd.f32 %v3233, %v3135
      %v3235 = vadd.f32 %v3234, %v3139
      %v3236 = vadd.f32 %v3235, %v3143
      %v3237 = vadd.f32 %v3236, %v3147
      %v3238 = vadd.f32 %v3237, %v3151
      %v3239 = vadd.f32 %v3238, %v3155
      %v3240 = vadd.f32 %v3239, %v3159
      %v3241 = vadd.f32 %v3240, %v3163
      %v3242 = vadd.f32 %v3241, %v3167
      %v3243 = vadd.f32 %v3242, %v3171
      %v3244 = vadd.f32 %v3243, %v3175
      %v3245 = vadd.f32 %v3244, %v3179
      %v3246 = vadd.f32 %v3245, %v3183
      %v3247 = vadd.f32 %v3246, %v3187
      %v3248 = vadd.f32 %v3247, %v3191
      %v3249 = vadd.f32 %v3248, %v3195
      %v3250 = vadd.f32 %v3249, %v3199
      %v3251 = vadd.f32 %v3250, %v3203
      %v3252 = vadd.f32 %v3251, %v3207
      %v3253 = vadd.f32 %v3252, %v3211
      %v3254 = vadd.f32 %v3253, %v3215
      %v3255 = vadd.f32 %v3254, %v3219
      %v3256 = vadd.f32 %v3255, %v3223
      %v3257 = vrot.slane %v3256, 4
      %v3258 = vadd.f32 %v3256, %v3257
      %v3259 = vrot.slane %v3258, 2
      %v3260 = vadd.f32 %v3258, %v3259
      %v3261 = vrot.slane %v3260, 1
      %v3262 = vadd.f32 %v3260, %v3261
      %v3263 = vadd.f32 %v3101, %v3105
      %v3264 = vadd.f32 %v3263, %v3109
      %v3265 = vadd.f32 %v3264, %v3113
      %v3266 = vadd.f32 %v3265, %v3117
      %v3267 = vadd.f32 %v3266, %v3121
      %v3268 = vadd.f32 %v3267, %v3125
      %v3269 = vadd.f32 %v3268, %v3129
      %v3270 = vadd.f32 %v3269, %v3133
      %v3271 = vadd.f32 %v3270, %v3137
      %v3272 = vadd.f32 %v3271, %v3141
      %v3273 = vadd.f32 %v3272, %v3145
      %v3274 = vadd.f32 %v3273, %v3149
      %v3275 = vadd.f32 %v3274, %v3153
      %v3276 = vadd.f32 %v3275, %v3157
      %v3277 = vadd.f32 %v3276, %v3161
      %v3278 = vadd.f32 %v3277, %v3165
      %v3279 = vadd.f32 %v3278, %v3169
      %v3280 = vadd.f32 %v3279, %v3173
      %v3281 = vadd.f32 %v3280, %v3177
      %v3282 = vadd.f32 %v3281, %v3181
      %v3283 = vadd.f32 %v3282, %v3185
      %v3284 = vadd.f32 %v3283, %v3189
      %v3285 = vadd.f32 %v3284, %v3193
      %v3286 = vadd.f32 %v3285, %v3197
      %v3287 = vadd.f32 %v3286, %v3201
      %v3288 = vadd.f32 %v3287, %v3205
      %v3289 = vadd.f32 %v3288, %v3209
      %v3290 = vadd.f32 %v3289, %v3213
      %v3291 = vadd.f32 %v3290, %v3217
      %v3292 = vadd.f32 %v3291, %v3221
      %v3293 = vadd.f32 %v3292, %v3225
      %v3294 = vrot.slane %v3293, 4
      %v3295 = vadd.f32 %v3293, %v3294
      %v3296 = vrot.slane %v3295, 2
      %v3297 = vadd.f32 %v3295, %v3296
      %v3298 = vrot.slane %v3297, 1
      %v3299 = vadd.f32 %v3297, %v3298
      %3300 = vmatpush.msra.mxu0 %v3159
      %3301 = vmatpush.msra.mxu0 %v3155
      %3302 = vmatpush.msra.mxu0 %v3151
      %3303 = vmatpush.msra.mxu0 %v3147
      %3304 = vmatpush.msra.mxu0 %v3143
      %3305 = vmatpush.msra.mxu0 %v3139
      %3306 = vmatpush.msra.mxu0 %v3135
      %3307 = vmatpush.msra.mxu0 %v3131
      %3308 = vmatpush.msra.mxu0 %v3127
      %3309 = vmatpush.msra.mxu0 %v3123
      %3310 = vmatpush.msra.mxu0 %v3119
      %3311 = vmatpush.msra.mxu0 %v3115
      %3312 = vmatpush.msra.mxu0 %v3111
      %3313 = vmatpush.msra.mxu0 %v3107
      %3314 = vmatpush.msra.mxu0 %v3103
      %3315 = vmatpush.msra.mxu0 %v3099
      %3316 = vmatmul.f32.gmra.mxu0 %v537
      %v3317 = vpop.f32.mrf.mxu0
      %v3318 = vadd.f32 0.0, %v3317
      %3319 = vmatmul.f32.gmra.mxu0 %v540
      %v3320 = vpop.f32.mrf.mxu0
      %v3321 = vadd.f32 0.0, %v3320
      %3322 = vmatmul.f32.gmra.mxu0 %v543
      %v3323 = vpop.f32.mrf.mxu0
      %v3324 = vadd.f32 0.0, %v3323
      %3325 = vmatmul.f32.gmra.mxu0 %v546
      %v3326 = vpop.f32.mrf.mxu0
      %v3327 = vadd.f32 0.0, %v3326
      %3328 = vdwg.mxu0
      %3329 = vmatpush.msra.mxu0 %v3223
      %3330 = vmatpush.msra.mxu0 %v3219
      %3331 = vmatpush.msra.mxu0 %v3215
      %3332 = vmatpush.msra.mxu0 %v3211
      %3333 = vmatpush.msra.mxu0 %v3207
      %3334 = vmatpush.msra.mxu0 %v3203
      %3335 = vmatpush.msra.mxu0 %v3199
      %3336 = vmatpush.msra.mxu0 %v3195
      %3337 = vmatpush.msra.mxu0 %v3191
      %3338 = vmatpush.msra.mxu0 %v3187
      %3339 = vmatpush.msra.mxu0 %v3183
      %3340 = vmatpush.msra.mxu0 %v3179
      %3341 = vmatpush.msra.mxu0 %v3175
      %3342 = vmatpush.msra.mxu0 %v3171
      %3343 = vmatpush.msra.mxu0 %v3167
      %3344 = vmatpush.msra.mxu0 %v3163
      %3345 = vmatmul.f32.gmra.mxu0 %v698
      %v3346 = vpop.f32.mrf.mxu0
      %v3347 = vadd.f32 %v3318, %v3346
      %3348 = vmatmul.f32.gmra.mxu0 %v701
      %v3349 = vpop.f32.mrf.mxu0
      %v3350 = vadd.f32 %v3321, %v3349
      %3351 = vmatmul.f32.gmra.mxu0 %v704
      %v3352 = vpop.f32.mrf.mxu0
      %v3353 = vadd.f32 %v3324, %v3352
      %3354 = vmatmul.f32.gmra.mxu0 %v707
      %v3355 = vpop.f32.mrf.mxu0
      %v3356 = vadd.f32 %v3327, %v3355
      %3357 = vdwg.mxu0
      %3358 = vmatpush.msra.mxu0 %v3161
      %3359 = vmatpush.msra.mxu0 %v3157
      %3360 = vmatpush.msra.mxu0 %v3153
      %3361 = vmatpush.msra.mxu0 %v3149
      %3362 = vmatpush.msra.mxu0 %v3145
      %3363 = vmatpush.msra.mxu0 %v3141
      %3364 = vmatpush.msra.mxu0 %v3137
      %3365 = vmatpush.msra.mxu0 %v3133
      %3366 = vmatpush.msra.mxu0 %v3129
      %3367 = vmatpush.msra.mxu0 %v3125
      %3368 = vmatpush.msra.mxu0 %v3121
      %3369 = vmatpush.msra.mxu0 %v3117
      %3370 = vmatpush.msra.mxu0 %v3113
      %3371 = vmatpush.msra.mxu0 %v3109
      %3372 = vmatpush.msra.mxu0 %v3105
      %3373 = vmatpush.msra.mxu0 %v3101
      %3374 = vmatmul.f32.gmra.mxu0 %v537
      %v3375 = vpop.f32.mrf.mxu0
      %v3376 = vadd.f32 0.0, %v3375
      %3377 = vmatmul.f32.gmra.mxu0 %v540
      %v3378 = vpop.f32.mrf.mxu0
      %v3379 = vadd.f32 0.0, %v3378
      %3380 = vmatmul.f32.gmra.mxu0 %v543
      %v3381 = vpop.f32.mrf.mxu0
      %v3382 = vadd.f32 0.0, %v3381
      %3383 = vmatmul.f32.gmra.mxu0 %v546
      %v3384 = vpop.f32.mrf.mxu0
      %v3385 = vadd.f32 0.0, %v3384
      %3386 = vdwg.mxu0
      %3387 = vmatpush.msra.mxu0 %v3225
      %3388 = vmatpush.msra.mxu0 %v3221
      %3389 = vmatpush.msra.mxu0 %v3217
      %3390 = vmatpush.msra.mxu0 %v3213
      %3391 = vmatpush.msra.mxu0 %v3209
      %3392 = vmatpush.msra.mxu0 %v3205
      %3393 = vmatpush.msra.mxu0 %v3201
      %3394 = vmatpush.msra.mxu0 %v3197
      %3395 = vmatpush.msra.mxu0 %v3193
      %3396 = vmatpush.msra.mxu0 %v3189
      %3397 = vmatpush.msra.mxu0 %v3185
      %3398 = vmatpush.msra.mxu0 %v3181
      %3399 = vmatpush.msra.mxu0 %v3177
      %3400 = vmatpush.msra.mxu0 %v3173
      %3401 = vmatpush.msra.mxu0 %v3169
      %3402 = vmatpush.msra.mxu0 %v3165
      %3403 = vmatmul.f32.gmra.mxu0 %v698
      %v3404 = vpop.f32.mrf.mxu0
      %v3405 = vadd.f32 %v3376, %v3404
      %3406 = vmatmul.f32.gmra.mxu0 %v701
      %v3407 = vpop.f32.mrf.mxu0
      %v3408 = vadd.f32 %v3379, %v3407
      %3409 = vmatmul.f32.gmra.mxu0 %v704
      %v3410 = vpop.f32.mrf.mxu0
      %v3411 = vadd.f32 %v3382, %v3410
      %3412 = vmatmul.f32.gmra.mxu0 %v707
      %v3413 = vpop.f32.mrf.mxu0
      %v3414 = vadd.f32 %v3385, %v3413
      %3415 = vdwg.mxu0
      %v3416 = vrcp.pop %v3262
      %v3417 = vrcp.pop %v3299
      %v3418 = vmul.f32 %v3347, %v3416
      %v3419 = vmul.f32 %v3405, %v3417
      %v3420 = vmul.f32 %v3350, %v3416
      %v3421 = vmul.f32 %v3408, %v3417
      %v3422 = vmul.f32 %v3353, %v3416
      %v3423 = vmul.f32 %v3411, %v3417
      %v3424 = vmul.f32 %v3356, %v3416
      %v3425 = vmul.f32 %v3414, %v3417
      %s3426 = scalar_lea.vmem %s2, 64
      %v3427 = vld [vmem:[%s3426] sm:$0xff]
      %v3428 = vld [vmem:[%s3426 + $0x8] sm:$0xff]
      %v3429 = vld [vmem:[%s3426 + $0x10] sm:$0xff]
      %v3430 = vld [vmem:[%s3426 + $0x18] sm:$0xff]
      %v3432 = vsel %vm254, %v3427, 0
      %v3435 = vsel %vm254, %v3428, 0
      %v3438 = vsel %vm254, %v3429, 0
      %v3441 = vsel %vm254, %v3430, 0
      %3443 = vmatpush.msra.mxu0 0.0
      %3444 = vmatpush.msra.mxu0 0.0
      %3445 = vmatpush.msra.mxu0 0.0
      %3446 = vmatpush.msra.mxu0 0.0
      %3447 = vmatpush.msra.mxu0 0.0
      %3448 = vmatpush.msra.mxu0 0.0
      %3449 = vmatpush.msra.mxu0 0.0
      %3450 = vmatpush.msra.mxu0 0.0
      %3451 = vmatpush.msra.mxu0 0.0
      %3452 = vmatpush.msra.mxu0 0.0
      %3453 = vmatpush.msra.mxu0 0.0
      %3454 = vmatpush.msra.mxu0 0.0
      %3455 = vmatpush.msra.mxu0 %v3424
      %3456 = vmatpush.msra.mxu0 %v3422
      %3457 = vmatpush.msra.mxu0 %v3420
      %3458 = vmatpush.msra.mxu0 %v3418
      %3459 = vmatmul.f32.gmra.mxu0 %v3432
      %v3460 = vpop.f32.mrf.mxu0
      %v3461 = vadd.f32 0.0, %v3460
      %3462 = vmatmul.f32.gmra.mxu0 %v3435
      %v3463 = vpop.f32.mrf.mxu0
      %v3464 = vadd.f32 0.0, %v3463
      %3465 = vmatmul.f32.gmra.mxu0 %v3438
      %v3466 = vpop.f32.mrf.mxu0
      %v3467 = vadd.f32 0.0, %v3466
      %3468 = vmatmul.f32.gmra.mxu0 %v3441
      %v3469 = vpop.f32.mrf.mxu0
      %v3470 = vadd.f32 0.0, %v3469
      %3471 = vdwg.mxu0
      %3472 = vmatpush.msra.mxu0 0.0
      %3473 = vmatpush.msra.mxu0 0.0
      %3474 = vmatpush.msra.mxu0 0.0
      %3475 = vmatpush.msra.mxu0 0.0
      %3476 = vmatpush.msra.mxu0 0.0
      %3477 = vmatpush.msra.mxu0 0.0
      %3478 = vmatpush.msra.mxu0 0.0
      %3479 = vmatpush.msra.mxu0 0.0
      %3480 = vmatpush.msra.mxu0 0.0
      %3481 = vmatpush.msra.mxu0 0.0
      %3482 = vmatpush.msra.mxu0 0.0
      %3483 = vmatpush.msra.mxu0 0.0
      %3484 = vmatpush.msra.mxu0 %v3425
      %3485 = vmatpush.msra.mxu0 %v3423
      %3486 = vmatpush.msra.mxu0 %v3421
      %3487 = vmatpush.msra.mxu0 %v3419
      %3488 = vmatmul.f32.gmra.mxu0 %v3432
      %v3489 = vpop.f32.mrf.mxu0
      %v3490 = vadd.f32 0.0, %v3489
      %3491 = vmatmul.f32.gmra.mxu0 %v3435
      %v3492 = vpop.f32.mrf.mxu0
      %v3493 = vadd.f32 0.0, %v3492
      %3494 = vmatmul.f32.gmra.mxu0 %v3438
      %v3495 = vpop.f32.mrf.mxu0
      %v3496 = vadd.f32 0.0, %v3495
      %3497 = vmatmul.f32.gmra.mxu0 %v3441
      %v3498 = vpop.f32.mrf.mxu0
      %v3499 = vadd.f32 0.0, %v3498
      %3500 = vdwg.mxu0
      %v3501 = vadd.f32 %v2534, %v3461
      %v3502 = vadd.f32 %v2563, %v3490
      %v3503 = vadd.f32 %v2537, %v3464
      %v3504 = vadd.f32 %v2566, %v3493
      %v3505 = vadd.f32 %v2540, %v3467
      %v3506 = vadd.f32 %v2569, %v3496
      %v3507 = vadd.f32 %v2543, %v3470
      %v3508 = vadd.f32 %v2572, %v3499
      %3509 = vxpose.xlu0.b32.start [1/16] %v501, 128
      %3510 = vxpose.xlu0.b32.cont [2/16] %v504, 128
      %3511 = vxpose.xlu0.b32.cont [3/16] %v507, 128
      %3512 = vxpose.xlu0.b32.cont [4/16] %v510, 128
      %3513 = vxpose.xlu0.b32.cont [5/16] 0.0, 128
      %3514 = vxpose.xlu0.b32.cont [6/16] 0.0, 128
      %3515 = vxpose.xlu0.b32.cont [7/16] 0.0, 128
      %3516 = vxpose.xlu0.b32.cont [8/16] 0.0, 128
      %3517 = vxpose.xlu0.b32.cont [9/16] 0.0, 128
      %3518 = vxpose.xlu0.b32.cont [10/16] 0.0, 128
      %3519 = vxpose.xlu0.b32.cont [11/16] 0.0, 128
      %3520 = vxpose.xlu0.b32.cont [12/16] 0.0, 128
      %3521 = vxpose.xlu0.b32.cont [13/16] 0.0, 128
      %3522 = vxpose.xlu0.b32.cont [14/16] 0.0, 128
      %3523 = vxpose.xlu0.b32.cont [15/16] 0.0, 128
      %3524 = vxpose.xlu0.b32.end [16/16] 0.0, 128
      %v3525 = vpop.trf.xlu0
      %v3526 = vpop.trf.xlu0
      %v3527 = vpop.trf.xlu0
      %v3528 = vpop.trf.xlu0
      %v3529 = vpop.trf.xlu0
      %v3530 = vpop.trf.xlu0
      %v3531 = vpop.trf.xlu0
      %v3532 = vpop.trf.xlu0
      %v3533 = vpop.trf.xlu0
      %v3534 = vpop.trf.xlu0
      %v3535 = vpop.trf.xlu0
      %v3536 = vpop.trf.xlu0
      %v3537 = vpop.trf.xlu0
      %v3538 = vpop.trf.xlu0
      %v3539 = vpop.trf.xlu0
      %v3540 = vpop.trf.xlu0
      %3541 = vxpose.xlu0.b32.start [1/16] %v662, 128
      %3542 = vxpose.xlu0.b32.cont [2/16] %v665, 128
      %3543 = vxpose.xlu0.b32.cont [3/16] %v668, 128
      %3544 = vxpose.xlu0.b32.cont [4/16] %v671, 128
      %3545 = vxpose.xlu0.b32.cont [5/16] 0.0, 128
      %3546 = vxpose.xlu0.b32.cont [6/16] 0.0, 128
      %3547 = vxpose.xlu0.b32.cont [7/16] 0.0, 128
      %3548 = vxpose.xlu0.b32.cont [8/16] 0.0, 128
      %3549 = vxpose.xlu0.b32.cont [9/16] 0.0, 128
      %3550 = vxpose.xlu0.b32.cont [10/16] 0.0, 128
      %3551 = vxpose.xlu0.b32.cont [11/16] 0.0, 128
      %3552 = vxpose.xlu0.b32.cont [12/16] 0.0, 128
      %3553 = vxpose.xlu0.b32.cont [13/16] 0.0, 128
      %3554 = vxpose.xlu0.b32.cont [14/16] 0.0, 128
      %3555 = vxpose.xlu0.b32.cont [15/16] 0.0, 128
      %3556 = vxpose.xlu0.b32.end [16/16] 0.0, 128
      %v3557 = vpop.trf.xlu0
      %v3558 = vpop.trf.xlu0
      %v3559 = vpop.trf.xlu0
      %v3560 = vpop.trf.xlu0
      %v3561 = vpop.trf.xlu0
      %v3562 = vpop.trf.xlu0
      %v3563 = vpop.trf.xlu0
      %v3564 = vpop.trf.xlu0
      %v3565 = vpop.trf.xlu0
      %v3566 = vpop.trf.xlu0
      %v3567 = vpop.trf.xlu0
      %v3568 = vpop.trf.xlu0
      %v3569 = vpop.trf.xlu0
      %v3570 = vpop.trf.xlu0
      %v3571 = vpop.trf.xlu0
      %v3572 = vpop.trf.xlu0
      %v3574 = vsel %vm254, %v3525, 0
      %v3577 = vsel %vm254, %v3526, 0
      %v3580 = vsel %vm254, %v3527, 0
      %v3583 = vsel %vm254, %v3528, 0
      %v3586 = vsel %vm254, %v3529, 0
      %v3589 = vsel %vm254, %v3530, 0
      %v3592 = vsel %vm254, %v3531, 0
      %v3595 = vsel %vm254, %v3532, 0
      %v3598 = vsel %vm254, %v3533, 0
      %v3601 = vsel %vm254, %v3534, 0
      %v3604 = vsel %vm254, %v3535, 0
      %v3607 = vsel %vm254, %v3536, 0
      %v3610 = vsel %vm254, %v3537, 0
      %v3613 = vsel %vm254, %v3538, 0
      %v3616 = vsel %vm254, %v3539, 0
      %v3619 = vsel %vm254, %v3540, 0
      %v3622 = vsel %vm254, %v3557, 0
      %v3625 = vsel %vm254, %v3558, 0
      %v3628 = vsel %vm254, %v3559, 0
      %v3631 = vsel %vm254, %v3560, 0
      %v3634 = vsel %vm254, %v3561, 0
      %v3637 = vsel %vm254, %v3562, 0
      %v3640 = vsel %vm254, %v3563, 0
      %v3643 = vsel %vm254, %v3564, 0
      %v3646 = vsel %vm254, %v3565, 0
      %v3649 = vsel %vm254, %v3566, 0
      %v3652 = vsel %vm254, %v3567, 0
      %v3655 = vsel %vm254, %v3568, 0
      %v3658 = vsel %vm254, %v3569, 0
      %v3661 = vsel %vm254, %v3570, 0
      %v3664 = vsel %vm254, %v3571, 0
      %v3667 = vsel %vm254, %v3572, 0
      %3669 = vmatpush.msra.mxu0 0.0
      %3670 = vmatpush.msra.mxu0 0.0
      %3671 = vmatpush.msra.mxu0 0.0
      %3672 = vmatpush.msra.mxu0 0.0
      %3673 = vmatpush.msra.mxu0 0.0
      %3674 = vmatpush.msra.mxu0 0.0
      %3675 = vmatpush.msra.mxu0 0.0
      %3676 = vmatpush.msra.mxu0 0.0
      %3677 = vmatpush.msra.mxu0 0.0
      %3678 = vmatpush.msra.mxu0 0.0
      %3679 = vmatpush.msra.mxu0 0.0
      %3680 = vmatpush.msra.mxu0 0.0
      %3681 = vmatpush.msra.mxu0 %v462
      %3682 = vmatpush.msra.mxu0 %v459
      %3683 = vmatpush.msra.mxu0 %v456
      %3684 = vmatpush.msra.mxu0 %v453
      %3685 = vmatmul.f32.gmra.mxu0 %v3574
      %v3686 = vpop.f32.mrf.mxu0
      %v3687 = vadd.f32 0.0, %v3686
      %3688 = vmatmul.f32.gmra.mxu0 %v3577
      %v3689 = vpop.f32.mrf.mxu0
      %v3690 = vadd.f32 0.0, %v3689
      %3691 = vmatmul.f32.gmra.mxu0 %v3580
      %v3692 = vpop.f32.mrf.mxu0
      %v3693 = vadd.f32 0.0, %v3692
      %3694 = vmatmul.f32.gmra.mxu0 %v3583
      %v3695 = vpop.f32.mrf.mxu0
      %v3696 = vadd.f32 0.0, %v3695
      %3697 = vmatmul.f32.gmra.mxu0 %v3586
      %v3698 = vpop.f32.mrf.mxu0
      %v3699 = vadd.f32 0.0, %v3698
      %3700 = vmatmul.f32.gmra.mxu0 %v3589
      %v3701 = vpop.f32.mrf.mxu0
      %v3702 = vadd.f32 0.0, %v3701
      %3703 = vmatmul.f32.gmra.mxu0 %v3592
      %v3704 = vpop.f32.mrf.mxu0
      %v3705 = vadd.f32 0.0, %v3704
      %3706 = vmatmul.f32.gmra.mxu0 %v3595
      %v3707 = vpop.f32.mrf.mxu0
      %v3708 = vadd.f32 0.0, %v3707
      %3709 = vmatmul.f32.gmra.mxu0 %v3598
      %v3710 = vpop.f32.mrf.mxu0
      %v3711 = vadd.f32 0.0, %v3710
      %3712 = vmatmul.f32.gmra.mxu0 %v3601
      %v3713 = vpop.f32.mrf.mxu0
      %v3714 = vadd.f32 0.0, %v3713
      %3715 = vmatmul.f32.gmra.mxu0 %v3604
      %v3716 = vpop.f32.mrf.mxu0
      %v3717 = vadd.f32 0.0, %v3716
      %3718 = vmatmul.f32.gmra.mxu0 %v3607
      %v3719 = vpop.f32.mrf.mxu0
      %v3720 = vadd.f32 0.0, %v3719
      %3721 = vmatmul.f32.gmra.mxu0 %v3610
      %v3722 = vpop.f32.mrf.mxu0
      %v3723 = vadd.f32 0.0, %v3722
      %3724 = vmatmul.f32.gmra.mxu0 %v3613
      %v3725 = vpop.f32.mrf.mxu0
      %v3726 = vadd.f32 0.0, %v3725
      %3727 = vmatmul.f32.gmra.mxu0 %v3616
      %v3728 = vpop.f32.mrf.mxu0
      %v3729 = vadd.f32 0.0, %v3728
      %3730 = vmatmul.f32.gmra.mxu0 %v3619
      %v3731 = vpop.f32.mrf.mxu0
      %v3732 = vadd.f32 0.0, %v3731
      %3733 = vmatmul.f32.gmra.mxu0 %v3622
      %v3734 = vpop.f32.mrf.mxu0
      %v3735 = vadd.f32 0.0, %v3734
      %3736 = vmatmul.f32.gmra.mxu0 %v3625
      %v3737 = vpop.f32.mrf.mxu0
      %v3738 = vadd.f32 0.0, %v3737
      %3739 = vmatmul.f32.gmra.mxu0 %v3628
      %v3740 = vpop.f32.mrf.mxu0
      %v3741 = vadd.f32 0.0, %v3740
      %3742 = vmatmul.f32.gmra.mxu0 %v3631
      %v3743 = vpop.f32.mrf.mxu0
      %v3744 = vadd.f32 0.0, %v3743
      %3745 = vmatmul.f32.gmra.mxu0 %v3634
      %v3746 = vpop.f32.mrf.mxu0
      %v3747 = vadd.f32 0.0, %v3746
      %3748 = vmatmul.f32.gmra.mxu0 %v3637
      %v3749 = vpop.f32.mrf.mxu0
      %v3750 = vadd.f32 0.0, %v3749
      %3751 = vmatmul.f32.gmra.mxu0 %v3640
      %v3752 = vpop.f32.mrf.mxu0
      %v3753 = vadd.f32 0.0, %v3752
      %3754 = vmatmul.f32.gmra.mxu0 %v3643
      %v3755 = vpop.f32.mrf.mxu0
      %v3756 = vadd.f32 0.0, %v3755
      %3757 = vmatmul.f32.gmra.mxu0 %v3646
      %v3758 = vpop.f32.mrf.mxu0
      %v3759 = vadd.f32 0.0, %v3758
      %3760 = vmatmul.f32.gmra.mxu0 %v3649
      %v3761 = vpop.f32.mrf.mxu0
      %v3762 = vadd.f32 0.0, %v3761
      %3763 = vmatmul.f32.gmra.mxu0 %v3652
      %v3764 = vpop.f32.mrf.mxu0
      %v3765 = vadd.f32 0.0, %v3764
      %3766 = vmatmul.f32.gmra.mxu0 %v3655
      %v3767 = vpop.f32.mrf.mxu0
      %v3768 = vadd.f32 0.0, %v3767
      %3769 = vmatmul.f32.gmra.mxu0 %v3658
      %v3770 = vpop.f32.mrf.mxu0
      %v3771 = vadd.f32 0.0, %v3770
      %3772 = vmatmul.f32.gmra.mxu0 %v3661
      %v3773 = vpop.f32.mrf.mxu0
      %v3774 = vadd.f32 0.0, %v3773
      %3775 = vmatmul.f32.gmra.mxu0 %v3664
      %v3776 = vpop.f32.mrf.mxu0
      %v3777 = vadd.f32 0.0, %v3776
      %3778 = vmatmul.f32.gmra.mxu0 %v3667
      %v3779 = vpop.f32.mrf.mxu0
      %v3780 = vadd.f32 0.0, %v3779
      %3781 = vdwg.mxu0
      %3782 = vmatpush.msra.mxu0 0.0
      %3783 = vmatpush.msra.mxu0 0.0
      %3784 = vmatpush.msra.mxu0 0.0
      %3785 = vmatpush.msra.mxu0 0.0
      %3786 = vmatpush.msra.mxu0 0.0
      %3787 = vmatpush.msra.mxu0 0.0
      %3788 = vmatpush.msra.mxu0 0.0
      %3789 = vmatpush.msra.mxu0 0.0
      %3790 = vmatpush.msra.mxu0 0.0
      %3791 = vmatpush.msra.mxu0 0.0
      %3792 = vmatpush.msra.mxu0 0.0
      %3793 = vmatpush.msra.mxu0 0.0
      %3794 = vmatpush.msra.mxu0 %v623
      %3795 = vmatpush.msra.mxu0 %v620
      %3796 = vmatpush.msra.mxu0 %v617
      %3797 = vmatpush.msra.mxu0 %v614
      %3798 = vmatmul.f32.gmra.mxu0 %v3574
      %v3799 = vpop.f32.mrf.mxu0
      %v3800 = vadd.f32 0.0, %v3799
      %3801 = vmatmul.f32.gmra.mxu0 %v3577
      %v3802 = vpop.f32.mrf.mxu0
      %v3803 = vadd.f32 0.0, %v3802
      %3804 = vmatmul.f32.gmra.mxu0 %v3580
      %v3805 = vpop.f32.mrf.mxu0
      %v3806 = vadd.f32 0.0, %v3805
      %3807 = vmatmul.f32.gmra.mxu0 %v3583
      %v3808 = vpop.f32.mrf.mxu0
      %v3809 = vadd.f32 0.0, %v3808
      %3810 = vmatmul.f32.gmra.mxu0 %v3586
      %v3811 = vpop.f32.mrf.mxu0
      %v3812 = vadd.f32 0.0, %v3811
      %3813 = vmatmul.f32.gmra.mxu0 %v3589
      %v3814 = vpop.f32.mrf.mxu0
      %v3815 = vadd.f32 0.0, %v3814
      %3816 = vmatmul.f32.gmra.mxu0 %v3592
      %v3817 = vpop.f32.mrf.mxu0
      %v3818 = vadd.f32 0.0, %v3817
      %3819 = vmatmul.f32.gmra.mxu0 %v3595
      %v3820 = vpop.f32.mrf.mxu0
      %v3821 = vadd.f32 0.0, %v3820
      %3822 = vmatmul.f32.gmra.mxu0 %v3598
      %v3823 = vpop.f32.mrf.mxu0
      %v3824 = vadd.f32 0.0, %v3823
      %3825 = vmatmul.f32.gmra.mxu0 %v3601
      %v3826 = vpop.f32.mrf.mxu0
      %v3827 = vadd.f32 0.0, %v3826
      %3828 = vmatmul.f32.gmra.mxu0 %v3604
      %v3829 = vpop.f32.mrf.mxu0
      %v3830 = vadd.f32 0.0, %v3829
      %3831 = vmatmul.f32.gmra.mxu0 %v3607
      %v3832 = vpop.f32.mrf.mxu0
      %v3833 = vadd.f32 0.0, %v3832
      %3834 = vmatmul.f32.gmra.mxu0 %v3610
      %v3835 = vpop.f32.mrf.mxu0
      %v3836 = vadd.f32 0.0, %v3835
      %3837 = vmatmul.f32.gmra.mxu0 %v3613
      %v3838 = vpop.f32.mrf.mxu0
      %v3839 = vadd.f32 0.0, %v3838
      %3840 = vmatmul.f32.gmra.mxu0 %v3616
      %v3841 = vpop.f32.mrf.mxu0
      %v3842 = vadd.f32 0.0, %v3841
      %3843 = vmatmul.f32.gmra.mxu0 %v3619
      %v3844 = vpop.f32.mrf.mxu0
      %v3845 = vadd.f32 0.0, %v3844
      %3846 = vmatmul.f32.gmra.mxu0 %v3622
      %v3847 = vpop.f32.mrf.mxu0
      %v3848 = vadd.f32 0.0, %v3847
      %3849 = vmatmul.f32.gmra.mxu0 %v3625
      %v3850 = vpop.f32.mrf.mxu0
      %v3851 = vadd.f32 0.0, %v3850
      %3852 = vmatmul.f32.gmra.mxu0 %v3628
      %v3853 = vpop.f32.mrf.mxu0
      %v3854 = vadd.f32 0.0, %v3853
      %3855 = vmatmul.f32.gmra.mxu0 %v3631
      %v3856 = vpop.f32.mrf.mxu0
      %v3857 = vadd.f32 0.0, %v3856
      %3858 = vmatmul.f32.gmra.mxu0 %v3634
      %v3859 = vpop.f32.mrf.mxu0
      %v3860 = vadd.f32 0.0, %v3859
      %3861 = vmatmul.f32.gmra.mxu0 %v3637
      %v3862 = vpop.f32.mrf.mxu0
      %v3863 = vadd.f32 0.0, %v3862
      %3864 = vmatmul.f32.gmra.mxu0 %v3640
      %v3865 = vpop.f32.mrf.mxu0
      %v3866 = vadd.f32 0.0, %v3865
      %3867 = vmatmul.f32.gmra.mxu0 %v3643
      %v3868 = vpop.f32.mrf.mxu0
      %v3869 = vadd.f32 0.0, %v3868
      %3870 = vmatmul.f32.gmra.mxu0 %v3646
      %v3871 = vpop.f32.mrf.mxu0
      %v3872 = vadd.f32 0.0, %v3871
      %3873 = vmatmul.f32.gmra.mxu0 %v3649
      %v3874 = vpop.f32.mrf.mxu0
      %v3875 = vadd.f32 0.0, %v3874
      %3876 = vmatmul.f32.gmra.mxu0 %v3652
      %v3877 = vpop.f32.mrf.mxu0
      %v3878 = vadd.f32 0.0, %v3877
      %3879 = vmatmul.f32.gmra.mxu0 %v3655
      %v3880 = vpop.f32.mrf.mxu0
      %v3881 = vadd.f32 0.0, %v3880
      %3882 = vmatmul.f32.gmra.mxu0 %v3658
      %v3883 = vpop.f32.mrf.mxu0
      %v3884 = vadd.f32 0.0, %v3883
      %3885 = vmatmul.f32.gmra.mxu0 %v3661
      %v3886 = vpop.f32.mrf.mxu0
      %v3887 = vadd.f32 0.0, %v3886
      %3888 = vmatmul.f32.gmra.mxu0 %v3664
      %v3889 = vpop.f32.mrf.mxu0
      %v3890 = vadd.f32 0.0, %v3889
      %3891 = vmatmul.f32.gmra.mxu0 %v3667
      %v3892 = vpop.f32.mrf.mxu0
      %v3893 = vadd.f32 0.0, %v3892
      %3894 = vdwg.mxu0
      %v3895 = vmax.f32 %v3687, %v3693
      %v3896 = vmax.f32 %v3690, %v3696
      %v3897 = vmax.f32 %v3895, %v3699
      %v3898 = vmax.f32 %v3896, %v3702
      %v3899 = vmax.f32 %v3897, %v3705
      %v3900 = vmax.f32 %v3898, %v3708
      %v3901 = vmax.f32 %v3899, %v3711
      %v3902 = vmax.f32 %v3900, %v3714
      %v3903 = vmax.f32 %v3901, %v3717
      %v3904 = vmax.f32 %v3902, %v3720
      %v3905 = vmax.f32 %v3903, %v3723
      %v3906 = vmax.f32 %v3904, %v3726
      %v3907 = vmax.f32 %v3905, %v3729
      %v3908 = vmax.f32 %v3906, %v3732
      %v3909 = vmax.f32 %v3907, %v3735
      %v3910 = vmax.f32 %v3908, %v3738
      %v3911 = vmax.f32 %v3909, %v3741
      %v3912 = vmax.f32 %v3910, %v3744
      %v3913 = vmax.f32 %v3911, %v3747
      %v3914 = vmax.f32 %v3912, %v3750
      %v3915 = vmax.f32 %v3913, %v3753
      %v3916 = vmax.f32 %v3914, %v3756
      %v3917 = vmax.f32 %v3915, %v3759
      %v3918 = vmax.f32 %v3916, %v3762
      %v3919 = vmax.f32 %v3917, %v3765
      %v3920 = vmax.f32 %v3918, %v3768
      %v3921 = vmax.f32 %v3919, %v3771
      %v3922 = vmax.f32 %v3920, %v3774
      %v3923 = vmax.f32 %v3921, %v3777
      %v3924 = vmax.f32 %v3922, %v3780
      %v3925 = vmax.f32 %v3923, %v3924
      %v3926 = vrot.slane %v3925, 4
      %v3927 = vmax.f32 %v3925, %v3926
      %v3928 = vrot.slane %v3927, 2
      %v3929 = vmax.f32 %v3927, %v3928
      %v3930 = vrot.slane %v3929, 1
      %v3931 = vmax.f32 %v3929, %v3930
      %v3932 = vmax.f32 %v3800, %v3806
      %v3933 = vmax.f32 %v3803, %v3809
      %v3934 = vmax.f32 %v3932, %v3812
      %v3935 = vmax.f32 %v3933, %v3815
      %v3936 = vmax.f32 %v3934, %v3818
      %v3937 = vmax.f32 %v3935, %v3821
      %v3938 = vmax.f32 %v3936, %v3824
      %v3939 = vmax.f32 %v3937, %v3827
      %v3940 = vmax.f32 %v3938, %v3830
      %v3941 = vmax.f32 %v3939, %v3833
      %v3942 = vmax.f32 %v3940, %v3836
      %v3943 = vmax.f32 %v3941, %v3839
      %v3944 = vmax.f32 %v3942, %v3842
      %v3945 = vmax.f32 %v3943, %v3845
      %v3946 = vmax.f32 %v3944, %v3848
      %v3947 = vmax.f32 %v3945, %v3851
      %v3948 = vmax.f32 %v3946, %v3854
      %v3949 = vmax.f32 %v3947, %v3857
      %v3950 = vmax.f32 %v3948, %v3860
      %v3951 = vmax.f32 %v3949, %v3863
      %v3952 = vmax.f32 %v3950, %v3866
      %v3953 = vmax.f32 %v3951, %v3869
      %v3954 = vmax.f32 %v3952, %v3872
      %v3955 = vmax.f32 %v3953, %v3875
      %v3956 = vmax.f32 %v3954, %v3878
      %v3957 = vmax.f32 %v3955, %v3881
      %v3958 = vmax.f32 %v3956, %v3884
      %v3959 = vmax.f32 %v3957, %v3887
      %v3960 = vmax.f32 %v3958, %v3890
      %v3961 = vmax.f32 %v3959, %v3893
      %v3962 = vmax.f32 %v3960, %v3961
      %v3963 = vrot.slane %v3962, 4
      %v3964 = vmax.f32 %v3962, %v3963
      %v3965 = vrot.slane %v3964, 2
      %v3966 = vmax.f32 %v3964, %v3965
      %v3967 = vrot.slane %v3966, 1
      %v3968 = vmax.f32 %v3966, %v3967
      %v3969 = vsub.f32 %v3687, %v3931
      %v3970 = vsub.f32 %v3800, %v3968
      %v3971 = vsub.f32 %v3690, %v3931
      %v3972 = vsub.f32 %v3803, %v3968
      %v3973 = vsub.f32 %v3693, %v3931
      %v3974 = vsub.f32 %v3806, %v3968
      %v3975 = vsub.f32 %v3696, %v3931
      %v3976 = vsub.f32 %v3809, %v3968
      %v3977 = vsub.f32 %v3699, %v3931
      %v3978 = vsub.f32 %v3812, %v3968
      %v3979 = vsub.f32 %v3702, %v3931
      %v3980 = vsub.f32 %v3815, %v3968
      %v3981 = vsub.f32 %v3705, %v3931
      %v3982 = vsub.f32 %v3818, %v3968
      %v3983 = vsub.f32 %v3708, %v3931
      %v3984 = vsub.f32 %v3821, %v3968
      %v3985 = vsub.f32 %v3711, %v3931
      %v3986 = vsub.f32 %v3824, %v3968
      %v3987 = vsub.f32 %v3714, %v3931
      %v3988 = vsub.f32 %v3827, %v3968
      %v3989 = vsub.f32 %v3717, %v3931
      %v3990 = vsub.f32 %v3830, %v3968
      %v3991 = vsub.f32 %v3720, %v3931
      %v3992 = vsub.f32 %v3833, %v3968
      %v3993 = vsub.f32 %v3723, %v3931
      %v3994 = vsub.f32 %v3836, %v3968
      %v3995 = vsub.f32 %v3726, %v3931
      %v3996 = vsub.f32 %v3839, %v3968
      %v3997 = vsub.f32 %v3729, %v3931
      %v3998 = vsub.f32 %v3842, %v3968
      %v3999 = vsub.f32 %v3732, %v3931
      %v4000 = vsub.f32 %v3845, %v3968
      %v4001 = vsub.f32 %v3735, %v3931
      %v4002 = vsub.f32 %v3848, %v3968
      %v4003 = vsub.f32 %v3738, %v3931
      %v4004 = vsub.f32 %v3851, %v3968
      %v4005 = vsub.f32 %v3741, %v3931
      %v4006 = vsub.f32 %v3854, %v3968
      %v4007 = vsub.f32 %v3744, %v3931
      %v4008 = vsub.f32 %v3857, %v3968
      %v4009 = vsub.f32 %v3747, %v3931
      %v4010 = vsub.f32 %v3860, %v3968
      %v4011 = vsub.f32 %v3750, %v3931
      %v4012 = vsub.f32 %v3863, %v3968
      %v4013 = vsub.f32 %v3753, %v3931
      %v4014 = vsub.f32 %v3866, %v3968
      %v4015 = vsub.f32 %v3756, %v3931
      %v4016 = vsub.f32 %v3869, %v3968
      %v4017 = vsub.f32 %v3759, %v3931
      %v4018 = vsub.f32 %v3872, %v3968
      %v4019 = vsub.f32 %v3762, %v3931
      %v4020 = vsub.f32 %v3875, %v3968
      %v4021 = vsub.f32 %v3765, %v3931
      %v4022 = vsub.f32 %v3878, %v3968
      %v4023 = vsub.f32 %v3768, %v3931
      %v4024 = vsub.f32 %v3881, %v3968
      %v4025 = vsub.f32 %v3771, %v3931
      %v4026 = vsub.f32 %v3884, %v3968
      %v4027 = vsub.f32 %v3774, %v3931
      %v4028 = vsub.f32 %v3887, %v3968
      %v4029 = vsub.f32 %v3777, %v3931
      %v4030 = vsub.f32 %v3890, %v3968
      %v4031 = vsub.f32 %v3780, %v3931
      %v4032 = vsub.f32 %v3893, %v3968
      %v4033 = vmul.f32 %v3969, 1.442695
      %v4034 = vpow.pop %v4033
      %v4035 = vmul.f32 %v3970, 1.442695
      %v4036 = vpow.pop %v4035
      %v4037 = vmul.f32 %v3971, 1.442695
      %v4038 = vpow.pop %v4037
      %v4039 = vmul.f32 %v3972, 1.442695
      %v4040 = vpow.pop %v4039
      %v4041 = vmul.f32 %v3973, 1.442695
      %v4042 = vpow.pop %v4041
      %v4043 = vmul.f32 %v3974, 1.442695
      %v4044 = vpow.pop %v4043
      %v4045 = vmul.f32 %v3975, 1.442695
      %v4046 = vpow.pop %v4045
      %v4047 = vmul.f32 %v3976, 1.442695
      %v4048 = vpow.pop %v4047
      %v4049 = vmul.f32 %v3977, 1.442695
      %v4050 = vpow.pop %v4049
      %v4051 = vmul.f32 %v3978, 1.442695
      %v4052 = vpow.pop %v4051
      %v4053 = vmul.f32 %v3979, 1.442695
      %v4054 = vpow.pop %v4053
      %v4055 = vmul.f32 %v3980, 1.442695
      %v4056 = vpow.pop %v4055
      %v4057 = vmul.f32 %v3981, 1.442695
      %v4058 = vpow.pop %v4057
      %v4059 = vmul.f32 %v3982, 1.442695
      %v4060 = vpow.pop %v4059
      %v4061 = vmul.f32 %v3983, 1.442695
      %v4062 = vpow.pop %v4061
      %v4063 = vmul.f32 %v3984, 1.442695
      %v4064 = vpow.pop %v4063
      %v4065 = vmul.f32 %v3985, 1.442695
      %v4066 = vpow.pop %v4065
      %v4067 = vmul.f32 %v3986, 1.442695
      %v4068 = vpow.pop %v4067
      %v4069 = vmul.f32 %v3987, 1.442695
      %v4070 = vpow.pop %v4069
      %v4071 = vmul.f32 %v3988, 1.442695
      %v4072 = vpow.pop %v4071
      %v4073 = vmul.f32 %v3989, 1.442695
      %v4074 = vpow.pop %v4073
      %v4075 = vmul.f32 %v3990, 1.442695
      %v4076 = vpow.pop %v4075
      %v4077 = vmul.f32 %v3991, 1.442695
      %v4078 = vpow.pop %v4077
      %v4079 = vmul.f32 %v3992, 1.442695
      %v4080 = vpow.pop %v4079
      %v4081 = vmul.f32 %v3993, 1.442695
      %v4082 = vpow.pop %v4081
      %v4083 = vmul.f32 %v3994, 1.442695
      %v4084 = vpow.pop %v4083
      %v4085 = vmul.f32 %v3995, 1.442695
      %v4086 = vpow.pop %v4085
      %v4087 = vmul.f32 %v3996, 1.442695
      %v4088 = vpow.pop %v4087
      %v4089 = vmul.f32 %v3997, 1.442695
      %v4090 = vpow.pop %v4089
      %v4091 = vmul.f32 %v3998, 1.442695
      %v4092 = vpow.pop %v4091
      %v4093 = vmul.f32 %v3999, 1.442695
      %v4094 = vpow.pop %v4093
      %v4095 = vmul.f32 %v4000, 1.442695
      %v4096 = vpow.pop %v4095
      %v4097 = vmul.f32 %v4001, 1.442695
      %v4098 = vpow.pop %v4097
      %v4099 = vmul.f32 %v4002, 1.442695
      %v4100 = vpow.pop %v4099
      %v4101 = vmul.f32 %v4003, 1.442695
      %v4102 = vpow.pop %v4101
      %v4103 = vmul.f32 %v4004, 1.442695
      %v4104 = vpow.pop %v4103
      %v4105 = vmul.f32 %v4005, 1.442695
      %v4106 = vpow.pop %v4105
      %v4107 = vmul.f32 %v4006, 1.442695
      %v4108 = vpow.pop %v4107
      %v4109 = vmul.f32 %v4007, 1.442695
      %v4110 = vpow.pop %v4109
      %v4111 = vmul.f32 %v4008, 1.442695
      %v4112 = vpow.pop %v4111
      %v4113 = vmul.f32 %v4009, 1.442695
      %v4114 = vpow.pop %v4113
      %v4115 = vmul.f32 %v4010, 1.442695
      %v4116 = vpow.pop %v4115
      %v4117 = vmul.f32 %v4011, 1.442695
      %v4118 = vpow.pop %v4117
      %v4119 = vmul.f32 %v4012, 1.442695
      %v4120 = vpow.pop %v4119
      %v4121 = vmul.f32 %v4013, 1.442695
      %v4122 = vpow.pop %v4121
      %v4123 = vmul.f32 %v4014, 1.442695
      %v4124 = vpow.pop %v4123
      %v4125 = vmul.f32 %v4015, 1.442695
      %v4126 = vpow.pop %v4125
      %v4127 = vmul.f32 %v4016, 1.442695
      %v4128 = vpow.pop %v4127
      %v4129 = vmul.f32 %v4017, 1.442695
      %v4130 = vpow.pop %v4129
      %v4131 = vmul.f32 %v4018, 1.442695
      %v4132 = vpow.pop %v4131
      %v4133 = vmul.f32 %v4019, 1.442695
      %v4134 = vpow.pop %v4133
      %v4135 = vmul.f32 %v4020, 1.442695
      %v4136 = vpow.pop %v4135
      %v4137 = vmul.f32 %v4021, 1.442695
      %v4138 = vpow.pop %v4137
      %v4139 = vmul.f32 %v4022, 1.442695
      %v4140 = vpow.pop %v4139
      %v4141 = vmul.f32 %v4023, 1.442695
      %v4142 = vpow.pop %v4141
      %v4143 = vmul.f32 %v4024, 1.442695
      %v4144 = vpow.pop %v4143
      %v4145 = vmul.f32 %v4025, 1.442695
      %v4146 = vpow.pop %v4145
      %v4147 = vmul.f32 %v4026, 1.442695
      %v4148 = vpow.pop %v4147
      %v4149 = vmul.f32 %v4027, 1.442695
      %v4150 = vpow.pop %v4149
      %v4151 = vmul.f32 %v4028, 1.442695
      %v4152 = vpow.pop %v4151
      %v4153 = vmul.f32 %v4029, 1.442695
      %v4154 = vpow.pop %v4153
      %v4155 = vmul.f32 %v4030, 1.442695
      %v4156 = vpow.pop %v4155
      %v4157 = vmul.f32 %v4031, 1.442695
      %v4158 = vpow.pop %v4157
      %v4159 = vmul.f32 %v4032, 1.442695
      %v4160 = vpow.pop %v4159
      %v4161 = vadd.f32 %v4034, %v4038
      %v4162 = vadd.f32 %v4161, %v4042
      %v4163 = vadd.f32 %v4162, %v4046
      %v4164 = vadd.f32 %v4163, %v4050
      %v4165 = vadd.f32 %v4164, %v4054
      %v4166 = vadd.f32 %v4165, %v4058
      %v4167 = vadd.f32 %v4166, %v4062
      %v4168 = vadd.f32 %v4167, %v4066
      %v4169 = vadd.f32 %v4168, %v4070
      %v4170 = vadd.f32 %v4169, %v4074
      %v4171 = vadd.f32 %v4170, %v4078
      %v4172 = vadd.f32 %v4171, %v4082
      %v4173 = vadd.f32 %v4172, %v4086
      %v4174 = vadd.f32 %v4173, %v4090
      %v4175 = vadd.f32 %v4174, %v4094
      %v4176 = vadd.f32 %v4175, %v4098
      %v4177 = vadd.f32 %v4176, %v4102
      %v4178 = vadd.f32 %v4177, %v4106
      %v4179 = vadd.f32 %v4178, %v4110
      %v4180 = vadd.f32 %v4179, %v4114
      %v4181 = vadd.f32 %v4180, %v4118
      %v4182 = vadd.f32 %v4181, %v4122
      %v4183 = vadd.f32 %v4182, %v4126
      %v4184 = vadd.f32 %v4183, %v4130
      %v4185 = vadd.f32 %v4184, %v4134
      %v4186 = vadd.f32 %v4185, %v4138
      %v4187 = vadd.f32 %v4186, %v4142
      %v4188 = vadd.f32 %v4187, %v4146
      %v4189 = vadd.f32 %v4188, %v4150
      %v4190 = vadd.f32 %v4189, %v4154
      %v4191 = vadd.f32 %v4190, %v4158
      %v4192 = vrot.slane %v4191, 4
      %v4193 = vadd.f32 %v4191, %v4192
      %v4194 = vrot.slane %v4193, 2
      %v4195 = vadd.f32 %v4193, %v4194
      %v4196 = vrot.slane %v4195, 1
      %v4197 = vadd.f32 %v4195, %v4196
      %v4198 = vadd.f32 %v4036, %v4040
      %v4199 = vadd.f32 %v4198, %v4044
      %v4200 = vadd.f32 %v4199, %v4048
      %v4201 = vadd.f32 %v4200, %v4052
      %v4202 = vadd.f32 %v4201, %v4056
      %v4203 = vadd.f32 %v4202, %v4060
      %v4204 = vadd.f32 %v4203, %v4064
      %v4205 = vadd.f32 %v4204, %v4068
      %v4206 = vadd.f32 %v4205, %v4072
      %v4207 = vadd.f32 %v4206, %v4076
      %v4208 = vadd.f32 %v4207, %v4080
      %v4209 = vadd.f32 %v4208, %v4084
      %v4210 = vadd.f32 %v4209, %v4088
      %v4211 = vadd.f32 %v4210, %v4092
      %v4212 = vadd.f32 %v4211, %v4096
      %v4213 = vadd.f32 %v4212, %v4100
      %v4214 = vadd.f32 %v4213, %v4104
      %v4215 = vadd.f32 %v4214, %v4108
      %v4216 = vadd.f32 %v4215, %v4112
      %v4217 = vadd.f32 %v4216, %v4116
      %v4218 = vadd.f32 %v4217, %v4120
      %v4219 = vadd.f32 %v4218, %v4124
      %v4220 = vadd.f32 %v4219, %v4128
      %v4221 = vadd.f32 %v4220, %v4132
      %v4222 = vadd.f32 %v4221, %v4136
      %v4223 = vadd.f32 %v4222, %v4140
      %v4224 = vadd.f32 %v4223, %v4144
      %v4225 = vadd.f32 %v4224, %v4148
      %v4226 = vadd.f32 %v4225, %v4152
      %v4227 = vadd.f32 %v4226, %v4156
      %v4228 = vadd.f32 %v4227, %v4160
      %v4229 = vrot.slane %v4228, 4
      %v4230 = vadd.f32 %v4228, %v4229
      %v4231 = vrot.slane %v4230, 2
      %v4232 = vadd.f32 %v4230, %v4231
      %v4233 = vrot.slane %v4232, 1
      %v4234 = vadd.f32 %v4232, %v4233
      %4235 = vmatpush.msra.mxu0 %v4094
      %4236 = vmatpush.msra.mxu0 %v4090
      %4237 = vmatpush.msra.mxu0 %v4086
      %4238 = vmatpush.msra.mxu0 %v4082
      %4239 = vmatpush.msra.mxu0 %v4078
      %4240 = vmatpush.msra.mxu0 %v4074
      %4241 = vmatpush.msra.mxu0 %v4070
      %4242 = vmatpush.msra.mxu0 %v4066
      %4243 = vmatpush.msra.mxu0 %v4062
      %4244 = vmatpush.msra.mxu0 %v4058
      %4245 = vmatpush.msra.mxu0 %v4054
      %4246 = vmatpush.msra.mxu0 %v4050
      %4247 = vmatpush.msra.mxu0 %v4046
      %4248 = vmatpush.msra.mxu0 %v4042
      %4249 = vmatpush.msra.mxu0 %v4038
      %4250 = vmatpush.msra.mxu0 %v4034
      %4251 = vmatmul.f32.gmra.mxu0 %v549
      %v4252 = vpop.f32.mrf.mxu0
      %v4253 = vadd.f32 0.0, %v4252
      %4254 = vmatmul.f32.gmra.mxu0 %v552
      %v4255 = vpop.f32.mrf.mxu0
      %v4256 = vadd.f32 0.0, %v4255
      %4257 = vmatmul.f32.gmra.mxu0 %v555
      %v4258 = vpop.f32.mrf.mxu0
      %v4259 = vadd.f32 0.0, %v4258
      %4260 = vmatmul.f32.gmra.mxu0 %v558
      %v4261 = vpop.f32.mrf.mxu0
      %v4262 = vadd.f32 0.0, %v4261
      %4263 = vdwg.mxu0
      %4264 = vmatpush.msra.mxu0 %v4158
      %4265 = vmatpush.msra.mxu0 %v4154
      %4266 = vmatpush.msra.mxu0 %v4150
      %4267 = vmatpush.msra.mxu0 %v4146
      %4268 = vmatpush.msra.mxu0 %v4142
      %4269 = vmatpush.msra.mxu0 %v4138
      %4270 = vmatpush.msra.mxu0 %v4134
      %4271 = vmatpush.msra.mxu0 %v4130
      %4272 = vmatpush.msra.mxu0 %v4126
      %4273 = vmatpush.msra.mxu0 %v4122
      %4274 = vmatpush.msra.mxu0 %v4118
      %4275 = vmatpush.msra.mxu0 %v4114
      %4276 = vmatpush.msra.mxu0 %v4110
      %4277 = vmatpush.msra.mxu0 %v4106
      %4278 = vmatpush.msra.mxu0 %v4102
      %4279 = vmatpush.msra.mxu0 %v4098
      %4280 = vmatmul.f32.gmra.mxu0 %v710
      %v4281 = vpop.f32.mrf.mxu0
      %v4282 = vadd.f32 %v4253, %v4281
      %4283 = vmatmul.f32.gmra.mxu0 %v713
      %v4284 = vpop.f32.mrf.mxu0
      %v4285 = vadd.f32 %v4256, %v4284
      %4286 = vmatmul.f32.gmra.mxu0 %v716
      %v4287 = vpop.f32.mrf.mxu0
      %v4288 = vadd.f32 %v4259, %v4287
      %4289 = vmatmul.f32.gmra.mxu0 %v719
      %v4290 = vpop.f32.mrf.mxu0
      %v4291 = vadd.f32 %v4262, %v4290
      %4292 = vdwg.mxu0
      %4293 = vmatpush.msra.mxu0 %v4096
      %4294 = vmatpush.msra.mxu0 %v4092
      %4295 = vmatpush.msra.mxu0 %v4088
      %4296 = vmatpush.msra.mxu0 %v4084
      %4297 = vmatpush.msra.mxu0 %v4080
      %4298 = vmatpush.msra.mxu0 %v4076
      %4299 = vmatpush.msra.mxu0 %v4072
      %4300 = vmatpush.msra.mxu0 %v4068
      %4301 = vmatpush.msra.mxu0 %v4064
      %4302 = vmatpush.msra.mxu0 %v4060
      %4303 = vmatpush.msra.mxu0 %v4056
      %4304 = vmatpush.msra.mxu0 %v4052
      %4305 = vmatpush.msra.mxu0 %v4048
      %4306 = vmatpush.msra.mxu0 %v4044
      %4307 = vmatpush.msra.mxu0 %v4040
      %4308 = vmatpush.msra.mxu0 %v4036
      %4309 = vmatmul.f32.gmra.mxu0 %v549
      %v4310 = vpop.f32.mrf.mxu0
      %v4311 = vadd.f32 0.0, %v4310
      %4312 = vmatmul.f32.gmra.mxu0 %v552
      %v4313 = vpop.f32.mrf.mxu0
      %v4314 = vadd.f32 0.0, %v4313
      %4315 = vmatmul.f32.gmra.mxu0 %v555
      %v4316 = vpop.f32.mrf.mxu0
      %v4317 = vadd.f32 0.0, %v4316
      %4318 = vmatmul.f32.gmra.mxu0 %v558
      %v4319 = vpop.f32.mrf.mxu0
      %v4320 = vadd.f32 0.0, %v4319
      %4321 = vdwg.mxu0
      %4322 = vmatpush.msra.mxu0 %v4160
      %4323 = vmatpush.msra.mxu0 %v4156
      %4324 = vmatpush.msra.mxu0 %v4152
      %4325 = vmatpush.msra.mxu0 %v4148
      %4326 = vmatpush.msra.mxu0 %v4144
      %4327 = vmatpush.msra.mxu0 %v4140
      %4328 = vmatpush.msra.mxu0 %v4136
      %4329 = vmatpush.msra.mxu0 %v4132
      %4330 = vmatpush.msra.mxu0 %v4128
      %4331 = vmatpush.msra.mxu0 %v4124
      %4332 = vmatpush.msra.mxu0 %v4120
      %4333 = vmatpush.msra.mxu0 %v4116
      %4334 = vmatpush.msra.mxu0 %v4112
      %4335 = vmatpush.msra.mxu0 %v4108
      %4336 = vmatpush.msra.mxu0 %v4104
      %4337 = vmatpush.msra.mxu0 %v4100
      %4338 = vmatmul.f32.gmra.mxu0 %v710
      %v4339 = vpop.f32.mrf.mxu0
      %v4340 = vadd.f32 %v4311, %v4339
      %4341 = vmatmul.f32.gmra.mxu0 %v713
      %v4342 = vpop.f32.mrf.mxu0
      %v4343 = vadd.f32 %v4314, %v4342
      %4344 = vmatmul.f32.gmra.mxu0 %v716
      %v4345 = vpop.f32.mrf.mxu0
      %v4346 = vadd.f32 %v4317, %v4345
      %4347 = vmatmul.f32.gmra.mxu0 %v719
      %v4348 = vpop.f32.mrf.mxu0
      %v4349 = vadd.f32 %v4320, %v4348
      %4350 = vdwg.mxu0
      %v4351 = vrcp.pop %v4197
      %v4352 = vrcp.pop %v4234
      %v4353 = vmul.f32 %v4282, %v4351
      %v4354 = vmul.f32 %v4340, %v4352
      %v4355 = vmul.f32 %v4285, %v4351
      %v4356 = vmul.f32 %v4343, %v4352
      %v4357 = vmul.f32 %v4288, %v4351
      %v4358 = vmul.f32 %v4346, %v4352
      %v4359 = vmul.f32 %v4291, %v4351
      %v4360 = vmul.f32 %v4349, %v4352
      %s4361 = scalar_lea.vmem %s2, 96
      %v4362 = vld [vmem:[%s4361] sm:$0xff]
      %v4363 = vld [vmem:[%s4361 + $0x8] sm:$0xff]
      %v4364 = vld [vmem:[%s4361 + $0x10] sm:$0xff]
      %v4365 = vld [vmem:[%s4361 + $0x18] sm:$0xff]
      %v4367 = vsel %vm254, %v4362, 0
      %v4370 = vsel %vm254, %v4363, 0
      %v4373 = vsel %vm254, %v4364, 0
      %v4376 = vsel %vm254, %v4365, 0
      %4378 = vmatpush.msra.mxu0 0.0
      %4379 = vmatpush.msra.mxu0 0.0
      %4380 = vmatpush.msra.mxu0 0.0
      %4381 = vmatpush.msra.mxu0 0.0
      %4382 = vmatpush.msra.mxu0 0.0
      %4383 = vmatpush.msra.mxu0 0.0
      %4384 = vmatpush.msra.mxu0 0.0
      %4385 = vmatpush.msra.mxu0 0.0
      %4386 = vmatpush.msra.mxu0 0.0
      %4387 = vmatpush.msra.mxu0 0.0
      %4388 = vmatpush.msra.mxu0 0.0
      %4389 = vmatpush.msra.mxu0 0.0
      %4390 = vmatpush.msra.mxu0 %v4359
      %4391 = vmatpush.msra.mxu0 %v4357
      %4392 = vmatpush.msra.mxu0 %v4355
      %4393 = vmatpush.msra.mxu0 %v4353
      %4394 = vmatmul.f32.gmra.mxu0 %v4367
      %v4395 = vpop.f32.mrf.mxu0
      %v4396 = vadd.f32 0.0, %v4395
      %4397 = vmatmul.f32.gmra.mxu0 %v4370
      %v4398 = vpop.f32.mrf.mxu0
      %v4399 = vadd.f32 0.0, %v4398
      %4400 = vmatmul.f32.gmra.mxu0 %v4373
      %v4401 = vpop.f32.mrf.mxu0
      %v4402 = vadd.f32 0.0, %v4401
      %4403 = vmatmul.f32.gmra.mxu0 %v4376
      %v4404 = vpop.f32.mrf.mxu0
      %v4405 = vadd.f32 0.0, %v4404
      %4406 = vdwg.mxu0
      %4407 = vmatpush.msra.mxu0 0.0
      %4408 = vmatpush.msra.mxu0 0.0
      %4409 = vmatpush.msra.mxu0 0.0
      %4410 = vmatpush.msra.mxu0 0.0
      %4411 = vmatpush.msra.mxu0 0.0
      %4412 = vmatpush.msra.mxu0 0.0
      %4413 = vmatpush.msra.mxu0 0.0
      %4414 = vmatpush.msra.mxu0 0.0
      %4415 = vmatpush.msra.mxu0 0.0
      %4416 = vmatpush.msra.mxu0 0.0
      %4417 = vmatpush.msra.mxu0 0.0
      %4418 = vmatpush.msra.mxu0 0.0
      %4419 = vmatpush.msra.mxu0 %v4360
      %4420 = vmatpush.msra.mxu0 %v4358
      %4421 = vmatpush.msra.mxu0 %v4356
      %4422 = vmatpush.msra.mxu0 %v4354
      %4423 = vmatmul.f32.gmra.mxu0 %v4367
      %v4424 = vpop.f32.mrf.mxu0
      %v4425 = vadd.f32 0.0, %v4424
      %4426 = vmatmul.f32.gmra.mxu0 %v4370
      %v4427 = vpop.f32.mrf.mxu0
      %v4428 = vadd.f32 0.0, %v4427
      %4429 = vmatmul.f32.gmra.mxu0 %v4373
      %v4430 = vpop.f32.mrf.mxu0
      %v4431 = vadd.f32 0.0, %v4430
      %4432 = vmatmul.f32.gmra.mxu0 %v4376
      %v4433 = vpop.f32.mrf.mxu0
      %v4434 = vadd.f32 0.0, %v4433
      %4435 = vdwg.mxu0
      %v4436 = vadd.f32 %v3501, %v4396
      %v4437 = vadd.f32 %v3502, %v4425
      %v4438 = vadd.f32 %v3503, %v4399
      %v4439 = vadd.f32 %v3504, %v4428
      %v4440 = vadd.f32 %v3505, %v4402
      %v4441 = vadd.f32 %v3506, %v4431
      %v4442 = vadd.f32 %v3507, %v4405
      %v4443 = vadd.f32 %v3508, %v4434
      %v4444 = vld [vmem:[%s3] sm:$0xff]
      %v4445 = vld [vmem:[%s3 + $0x8] sm:$0xff]
      %v4446 = vld [vmem:[%s3 + $0x10] sm:$0xff]
      %v4447 = vld [vmem:[%s3 + $0x18] sm:$0xff]
      %4449 = vset.pattern.permute.xlu0 0
      %4450 = vperm.xlu0 %4449, %v4444
      %v4451 = vpop.permute.xlu0 %4450
      %4454 = vset.pattern.permute.xlu0 0
      %4455 = vperm.xlu0 %4454, %v4445
      %v4456 = vpop.permute.xlu0 %4455
      %4459 = vset.pattern.permute.xlu0 0
      %4460 = vperm.xlu0 %4459, %v4446
      %v4461 = vpop.permute.xlu0 %4460
      %4464 = vset.pattern.permute.xlu0 0
      %4465 = vperm.xlu0 %4464, %v4447
      %v4466 = vpop.permute.xlu0 %4465
      %v4468 = vadd.f32 %v4436, %v4451
      %v4469 = vadd.f32 %v4437, %v4451
      %v4470 = vadd.f32 %v4438, %v4456
      %v4471 = vadd.f32 %v4439, %v4456
      %v4472 = vadd.f32 %v4440, %v4461
      %v4473 = vadd.f32 %v4441, %v4461
      %v4474 = vadd.f32 %v4442, %v4466
      %v4475 = vadd.f32 %v4443, %v4466
      %4476 = vst [vmem:[%s197] sm:$0xff] %v4468
      %4477 = vst [vmem:[%s197 + $0x8] sm:$0xff] %v4469
      %4478 = vst [vmem:[%s197 + $0x10] sm:$0xff] %v4470
      %4479 = vst [vmem:[%s197 + $0x18] sm:$0xff] %v4471
      %4480 = vst [vmem:[%s197 + $0x20] sm:$0xff] %v4472
      %4481 = vst [vmem:[%s197 + $0x28] sm:$0xff] %v4473
      %4482 = vst [vmem:[%s197 + $0x30] sm:$0xff] %v4474
      %4483 = vst [vmem:[%s197 + $0x38] sm:$0xff] %v4475
      %p4484 = scmp.lt.s32.totalorder %s15, 1
      %s4485 = scalar_select %p4484, %s15, 1
      %s4486 = smul.addr %s4485, 8
      %s4487 = smul.addr %s4486, 8
      %s4488 = scalar_lea.vmem %s4, %s4487
      // Predicated region
      $region37: #{attention_pallas.1} parent=35 // pred_check
        %p4489 = pneg %p122
      $region38: #{attention_pallas.1} parent=35 // pred_check_branch
        %4491 = sbr.rel (%p4489) target = $region40
      $region39: #{attention_pallas.1} parent=35 // pred_region
        _
      $region40: #{attention_pallas.1} parent=35 // pred_fallthru
        _
    $region36: #{attention_pallas.1} parent=5 // pred_fallthru
      _
    %p4492 = scmp.le.s32.totalorder 2, %s10
    // Predicated region
    $region41: #{attention_pallas.1} parent=5 // pred_check
      %p4493 = pneg %p4492
    $region42: #{attention_pallas.1} parent=5 // pred_check_branch
      %4495 = sbr.rel (%p4493) target = $region44
    $region43: #{attention_pallas.1} parent=5 // pred_region
      %s4496 = ssub.s32 %s10, 2
      // Predicated region
      $region45: #{attention_pallas.1} parent=43 // pred_check
        %p4497 = pneg %p128
      $region46: #{attention_pallas.1} parent=43 // pred_check_branch
        %4499 = sbr.rel (%p4497) target = $region48
      $region47: #{attention_pallas.1} parent=43 // pred_region
        %p4500 = scmp.lt.s32.totalorder %s16, 1
        %s4501 = scalar_select %p4500, %s16, 1
        %s4502 = smul.addr %s4501, 8
        %s4503 = smul.addr %s4502, 8
        %s4504 = scalar_lea.vmem %s4, %s4503
      $region48: #{attention_pallas.1} parent=43 // pred_fallthru
        _
    $region44: #{attention_pallas.1} parent=5 // pred_fallthru
      _
  $region6: #{attention_pallas.1} parent=0 // loop_footer
    %s14 = sadd.s32 1, %s10
  $region7: #{attention_pallas.1} parent=0 // loop_footer_branch
    %9 = sbr.rel target = $region3
  $region8: #{attention_pallas.1} parent=0 // loop_exit
    _

</llo_original>
